<compile_context>
chip_gen: v7x
topology: tpu7x:2x2x1
jax: 0.10.0
libtpu: 0.0.40
codegen_flags: <defaults>
</compile_context>

<pallas_src>
import jax
import jax.numpy as jnp
from jax import lax
from jax.experimental import pallas as pl
from jax.experimental.pallas import tpu as pltpu

# ----------------------------- configuration -----------------------------
B = 8                 # batch size (per domain)
C_IN = 4              # input channels
H = W = 16            # spatial dims
HW = H * W            # 256
BACKBONE_DIM = 32     # synthetic stand-in for resnet50's 2048-d pooled feature
BOTTLENECK = 32       # bottleneck_width
NUM_CLASS = 5
KERNEL_MUL = 2.0      # MMD gaussian-kernel defaults
KERNEL_NUM = 5

N2 = 2 * B            # combined (source+target) batch  = 16
TOT = N2 * HW         # combined token count            = 4096
NEG_PAD = -1e30       # padding value for unused classifier-bias lanes

# Packed-parameter layout: every section starts on an 8-row boundary so
# in-kernel ref slices stay sublane-aligned.  Column width = 32.
R_WC = 0     # rows 0..7  : conv weight rows 0..3, conv bias row 4, zeros rows 5..7
R_WBN = 8    # rows 8..39 : bottleneck weight (32, 32)
R_BBN = 40   # row  40    : bottleneck bias (1, 32)
R_WCL = 48   # rows 48..79: classifier weight (32, 32); cols >= NUM_CLASS are zero
R_BCL = 80   # row  80    : classifier bias; cols >= NUM_CLASS are NEG_PAD
R_OH = 88    # rows 88..95: one-hot source labels (B, 32); cols >= NUM_CLASS are zero
P_ROWS, P_COLS = 96, 32


def transfernet_kernel(x_ref, pool_ref, p_ref, loss_ref):
    # ---- backbone stub: 1x1 conv (channel matmul, bias folded via the ones row) + ReLU ----
    # x_ref: (8, TOT) lane-dense; rows 0..3 channels, row 4 ones, rows 5..7 zeros.
    wcb = p_ref[R_WC:R_WC + 8, :]                                   # (8, BACKBONE_DIM)
    hT = lax.dot_general(wcb, x_ref[...], (((0,), (0,)), ((), ())),
                         preferred_element_type=jnp.float32)        # (BD, TOT) lane-dense
    hT = jnp.maximum(hT, 0.0)

    # ---- global average pool: NT matmul against the host-built pool matrix ----
    # pool_ref: (N2, TOT), pool[n, t] = 1/HW iff token t belongs to image n.
    featsT = lax.dot_general(hT, pool_ref[...], (((1,), (1,)), ((), ())),
                             preferred_element_type=jnp.float32)    # (BD, N2)

    # ---- bottleneck Linear + ReLU on both domains at once (contract backbone dim) ----
    wbn = p_ref[R_WBN:R_WBN + BACKBONE_DIM, :]                      # (BD, BOTTLENECK)
    bbn = p_ref[R_BBN:R_BBN + 1, :]                                 # (1, BOTTLENECK)
    bn = lax.dot_general(featsT, wbn, (((0,), (0,)), ((), ())),
                         preferred_element_type=jnp.float32) + bbn  # (N2, BOTTLENECK)
    bn = jnp.maximum(bn, 0.0)

    # ---- classifier (source rows) + cross-entropy on full 32-lane tiles ----
    wcl = p_ref[R_WCL:R_WCL + BOTTLENECK, :]                        # (BOTTLENECK, 32)
    bcl = p_ref[R_BCL:R_BCL + 1, :]                                 # (1, 32), pad cols = -1e30
    onehot = p_ref[R_OH:R_OH + B, :]                                # (B, 32), pad cols = 0
    logits = jnp.dot(bn[:B, :], wcl,
                     preferred_element_type=jnp.float32) + bcl      # (B, 32)
    z = logits - jnp.max(logits, axis=1, keepdims=True)
    logp = z - jnp.log(jnp.sum(jnp.exp(z), axis=1, keepdims=True))  # pad cols underflow to 0 in exp
    clf_loss = -jnp.sum(onehot * logp) * (1.0 / float(B))

    # ---- multi-kernel RBF MMD: one Gram matmul + one (2B, 2B) distance matrix ----
    sq = jnp.sum(bn * bn, axis=1, keepdims=True)                    # (N2, 1)
    gram = lax.dot_general(bn, bn, (((1,), (1,)), ((), ())),
                           preferred_element_type=jnp.float32)      # (N2, N2)
    d = jnp.maximum(sq + jnp.transpose(sq) - 2.0 * gram, 0.0)

    # bandwidth = sum(d) / (n^2 - n), then /= kernel_mul**(kernel_num//2), as in the reference.
    bw = jnp.sum(d) * (1.0 / float(N2 * N2 - N2))
    bw = bw / (KERNEL_MUL ** (KERNEL_NUM // 2))
    bw = jnp.maximum(bw, 1e-12)          # guard against collapsed (all-equal) features

    # Five kernels exp(-d / (bw * 2^i)), i = 0..4  ==  t^(2^k) for t = exp(-d / (bw * 16)).
    t1 = jnp.exp(d * (-1.0 / (bw * (KERNEL_MUL ** (KERNEL_NUM - 1)))))
    t2 = t1 * t1
    t4 = t2 * t2
    t8 = t4 * t4
    t16 = t8 * t8
    ksum = t1 + t2 + t4 + t8 + t16
    mmd = (jnp.mean(ksum[:B, :B]) + jnp.mean(ksum[B:, B:])
           - 2.0 * jnp.mean(ksum[:B, B:]))   # mean(YX) == mean(XY) by symmetry

    # ---- scalar losses straight to SMEM ----
    loss_ref[0] = clf_loss
    loss_ref[1] = mmd


def pack_params(params, labels):
    """Pack all parameters + one-hot labels into one (96, 32) f32 buffer."""
    P = jnp.zeros((P_ROWS, P_COLS), jnp.float32)
    P = P.at[R_WC:R_WC + C_IN, :].set(params["w_conv"])                 # rows 0..3
    P = P.at[R_WC + C_IN, :].set(params["b_conv"].reshape(-1))          # row 4 (bias, folded via ones row)
    P = P.at[R_WBN:R_WBN + BACKBONE_DIM, :].set(params["w_bn"])
    P = P.at[R_BBN, :].set(params["b_bn"].reshape(-1))
    P = P.at[R_WCL:R_WCL + BOTTLENECK, :NUM_CLASS].set(params["w_clf"])
    bcl_row = jnp.full((P_COLS,), NEG_PAD, jnp.float32)
    bcl_row = bcl_row.at[:NUM_CLASS].set(params["b_clf"].reshape(-1))
    P = P.at[R_BCL, :].set(bcl_row)
    onehot = jax.nn.one_hot(labels.astype(jnp.int32), NUM_CLASS, dtype=jnp.float32)
    P = P.at[R_OH:R_OH + B, :NUM_CLASS].set(onehot)
    return P


def transfernet_forward(src_nchw, tgt_nchw, labels, params):
    # NCHW -> (C, B*H*W): channels on sublanes, tokens on the lane axis (lane-dense).
    def to_cl(x):
        return jnp.transpose(x, (1, 0, 2, 3)).reshape(C_IN, -1).astype(jnp.float32)

    xT = jnp.concatenate([to_cl(src_nchw), to_cl(tgt_nchw)], axis=1)      # (C_IN, TOT)
    x_aug = jnp.concatenate(
        [xT,
         jnp.ones((1, TOT), jnp.float32),                                 # ones row -> folds conv bias
         jnp.zeros((8 - C_IN - 1, TOT), jnp.float32)], axis=0)            # (8, TOT)

    # Host-precomputed pool matrix (constant-folded under jit): pool[n, t] = 1/HW iff t//HW == n.
    img_id = jnp.arange(TOT, dtype=jnp.int32) // HW
    poolM = (jnp.arange(N2, dtype=jnp.int32)[:, None] == img_id[None, :]
             ).astype(jnp.float32) * (1.0 / HW)                           # (N2, TOT)

    packed = pack_params(params, labels)

    vmem = pl.BlockSpec(memory_space=pltpu.MemorySpace.VMEM)
    smem = pl.BlockSpec(memory_space=pltpu.MemorySpace.SMEM)
    losses = pl.pallas_call(
        transfernet_kernel,
        out_shape=jax.ShapeDtypeStruct((2,), jnp.float32),
        in_specs=[vmem, vmem, vmem],
        out_specs=smem,
    )(x_aug, poolM, packed)
    return losses[0], losses[1]


def init_params(key):
    ks = jax.random.split(key, 6)
    return {
        "w_conv": 0.2 * jax.random.normal(ks[0], (C_IN, BACKBONE_DIM), jnp.float32),
        "b_conv": 0.02 * jax.random.normal(ks[1], (1, BACKBONE_DIM), jnp.float32),
        "w_bn":   0.1 * jax.random.normal(ks[2], (BACKBONE_DIM, BOTTLENECK), jnp.float32),
        "b_bn":   0.02 * jax.random.normal(ks[3], (1, BOTTLENECK), jnp.float32),
        "w_clf":  0.1 * jax.random.normal(ks[4], (BOTTLENECK, NUM_CLASS), jnp.float32),
        "b_clf":  0.02 * jax.random.normal(ks[5], (1, NUM_CLASS), jnp.float32),
    }


if __name__ == "__main__":
    key = jax.random.PRNGKey(0)
    k_src, k_tgt, k_lbl, k_par = jax.random.split(key, 4)

    source = jax.random.normal(k_src, (B, C_IN, H, W), jnp.float32)   # NCHW
    target = jax.random.normal(k_tgt, (B, C_IN, H, W), jnp.float32)   # NCHW
    source_label = jax.random.randint(k_lbl, (B,), 0, NUM_CLASS, jnp.int32)
    params = init_params(k_par)

    fwd = jax.jit(transfernet_forward)
    clf_loss, transfer_loss = fwd(source, target, source_label, params)
    jax.block_until_ready((clf_loss, transfer_loss))

    assert jnp.isfinite(clf_loss) and jnp.isfinite(transfer_loss)
    print("KERNEL_OK")
</pallas_src>

<mosaic_0001>
module attributes {stable_mosaic.version = 11 : i64} {
  func.func @transfernet_kernel(%arg0: memref<8x4096xf32, #tpu.memory_space<vmem>>, %arg1: memref<16x4096xf32, #tpu.memory_space<vmem>>, %arg2: memref<96x32xf32, #tpu.memory_space<vmem>>, %arg3: memref<2xf32, #tpu.memory_space<smem>>) attributes {dimension_semantics = [], scalar_prefetch = 0 : i64, scratch_operands = 0 : i64, tpu.core_type = #tpu.core_type<tc>} {
    %c0 = arith.constant 0 : index
    %c0_0 = arith.constant 0 : index
    %0 = vector.load %arg2[%c0, %c0_0] : memref<96x32xf32, #tpu.memory_space<vmem>>, vector<8x32xf32>
    %c0_1 = arith.constant 0 : index
    %c0_2 = arith.constant 0 : index
    %1 = vector.load %arg0[%c0_1, %c0_2] : memref<8x4096xf32, #tpu.memory_space<vmem>>, vector<8x4096xf32>
    %cst = arith.constant dense<0.000000e+00> : vector<32x4096xf32>
    %2 = tpu.matmul %0, %1, %cst {dimension_numbers = #tpu.dot_dimension_numbers<[0], [0], [1], [1], [0, 1, 1, 1], [], []>} : vector<8x32xf32>, vector<8x4096xf32>, vector<32x4096xf32> -> vector<32x4096xf32>
    %cst_3 = arith.constant 0.000000e+00 : f32
    %3 = vector.broadcast %cst_3 : f32 to vector<32x4096xf32>
    %4 = arith.maximumf %2, %3 : vector<32x4096xf32>
    %c0_4 = arith.constant 0 : index
    %c0_5 = arith.constant 0 : index
    %5 = vector.load %arg1[%c0_4, %c0_5] : memref<16x4096xf32, #tpu.memory_space<vmem>>, vector<16x4096xf32>
    %cst_6 = arith.constant dense<0.000000e+00> : vector<32x16xf32>
    %6 = tpu.matmul %4, %5, %cst_6 {dimension_numbers = #tpu.dot_dimension_numbers<[1], [1], [0], [0], [0, 0, 1, 0], [], []>} : vector<32x4096xf32>, vector<16x4096xf32>, vector<32x16xf32> -> vector<32x16xf32>
    %c8 = arith.constant 8 : index
    %c0_7 = arith.constant 0 : index
    %7 = vector.load %arg2[%c8, %c0_7] : memref<96x32xf32, #tpu.memory_space<vmem>>, vector<32x32xf32>
    %c40 = arith.constant 40 : index
    %c0_8 = arith.constant 0 : index
    %8 = vector.load %arg2[%c40, %c0_8] : memref<96x32xf32, #tpu.memory_space<vmem>>, vector<1x32xf32>
    %cst_9 = arith.constant dense<0.000000e+00> : vector<16x32xf32>
    %9 = tpu.matmul %6, %7, %cst_9 {dimension_numbers = #tpu.dot_dimension_numbers<[0], [0], [1], [1], [0, 1, 1, 1], [], []>} : vector<32x16xf32>, vector<32x32xf32>, vector<16x32xf32> -> vector<16x32xf32>
    %10 = vector.broadcast %8 : vector<1x32xf32> to vector<16x32xf32>
    %11 = arith.addf %9, %10 : vector<16x32xf32>
    %cst_10 = arith.constant 0.000000e+00 : f32
    %12 = vector.broadcast %cst_10 : f32 to vector<16x32xf32>
    %13 = arith.maximumf %11, %12 : vector<16x32xf32>
    %c48 = arith.constant 48 : index
    %c0_11 = arith.constant 0 : index
    %14 = vector.load %arg2[%c48, %c0_11] : memref<96x32xf32, #tpu.memory_space<vmem>>, vector<32x32xf32>
    %c80 = arith.constant 80 : index
    %c0_12 = arith.constant 0 : index
    %15 = vector.load %arg2[%c80, %c0_12] : memref<96x32xf32, #tpu.memory_space<vmem>>, vector<1x32xf32>
    %c88 = arith.constant 88 : index
    %c0_13 = arith.constant 0 : index
    %16 = vector.load %arg2[%c88, %c0_13] : memref<96x32xf32, #tpu.memory_space<vmem>>, vector<8x32xf32>
    %17 = vector.extract_strided_slice %13 {offsets = [0, 0], sizes = [8, 32], strides = [1, 1]} : vector<16x32xf32> to vector<8x32xf32>
    %cst_14 = arith.constant dense<0.000000e+00> : vector<8x32xf32>
    %18 = tpu.matmul %17, %14, %cst_14 {dimension_numbers = #tpu.dot_dimension_numbers<[1], [0], [0], [1], [0, 0, 1, 1], [], []>} : vector<8x32xf32>, vector<32x32xf32>, vector<8x32xf32> -> vector<8x32xf32>
    %19 = vector.broadcast %15 : vector<1x32xf32> to vector<8x32xf32>
    %20 = arith.addf %18, %19 : vector<8x32xf32>
    %cst_15 = arith.constant dense<0xFF800000> : vector<8xf32>
    %21 = vector.multi_reduction <maximumf>, %20, %cst_15 [1] : vector<8x32xf32> to vector<8xf32>
    %22 = vector.shape_cast %21 : vector<8xf32> to vector<8x1xf32>
    %23 = vector.broadcast %22 : vector<8x1xf32> to vector<8x32xf32>
    %24 = arith.subf %20, %23 : vector<8x32xf32>
    %25 = math.exp %24 : vector<8x32xf32>
    %cst_16 = arith.constant dense<0.000000e+00> : vector<8xf32>
    %26 = vector.multi_reduction <add>, %25, %cst_16 [1] : vector<8x32xf32> to vector<8xf32>
    %27 = vector.shape_cast %26 : vector<8xf32> to vector<8x1xf32>
    %28 = math.log %27 : vector<8x1xf32>
    %29 = vector.broadcast %28 : vector<8x1xf32> to vector<8x32xf32>
    %30 = arith.subf %24, %29 : vector<8x32xf32>
    %31 = arith.mulf %16, %30 : vector<8x32xf32>
    %32 = vector.shape_cast %31 : vector<8x32xf32> to vector<1x8x32xf32>
    %cst_17 = arith.constant dense<0.000000e+00> : vector<1xf32>
    %33 = vector.multi_reduction <add>, %32, %cst_17 [1, 2] : vector<1x8x32xf32> to vector<1xf32>
    %34 = vector.shape_cast %33 : vector<1xf32> to vector<1x1x1xf32>
    %35 = vector.extract %34[0, 0, 0] : f32 from vector<1x1x1xf32>
    %cst_18 = arith.constant 0.000000e+00 : f32
    %36 = arith.subf %cst_18, %35 : f32
    %cst_19 = arith.constant 1.250000e-01 : f32
    %37 = arith.mulf %36, %cst_19 : f32
    %38 = arith.mulf %13, %13 : vector<16x32xf32>
    %cst_20 = arith.constant dense<0.000000e+00> : vector<16xf32>
    %39 = vector.multi_reduction <add>, %38, %cst_20 [1] : vector<16x32xf32> to vector<16xf32>
    %40 = vector.shape_cast %39 : vector<16xf32> to vector<16x1xf32>
    %cst_21 = arith.constant dense<0.000000e+00> : vector<16x16xf32>
    %41 = tpu.matmul %13, %13, %cst_21 {dimension_numbers = #tpu.dot_dimension_numbers<[1], [1], [0], [0], [0, 0, 1, 0], [], []>} : vector<16x32xf32>, vector<16x32xf32>, vector<16x16xf32> -> vector<16x16xf32>
    %42 = tpu.transpose %40, [1, 0] : vector<16x1xf32> -> vector<1x16xf32>
    %43 = vector.broadcast %40 : vector<16x1xf32> to vector<16x16xf32>
    %44 = vector.broadcast %42 : vector<1x16xf32> to vector<16x16xf32>
    %45 = arith.addf %43, %44 : vector<16x16xf32>
    %cst_22 = arith.constant 2.000000e+00 : f32
    %46 = vector.broadcast %cst_22 : f32 to vector<16x16xf32>
    %47 = arith.mulf %46, %41 : vector<16x16xf32>
    %48 = arith.subf %45, %47 : vector<16x16xf32>
    %cst_23 = arith.constant 0.000000e+00 : f32
    %49 = vector.broadcast %cst_23 : f32 to vector<16x16xf32>
    %50 = arith.maximumf %48, %49 : vector<16x16xf32>
    %51 = vector.shape_cast %50 : vector<16x16xf32> to vector<1x16x16xf32>
    %cst_24 = arith.constant dense<0.000000e+00> : vector<1xf32>
    %52 = vector.multi_reduction <add>, %51, %cst_24 [1, 2] : vector<1x16x16xf32> to vector<1xf32>
    %53 = vector.shape_cast %52 : vector<1xf32> to vector<1x1x1xf32>
    %54 = vector.extract %53[0, 0, 0] : f32 from vector<1x1x1xf32>
    %cst_25 = arith.constant 0.00416666688 : f32
    %55 = arith.mulf %54, %cst_25 : f32
    %cst_26 = arith.constant 4.000000e+00 : f32
    %56 = arith.divf %55, %cst_26 : f32
    %cst_27 = arith.constant 9.99999996E-13 : f32
    %57 = arith.maximumf %56, %cst_27 : f32
    %cst_28 = arith.constant 1.600000e+01 : f32
    %58 = arith.mulf %57, %cst_28 : f32
    %cst_29 = arith.constant -1.000000e+00 : f32
    %59 = arith.divf %cst_29, %58 : f32
    %60 = vector.broadcast %59 : f32 to vector<16x16xf32>
    %61 = arith.mulf %50, %60 : vector<16x16xf32>
    %62 = math.exp %61 : vector<16x16xf32>
    %63 = arith.mulf %62, %62 : vector<16x16xf32>
    %64 = arith.mulf %63, %63 : vector<16x16xf32>
    %65 = arith.mulf %64, %64 : vector<16x16xf32>
    %66 = arith.mulf %65, %65 : vector<16x16xf32>
    %67 = arith.addf %62, %63 : vector<16x16xf32>
    %68 = arith.addf %67, %64 : vector<16x16xf32>
    %69 = arith.addf %68, %65 : vector<16x16xf32>
    %70 = arith.addf %69, %66 : vector<16x16xf32>
    %71 = vector.extract_strided_slice %70 {offsets = [0, 0], sizes = [8, 8], strides = [1, 1]} : vector<16x16xf32> to vector<8x8xf32>
    %72 = vector.shape_cast %71 : vector<8x8xf32> to vector<1x8x8xf32>
    %cst_30 = arith.constant dense<0.000000e+00> : vector<1xf32>
    %73 = vector.multi_reduction <add>, %72, %cst_30 [1, 2] : vector<1x8x8xf32> to vector<1xf32>
    %74 = vector.shape_cast %73 : vector<1xf32> to vector<1x1x1xf32>
    %75 = vector.extract %74[0, 0, 0] : f32 from vector<1x1x1xf32>
    %cst_31 = arith.constant 6.400000e+01 : f32
    %76 = arith.divf %75, %cst_31 : f32
    %77 = vector.extract_strided_slice %70 {offsets = [8, 8], sizes = [8, 8], strides = [1, 1]} : vector<16x16xf32> to vector<8x8xf32>
    %78 = vector.shape_cast %77 : vector<8x8xf32> to vector<1x8x8xf32>
    %cst_32 = arith.constant dense<0.000000e+00> : vector<1xf32>
    %79 = vector.multi_reduction <add>, %78, %cst_32 [1, 2] : vector<1x8x8xf32> to vector<1xf32>
    %80 = vector.shape_cast %79 : vector<1xf32> to vector<1x1x1xf32>
    %81 = vector.extract %80[0, 0, 0] : f32 from vector<1x1x1xf32>
    %cst_33 = arith.constant 6.400000e+01 : f32
    %82 = arith.divf %81, %cst_33 : f32
    %83 = arith.addf %76, %82 : f32
    %84 = vector.extract_strided_slice %70 {offsets = [0, 8], sizes = [8, 8], strides = [1, 1]} : vector<16x16xf32> to vector<8x8xf32>
    %85 = vector.shape_cast %84 : vector<8x8xf32> to vector<1x8x8xf32>
    %cst_34 = arith.constant dense<0.000000e+00> : vector<1xf32>
    %86 = vector.multi_reduction <add>, %85, %cst_34 [1, 2] : vector<1x8x8xf32> to vector<1xf32>
    %87 = vector.shape_cast %86 : vector<1xf32> to vector<1x1x1xf32>
    %88 = vector.extract %87[0, 0, 0] : f32 from vector<1x1x1xf32>
    %cst_35 = arith.constant 6.400000e+01 : f32
    %89 = arith.divf %88, %cst_35 : f32
    %cst_36 = arith.constant 2.000000e+00 : f32
    %90 = arith.mulf %cst_36, %89 : f32
    %91 = arith.subf %83, %90 : f32
    %c0_37 = arith.constant 0 : index
    %92 = memref.load %arg3[%c0_37] : memref<2xf32, #tpu.memory_space<smem>>
    memref.store %37, %arg3[%c0_37] : memref<2xf32, #tpu.memory_space<smem>>
    %c1 = arith.constant 1 : index
    %93 = memref.load %arg3[%c1] : memref<2xf32, #tpu.memory_space<smem>>
    memref.store %91, %arg3[%c1] : memref<2xf32, #tpu.memory_space<smem>>
    return
  }
}

</mosaic_0001>

<llo_original>
// kernel: transfernet_forward.1
$region0: #{transfernet_forward.1}
  #allocation0 [shape = 'u32[]', space=smem, size = 0x4, offset = 0x4, fixed_abs, tag = 'smem constant byte address 0x4 - core index']
  #allocation1 [shape = 'u32[144,128]{1,0:T(1,128)}', space=vmem, size = 0x12000, scoped, tag = 'internal scratch']
  %s0 = inlined_call_operand.vmem [shape: f32[8,4096], index: 0, kind: input, shape index: {}]
  %s1 = inlined_call_operand.vmem [shape: f32[16,4096], index: 1, kind: input, shape index: {}]
  %s2 = inlined_call_operand.vmem [shape: f32[96,32], index: 2, kind: input, shape index: {}]
  %s3 = inlined_call_operand.vmem [shape: f32[2], index: 3, kind: output, shape index: {}]
  %s4 = sld [smem:[#allocation0]]
  $region22: #{transfernet_forward.1} parent=0
    _
  %s6 = ssub.s32 1, %s4
  %s7 = scalar_select 0, %s6, %s4
  $region1: #{transfernet_forward.1} parent=0
    #allocation2 [shape = 'u8[512]{0}', space=smem, size = 0x200, scoped, tag = 'output window, operand 0, single buffered']
    #allocation3 [shape = 's32[1]{0}', space=sflag, size = 0x4, scoped, tag = 'scoped memory for transfernet_forward.1']
    %8 = vsyncpa [#allocation3], 0
    // Predicated region
    $region2: #{transfernet_forward.1} parent=1 // pred_check
      _
    $region3: #{transfernet_forward.1} parent=1 // pred_check_branch
      %10 = sbr.rel (0) target = $region5
    $region4: #{transfernet_forward.1} parent=1 // pred_region
      _
    $region5: #{transfernet_forward.1} parent=1 // pred_fallthru
      _
    // Predicated region
    $region6: #{transfernet_forward.1} parent=1 // pred_check
      _
    $region7: #{transfernet_forward.1} parent=1 // pred_check_branch
      %12 = sbr.rel (0) target = $region9
    $region8: #{transfernet_forward.1} parent=1 // pred_region
      _
    $region9: #{transfernet_forward.1} parent=1 // pred_fallthru
      _
    // Predicated region
    $region10: #{transfernet_forward.1} parent=1 // pred_check
      _
    $region11: #{transfernet_forward.1} parent=1 // pred_check_branch
      %14 = sbr.rel (0) target = $region13
    $region12: #{transfernet_forward.1} parent=1 // pred_region
      _
    $region13: #{transfernet_forward.1} parent=1 // pred_fallthru
      _
    %v15 = vld [vmem:[%s2] sm:$0xff]
    %v16 = vld [vmem:[%s0] sm:$0xff]
    %v17 = vld [vmem:[%s0 + $0x8] sm:$0xff]
    %v18 = vld [vmem:[%s0 + $0x10] sm:$0xff]
    %v19 = vld [vmem:[%s0 + $0x18] sm:$0xff]
    %v20 = vld [vmem:[%s0 + $0x20] sm:$0xff]
    %v21 = vld [vmem:[%s0 + $0x28] sm:$0xff]
    %v22 = vld [vmem:[%s0 + $0x30] sm:$0xff]
    %v23 = vld [vmem:[%s0 + $0x38] sm:$0xff]
    %v24 = vld [vmem:[%s0 + $0x40] sm:$0xff]
    %v25 = vld [vmem:[%s0 + $0x48] sm:$0xff]
    %v26 = vld [vmem:[%s0 + $0x50] sm:$0xff]
    %v27 = vld [vmem:[%s0 + $0x58] sm:$0xff]
    %v28 = vld [vmem:[%s0 + $0x60] sm:$0xff]
    %v29 = vld [vmem:[%s0 + $0x68] sm:$0xff]
    %v30 = vld [vmem:[%s0 + $0x70] sm:$0xff]
    %v31 = vld [vmem:[%s0 + $0x78] sm:$0xff]
    %v32 = vld [vmem:[%s0 + $0x80] sm:$0xff]
    %v33 = vld [vmem:[%s0 + $0x88] sm:$0xff]
    %v34 = vld [vmem:[%s0 + $0x90] sm:$0xff]
    %v35 = vld [vmem:[%s0 + $0x98] sm:$0xff]
    %v36 = vld [vmem:[%s0 + $0xa0] sm:$0xff]
    %v37 = vld [vmem:[%s0 + $0xa8] sm:$0xff]
    %v38 = vld [vmem:[%s0 + $0xb0] sm:$0xff]
    %v39 = vld [vmem:[%s0 + $0xb8] sm:$0xff]
    %v40 = vld [vmem:[%s0 + $0xc0] sm:$0xff]
    %v41 = vld [vmem:[%s0 + $0xc8] sm:$0xff]
    %v42 = vld [vmem:[%s0 + $0xd0] sm:$0xff]
    %v43 = vld [vmem:[%s0 + $0xd8] sm:$0xff]
    %v44 = vld [vmem:[%s0 + $0xe0] sm:$0xff]
    %v45 = vld [vmem:[%s0 + $0xe8] sm:$0xff]
    %v46 = vld [vmem:[%s0 + $0xf0] sm:$0xff]
    %v47 = vld [vmem:[%s0 + $0xf8] sm:$0xff]
    %48 = vxpose.xlu0.b32.start [1/16] %v15, 128
    %49 = vxpose.xlu0.b32.cont [2/16] 0.0, 128
    %50 = vxpose.xlu0.b32.cont [3/16] 0.0, 128
    %51 = vxpose.xlu0.b32.cont [4/16] 0.0, 128
    %52 = vxpose.xlu0.b32.cont [5/16] 0.0, 128
    %53 = vxpose.xlu0.b32.cont [6/16] 0.0, 128
    %54 = vxpose.xlu0.b32.cont [7/16] 0.0, 128
    %55 = vxpose.xlu0.b32.cont [8/16] 0.0, 128
    %56 = vxpose.xlu0.b32.cont [9/16] 0.0, 128
    %57 = vxpose.xlu0.b32.cont [10/16] 0.0, 128
    %58 = vxpose.xlu0.b32.cont [11/16] 0.0, 128
    %59 = vxpose.xlu0.b32.cont [12/16] 0.0, 128
    %60 = vxpose.xlu0.b32.cont [13/16] 0.0, 128
    %61 = vxpose.xlu0.b32.cont [14/16] 0.0, 128
    %62 = vxpose.xlu0.b32.cont [15/16] 0.0, 128
    %63 = vxpose.xlu0.b32.end [16/16] 0.0, 128
    %v64 = vpop.trf.xlu0
    %v65 = vpop.trf.xlu0
    %v66 = vpop.trf.xlu0
    %v67 = vpop.trf.xlu0
    %v68 = vpop.trf.xlu0
    %v69 = vpop.trf.xlu0
    %v70 = vpop.trf.xlu0
    %v71 = vpop.trf.xlu0
    %v72 = vpop.trf.xlu0
    %v73 = vpop.trf.xlu0
    %v74 = vpop.trf.xlu0
    %v75 = vpop.trf.xlu0
    %v76 = vpop.trf.xlu0
    %v77 = vpop.trf.xlu0
    %v78 = vpop.trf.xlu0
    %v79 = vpop.trf.xlu0
    %vm80 = vcmask 64512
    %v82 = vsel %vm80, %v64, 0
    %v85 = vsel %vm80, %v65, 0
    %v88 = vsel %vm80, %v66, 0
    %v91 = vsel %vm80, %v67, 0
    %93 = vmatprep.subr.mxu0 %v17
    %94 = vmatpush1.msra.mxu0 %v16
    %95 = vmatprep.subr.mxu0 0.0
    %96 = vmatpush1.msra.mxu0 0.0
    %97 = vmatprep.subr.mxu0 0.0
    %98 = vmatpush1.msra.mxu0 0.0
    %99 = vmatprep.subr.mxu0 0.0
    %100 = vmatpush1.msra.mxu0 0.0
    %101 = vmatprep.subr.mxu0 0.0
    %102 = vmatpush1.msra.mxu0 0.0
    %103 = vmatprep.subr.mxu0 0.0
    %104 = vmatpush1.msra.mxu0 0.0
    %105 = vmatprep.subr.mxu0 0.0
    %106 = vmatpush1.msra.mxu0 0.0
    %107 = vmatprep.subr.mxu0 0.0
    %108 = vmatpush1.msra.mxu0 0.0
    %109 = vmatprep.subr.mxu0 0.0
    %110 = vmatpush1.msra.mxu0 0.0
    %111 = vmatprep.subr.mxu0 0.0
    %112 = vmatpush1.msra.mxu0 0.0
    %113 = vmatprep.subr.mxu0 0.0
    %114 = vmatpush1.msra.mxu0 0.0
    %115 = vmatprep.subr.mxu0 0.0
    %116 = vmatpush1.msra.mxu0 0.0
    %117 = vmatprep.subr.mxu0 0.0
    %118 = vmatpush1.msra.mxu0 0.0
    %119 = vmatprep.subr.mxu0 0.0
    %120 = vmatpush1.msra.mxu0 0.0
    %121 = vmatprep.subr.mxu0 0.0
    %122 = vmatpush1.msra.mxu0 0.0
    %123 = vmatprep.subr.mxu0 0.0
    %124 = vmatpush1.msra.mxu0 0.0
    %125 = vmatprep.subr.mxu0 0.0
    %126 = vmatpush1.msra.mxu0 0.0
    %127 = vmatprep.subr.mxu0 0.0
    %128 = vmatpush1.msra.mxu0 0.0
    %129 = vmatprep.subr.mxu0 0.0
    %130 = vmatpush1.msra.mxu0 0.0
    %131 = vmatprep.subr.mxu0 0.0
    %132 = vmatpush1.msra.mxu0 0.0
    %133 = vmatprep.subr.mxu0 0.0
    %134 = vmatpush1.msra.mxu0 0.0
    %135 = vmatprep.subr.mxu0 0.0
    %136 = vmatpush1.msra.mxu0 0.0
    %137 = vmatprep.subr.mxu0 0.0
    %138 = vmatpush1.msra.mxu0 0.0
    %139 = vmatprep.subr.mxu0 0.0
    %140 = vmatpush1.msra.mxu0 0.0
    %141 = vmatprep.subr.mxu0 0.0
    %142 = vmatpush1.msra.mxu0 0.0
    %143 = vmatprep.subr.mxu0 0.0
    %144 = vmatpush1.msra.mxu0 0.0
    %145 = vmatprep.subr.mxu0 0.0
    %146 = vmatpush1.msra.mxu0 0.0
    %147 = vmatprep.subr.mxu0 0.0
    %148 = vmatpush1.msra.mxu0 0.0
    %149 = vmatprep.subr.mxu0 0.0
    %150 = vmatpush1.msra.mxu0 0.0
    %151 = vmatprep.subr.mxu0 0.0
    %152 = vmatpush1.msra.mxu0 0.0
    %153 = vmatprep.subr.mxu0 0.0
    %154 = vmatpush1.msra.mxu0 0.0
    %155 = vmatprep.subr.mxu0 0.0
    %156 = vmatpush1.msra.mxu0 0.0
    %157 = vmatprep.mubr.f32.mxu0 0.0
    %158 = vmatmul.mubr.f32.gmra.mrb[0].mxu0 %v82
    %v159 = vpop.f32.mrb[0].mxu0
    %v160 = vadd.f32 0.0, %v159
    %v161 = vpop.f32.mrb[0].mxu0
    %v162 = vadd.f32 0.0, %v161
    %163 = vmatprep.mubr.f32.mxu0 0.0
    %164 = vmatmul.mubr.f32.gmra.mrb[0].mxu0 %v85
    %v165 = vpop.f32.mrb[0].mxu0
    %v166 = vadd.f32 0.0, %v165
    %v167 = vpop.f32.mrb[0].mxu0
    %v168 = vadd.f32 0.0, %v167
    %169 = vmatprep.mubr.f32.mxu0 0.0
    %170 = vmatmul.mubr.f32.gmra.mrb[0].mxu0 %v88
    %v171 = vpop.f32.mrb[0].mxu0
    %v172 = vadd.f32 0.0, %v171
    %v173 = vpop.f32.mrb[0].mxu0
    %v174 = vadd.f32 0.0, %v173
    %175 = vmatprep.mubr.f32.mxu0 0.0
    %176 = vmatmul.mubr.f32.gmra.mrb[0].mxu0 %v91
    %v177 = vpop.f32.mrb[0].mxu0
    %v178 = vadd.f32 0.0, %v177
    %v179 = vpop.f32.mrb[0].mxu0
    %v180 = vadd.f32 0.0, %v179
    %181 = vdwg.mxu0
    %182 = vmatprep.subr.mxu0 %v19
    %183 = vmatpush1.msra.mxu0 %v18
    %184 = vmatprep.subr.mxu0 0.0
    %185 = vmatpush1.msra.mxu0 0.0
    %186 = vmatprep.subr.mxu0 0.0
    %187 = vmatpush1.msra.mxu0 0.0
    %188 = vmatprep.subr.mxu0 0.0
    %189 = vmatpush1.msra.mxu0 0.0
    %190 = vmatprep.subr.mxu0 0.0
    %191 = vmatpush1.msra.mxu0 0.0
    %192 = vmatprep.subr.mxu0 0.0
    %193 = vmatpush1.msra.mxu0 0.0
    %194 = vmatprep.subr.mxu0 0.0
    %195 = vmatpush1.msra.mxu0 0.0
    %196 = vmatprep.subr.mxu0 0.0
    %197 = vmatpush1.msra.mxu0 0.0
    %198 = vmatprep.subr.mxu0 0.0
    %199 = vmatpush1.msra.mxu0 0.0
    %200 = vmatprep.subr.mxu0 0.0
    %201 = vmatpush1.msra.mxu0 0.0
    %202 = vmatprep.subr.mxu0 0.0
    %203 = vmatpush1.msra.mxu0 0.0
    %204 = vmatprep.subr.mxu0 0.0
    %205 = vmatpush1.msra.mxu0 0.0
    %206 = vmatprep.subr.mxu0 0.0
    %207 = vmatpush1.msra.mxu0 0.0
    %208 = vmatprep.subr.mxu0 0.0
    %209 = vmatpush1.msra.mxu0 0.0
    %210 = vmatprep.subr.mxu0 0.0
    %211 = vmatpush1.msra.mxu0 0.0
    %212 = vmatprep.subr.mxu0 0.0
    %213 = vmatpush1.msra.mxu0 0.0
    %214 = vmatprep.subr.mxu0 0.0
    %215 = vmatpush1.msra.mxu0 0.0
    %216 = vmatprep.subr.mxu0 0.0
    %217 = vmatpush1.msra.mxu0 0.0
    %218 = vmatprep.subr.mxu0 0.0
    %219 = vmatpush1.msra.mxu0 0.0
    %220 = vmatprep.subr.mxu0 0.0
    %221 = vmatpush1.msra.mxu0 0.0
    %222 = vmatprep.subr.mxu0 0.0
    %223 = vmatpush1.msra.mxu0 0.0
    %224 = vmatprep.subr.mxu0 0.0
    %225 = vmatpush1.msra.mxu0 0.0
    %226 = vmatprep.subr.mxu0 0.0
    %227 = vmatpush1.msra.mxu0 0.0
    %228 = vmatprep.subr.mxu0 0.0
    %229 = vmatpush1.msra.mxu0 0.0
    %230 = vmatprep.subr.mxu0 0.0
    %231 = vmatpush1.msra.mxu0 0.0
    %232 = vmatprep.subr.mxu0 0.0
    %233 = vmatpush1.msra.mxu0 0.0
    %234 = vmatprep.subr.mxu0 0.0
    %235 = vmatpush1.msra.mxu0 0.0
    %236 = vmatprep.subr.mxu0 0.0
    %237 = vmatpush1.msra.mxu0 0.0
    %238 = vmatprep.subr.mxu0 0.0
    %239 = vmatpush1.msra.mxu0 0.0
    %240 = vmatprep.subr.mxu0 0.0
    %241 = vmatpush1.msra.mxu0 0.0
    %242 = vmatprep.subr.mxu0 0.0
    %243 = vmatpush1.msra.mxu0 0.0
    %244 = vmatprep.subr.mxu0 0.0
    %245 = vmatpush1.msra.mxu0 0.0
    %246 = vmatprep.mubr.f32.mxu0 0.0
    %247 = vmatmul.mubr.f32.gmra.mrb[0].mxu0 %v82
    %v248 = vpop.f32.mrb[0].mxu0
    %v249 = vadd.f32 0.0, %v248
    %v250 = vpop.f32.mrb[0].mxu0
    %v251 = vadd.f32 0.0, %v250
    %252 = vmatprep.mubr.f32.mxu0 0.0
    %253 = vmatmul.mubr.f32.gmra.mrb[0].mxu0 %v85
    %v254 = vpop.f32.mrb[0].mxu0
    %v255 = vadd.f32 0.0, %v254
    %v256 = vpop.f32.mrb[0].mxu0
    %v257 = vadd.f32 0.0, %v256
    %258 = vmatprep.mubr.f32.mxu0 0.0
    %259 = vmatmul.mubr.f32.gmra.mrb[0].mxu0 %v88
    %v260 = vpop.f32.mrb[0].mxu0
    %v261 = vadd.f32 0.0, %v260
    %v262 = vpop.f32.mrb[0].mxu0
    %v263 = vadd.f32 0.0, %v262
    %264 = vmatprep.mubr.f32.mxu0 0.0
    %265 = vmatmul.mubr.f32.gmra.mrb[0].mxu0 %v91
    %v266 = vpop.f32.mrb[0].mxu0
    %v267 = vadd.f32 0.0, %v266
    %v268 = vpop.f32.mrb[0].mxu0
    %v269 = vadd.f32 0.0, %v268
    %270 = vdwg.mxu0
    %271 = vmatprep.subr.mxu0 %v21
    %272 = vmatpush1.msra.mxu0 %v20
    %273 = vmatprep.subr.mxu0 0.0
    %274 = vmatpush1.msra.mxu0 0.0
    %275 = vmatprep.subr.mxu0 0.0
    %276 = vmatpush1.msra.mxu0 0.0
    %277 = vmatprep.subr.mxu0 0.0
    %278 = vmatpush1.msra.mxu0 0.0
    %279 = vmatprep.subr.mxu0 0.0
    %280 = vmatpush1.msra.mxu0 0.0
    %281 = vmatprep.subr.mxu0 0.0
    %282 = vmatpush1.msra.mxu0 0.0
    %283 = vmatprep.subr.mxu0 0.0
    %284 = vmatpush1.msra.mxu0 0.0
    %285 = vmatprep.subr.mxu0 0.0
    %286 = vmatpush1.msra.mxu0 0.0
    %287 = vmatprep.subr.mxu0 0.0
    %288 = vmatpush1.msra.mxu0 0.0
    %289 = vmatprep.subr.mxu0 0.0
    %290 = vmatpush1.msra.mxu0 0.0
    %291 = vmatprep.subr.mxu0 0.0
    %292 = vmatpush1.msra.mxu0 0.0
    %293 = vmatprep.subr.mxu0 0.0
    %294 = vmatpush1.msra.mxu0 0.0
    %295 = vmatprep.subr.mxu0 0.0
    %296 = vmatpush1.msra.mxu0 0.0
    %297 = vmatprep.subr.mxu0 0.0
    %298 = vmatpush1.msra.mxu0 0.0
    %299 = vmatprep.subr.mxu0 0.0
    %300 = vmatpush1.msra.mxu0 0.0
    %301 = vmatprep.subr.mxu0 0.0
    %302 = vmatpush1.msra.mxu0 0.0
    %303 = vmatprep.subr.mxu0 0.0
    %304 = vmatpush1.msra.mxu0 0.0
    %305 = vmatprep.subr.mxu0 0.0
    %306 = vmatpush1.msra.mxu0 0.0
    %307 = vmatprep.subr.mxu0 0.0
    %308 = vmatpush1.msra.mxu0 0.0
    %309 = vmatprep.subr.mxu0 0.0
    %310 = vmatpush1.msra.mxu0 0.0
    %311 = vmatprep.subr.mxu0 0.0
    %312 = vmatpush1.msra.mxu0 0.0
    %313 = vmatprep.subr.mxu0 0.0
    %314 = vmatpush1.msra.mxu0 0.0
    %315 = vmatprep.subr.mxu0 0.0
    %316 = vmatpush1.msra.mxu0 0.0
    %317 = vmatprep.subr.mxu0 0.0
    %318 = vmatpush1.msra.mxu0 0.0
    %319 = vmatprep.subr.mxu0 0.0
    %320 = vmatpush1.msra.mxu0 0.0
    %321 = vmatprep.subr.mxu0 0.0
    %322 = vmatpush1.msra.mxu0 0.0
    %323 = vmatprep.subr.mxu0 0.0
    %324 = vmatpush1.msra.mxu0 0.0
    %325 = vmatprep.subr.mxu0 0.0
    %326 = vmatpush1.msra.mxu0 0.0
    %327 = vmatprep.subr.mxu0 0.0
    %328 = vmatpush1.msra.mxu0 0.0
    %329 = vmatprep.subr.mxu0 0.0
    %330 = vmatpush1.msra.mxu0 0.0
    %331 = vmatprep.subr.mxu0 0.0
    %332 = vmatpush1.msra.mxu0 0.0
    %333 = vmatprep.subr.mxu0 0.0
    %334 = vmatpush1.msra.mxu0 0.0
    %335 = vmatprep.mubr.f32.mxu0 0.0
    %336 = vmatmul.mubr.f32.gmra.mrb[0].mxu0 %v82
    %v337 = vpop.f32.mrb[0].mxu0
    %v338 = vadd.f32 0.0, %v337
    %v339 = vpop.f32.mrb[0].mxu0
    %v340 = vadd.f32 0.0, %v339
    %341 = vmatprep.mubr.f32.mxu0 0.0
    %342 = vmatmul.mubr.f32.gmra.mrb[0].mxu0 %v85
    %v343 = vpop.f32.mrb[0].mxu0
    %v344 = vadd.f32 0.0, %v343
    %v345 = vpop.f32.mrb[0].mxu0
    %v346 = vadd.f32 0.0, %v345
    %347 = vmatprep.mubr.f32.mxu0 0.0
    %348 = vmatmul.mubr.f32.gmra.mrb[0].mxu0 %v88
    %v349 = vpop.f32.mrb[0].mxu0
    %v350 = vadd.f32 0.0, %v349
    %v351 = vpop.f32.mrb[0].mxu0
    %v352 = vadd.f32 0.0, %v351
    %353 = vmatprep.mubr.f32.mxu0 0.0
    %354 = vmatmul.mubr.f32.gmra.mrb[0].mxu0 %v91
    %v355 = vpop.f32.mrb[0].mxu0
    %v356 = vadd.f32 0.0, %v355
    %v357 = vpop.f32.mrb[0].mxu0
    %v358 = vadd.f32 0.0, %v357
    %359 = vdwg.mxu0
    %360 = vmatprep.subr.mxu0 %v23
    %361 = vmatpush1.msra.mxu0 %v22
    %362 = vmatprep.subr.mxu0 0.0
    %363 = vmatpush1.msra.mxu0 0.0
    %364 = vmatprep.subr.mxu0 0.0
    %365 = vmatpush1.msra.mxu0 0.0
    %366 = vmatprep.subr.mxu0 0.0
    %367 = vmatpush1.msra.mxu0 0.0
    %368 = vmatprep.subr.mxu0 0.0
    %369 = vmatpush1.msra.mxu0 0.0
    %370 = vmatprep.subr.mxu0 0.0
    %371 = vmatpush1.msra.mxu0 0.0
    %372 = vmatprep.subr.mxu0 0.0
    %373 = vmatpush1.msra.mxu0 0.0
    %374 = vmatprep.subr.mxu0 0.0
    %375 = vmatpush1.msra.mxu0 0.0
    %376 = vmatprep.subr.mxu0 0.0
    %377 = vmatpush1.msra.mxu0 0.0
    %378 = vmatprep.subr.mxu0 0.0
    %379 = vmatpush1.msra.mxu0 0.0
    %380 = vmatprep.subr.mxu0 0.0
    %381 = vmatpush1.msra.mxu0 0.0
    %382 = vmatprep.subr.mxu0 0.0
    %383 = vmatpush1.msra.mxu0 0.0
    %384 = vmatprep.subr.mxu0 0.0
    %385 = vmatpush1.msra.mxu0 0.0
    %386 = vmatprep.subr.mxu0 0.0
    %387 = vmatpush1.msra.mxu0 0.0
    %388 = vmatprep.subr.mxu0 0.0
    %389 = vmatpush1.msra.mxu0 0.0
    %390 = vmatprep.subr.mxu0 0.0
    %391 = vmatpush1.msra.mxu0 0.0
    %392 = vmatprep.subr.mxu0 0.0
    %393 = vmatpush1.msra.mxu0 0.0
    %394 = vmatprep.subr.mxu0 0.0
    %395 = vmatpush1.msra.mxu0 0.0
    %396 = vmatprep.subr.mxu0 0.0
    %397 = vmatpush1.msra.mxu0 0.0
    %398 = vmatprep.subr.mxu0 0.0
    %399 = vmatpush1.msra.mxu0 0.0
    %400 = vmatprep.subr.mxu0 0.0
    %401 = vmatpush1.msra.mxu0 0.0
    %402 = vmatprep.subr.mxu0 0.0
    %403 = vmatpush1.msra.mxu0 0.0
    %404 = vmatprep.subr.mxu0 0.0
    %405 = vmatpush1.msra.mxu0 0.0
    %406 = vmatprep.subr.mxu0 0.0
    %407 = vmatpush1.msra.mxu0 0.0
    %408 = vmatprep.subr.mxu0 0.0
    %409 = vmatpush1.msra.mxu0 0.0
    %410 = vmatprep.subr.mxu0 0.0
    %411 = vmatpush1.msra.mxu0 0.0
    %412 = vmatprep.subr.mxu0 0.0
    %413 = vmatpush1.msra.mxu0 0.0
    %414 = vmatprep.subr.mxu0 0.0
    %415 = vmatpush1.msra.mxu0 0.0
    %416 = vmatprep.subr.mxu0 0.0
    %417 = vmatpush1.msra.mxu0 0.0
    %418 = vmatprep.subr.mxu0 0.0
    %419 = vmatpush1.msra.mxu0 0.0
    %420 = vmatprep.subr.mxu0 0.0
    %421 = vmatpush1.msra.mxu0 0.0
    %422 = vmatprep.subr.mxu0 0.0
    %423 = vmatpush1.msra.mxu0 0.0
    %424 = vmatprep.mubr.f32.mxu0 0.0
    %425 = vmatmul.mubr.f32.gmra.mrb[0].mxu0 %v82
    %v426 = vpop.f32.mrb[0].mxu0
    %v427 = vadd.f32 0.0, %v426
    %v428 = vpop.f32.mrb[0].mxu0
    %v429 = vadd.f32 0.0, %v428
    %430 = vmatprep.mubr.f32.mxu0 0.0
    %431 = vmatmul.mubr.f32.gmra.mrb[0].mxu0 %v85
    %v432 = vpop.f32.mrb[0].mxu0
    %v433 = vadd.f32 0.0, %v432
    %v434 = vpop.f32.mrb[0].mxu0
    %v435 = vadd.f32 0.0, %v434
    %436 = vmatprep.mubr.f32.mxu0 0.0
    %437 = vmatmul.mubr.f32.gmra.mrb[0].mxu0 %v88
    %v438 = vpop.f32.mrb[0].mxu0
    %v439 = vadd.f32 0.0, %v438
    %v440 = vpop.f32.mrb[0].mxu0
    %v441 = vadd.f32 0.0, %v440
    %442 = vmatprep.mubr.f32.mxu0 0.0
    %443 = vmatmul.mubr.f32.gmra.mrb[0].mxu0 %v91
    %v444 = vpop.f32.mrb[0].mxu0
    %v445 = vadd.f32 0.0, %v444
    %v446 = vpop.f32.mrb[0].mxu0
    %v447 = vadd.f32 0.0, %v446
    %448 = vdwg.mxu0
    %449 = vmatprep.subr.mxu0 %v25
    %450 = vmatpush1.msra.mxu0 %v24
    %451 = vmatprep.subr.mxu0 0.0
    %452 = vmatpush1.msra.mxu0 0.0
    %453 = vmatprep.subr.mxu0 0.0
    %454 = vmatpush1.msra.mxu0 0.0
    %455 = vmatprep.subr.mxu0 0.0
    %456 = vmatpush1.msra.mxu0 0.0
    %457 = vmatprep.subr.mxu0 0.0
    %458 = vmatpush1.msra.mxu0 0.0
    %459 = vmatprep.subr.mxu0 0.0
    %460 = vmatpush1.msra.mxu0 0.0
    %461 = vmatprep.subr.mxu0 0.0
    %462 = vmatpush1.msra.mxu0 0.0
    %463 = vmatprep.subr.mxu0 0.0
    %464 = vmatpush1.msra.mxu0 0.0
    %465 = vmatprep.subr.mxu0 0.0
    %466 = vmatpush1.msra.mxu0 0.0
    %467 = vmatprep.subr.mxu0 0.0
    %468 = vmatpush1.msra.mxu0 0.0
    %469 = vmatprep.subr.mxu0 0.0
    %470 = vmatpush1.msra.mxu0 0.0
    %471 = vmatprep.subr.mxu0 0.0
    %472 = vmatpush1.msra.mxu0 0.0
    %473 = vmatprep.subr.mxu0 0.0
    %474 = vmatpush1.msra.mxu0 0.0
    %475 = vmatprep.subr.mxu0 0.0
    %476 = vmatpush1.msra.mxu0 0.0
    %477 = vmatprep.subr.mxu0 0.0
    %478 = vmatpush1.msra.mxu0 0.0
    %479 = vmatprep.subr.mxu0 0.0
    %480 = vmatpush1.msra.mxu0 0.0
    %481 = vmatprep.subr.mxu0 0.0
    %482 = vmatpush1.msra.mxu0 0.0
    %483 = vmatprep.subr.mxu0 0.0
    %484 = vmatpush1.msra.mxu0 0.0
    %485 = vmatprep.subr.mxu0 0.0
    %486 = vmatpush1.msra.mxu0 0.0
    %487 = vmatprep.subr.mxu0 0.0
    %488 = vmatpush1.msra.mxu0 0.0
    %489 = vmatprep.subr.mxu0 0.0
    %490 = vmatpush1.msra.mxu0 0.0
    %491 = vmatprep.subr.mxu0 0.0
    %492 = vmatpush1.msra.mxu0 0.0
    %493 = vmatprep.subr.mxu0 0.0
    %494 = vmatpush1.msra.mxu0 0.0
    %495 = vmatprep.subr.mxu0 0.0
    %496 = vmatpush1.msra.mxu0 0.0
    %497 = vmatprep.subr.mxu0 0.0
    %498 = vmatpush1.msra.mxu0 0.0
    %499 = vmatprep.subr.mxu0 0.0
    %500 = vmatpush1.msra.mxu0 0.0
    %501 = vmatprep.subr.mxu0 0.0
    %502 = vmatpush1.msra.mxu0 0.0
    %503 = vmatprep.subr.mxu0 0.0
    %504 = vmatpush1.msra.mxu0 0.0
    %505 = vmatprep.subr.mxu0 0.0
    %506 = vmatpush1.msra.mxu0 0.0
    %507 = vmatprep.subr.mxu0 0.0
    %508 = vmatpush1.msra.mxu0 0.0
    %509 = vmatprep.subr.mxu0 0.0
    %510 = vmatpush1.msra.mxu0 0.0
    %511 = vmatprep.subr.mxu0 0.0
    %512 = vmatpush1.msra.mxu0 0.0
    %513 = vmatprep.mubr.f32.mxu0 0.0
    %514 = vmatmul.mubr.f32.gmra.mrb[0].mxu0 %v82
    %v515 = vpop.f32.mrb[0].mxu0
    %v516 = vadd.f32 0.0, %v515
    %v517 = vpop.f32.mrb[0].mxu0
    %v518 = vadd.f32 0.0, %v517
    %519 = vmatprep.mubr.f32.mxu0 0.0
    %520 = vmatmul.mubr.f32.gmra.mrb[0].mxu0 %v85
    %v521 = vpop.f32.mrb[0].mxu0
    %v522 = vadd.f32 0.0, %v521
    %v523 = vpop.f32.mrb[0].mxu0
    %v524 = vadd.f32 0.0, %v523
    %525 = vmatprep.mubr.f32.mxu0 0.0
    %526 = vmatmul.mubr.f32.gmra.mrb[0].mxu0 %v88
    %v527 = vpop.f32.mrb[0].mxu0
    %v528 = vadd.f32 0.0, %v527
    %v529 = vpop.f32.mrb[0].mxu0
    %v530 = vadd.f32 0.0, %v529
    %531 = vmatprep.mubr.f32.mxu0 0.0
    %532 = vmatmul.mubr.f32.gmra.mrb[0].mxu0 %v91
    %v533 = vpop.f32.mrb[0].mxu0
    %v534 = vadd.f32 0.0, %v533
    %v535 = vpop.f32.mrb[0].mxu0
    %v536 = vadd.f32 0.0, %v535
    %537 = vdwg.mxu0
    %538 = vmatprep.subr.mxu0 %v27
    %539 = vmatpush1.msra.mxu0 %v26
    %540 = vmatprep.subr.mxu0 0.0
    %541 = vmatpush1.msra.mxu0 0.0
    %542 = vmatprep.subr.mxu0 0.0
    %543 = vmatpush1.msra.mxu0 0.0
    %544 = vmatprep.subr.mxu0 0.0
    %545 = vmatpush1.msra.mxu0 0.0
    %546 = vmatprep.subr.mxu0 0.0
    %547 = vmatpush1.msra.mxu0 0.0
    %548 = vmatprep.subr.mxu0 0.0
    %549 = vmatpush1.msra.mxu0 0.0
    %550 = vmatprep.subr.mxu0 0.0
    %551 = vmatpush1.msra.mxu0 0.0
    %552 = vmatprep.subr.mxu0 0.0
    %553 = vmatpush1.msra.mxu0 0.0
    %554 = vmatprep.subr.mxu0 0.0
    %555 = vmatpush1.msra.mxu0 0.0
    %556 = vmatprep.subr.mxu0 0.0
    %557 = vmatpush1.msra.mxu0 0.0
    %558 = vmatprep.subr.mxu0 0.0
    %559 = vmatpush1.msra.mxu0 0.0
    %560 = vmatprep.subr.mxu0 0.0
    %561 = vmatpush1.msra.mxu0 0.0
    %562 = vmatprep.subr.mxu0 0.0
    %563 = vmatpush1.msra.mxu0 0.0
    %564 = vmatprep.subr.mxu0 0.0
    %565 = vmatpush1.msra.mxu0 0.0
    %566 = vmatprep.subr.mxu0 0.0
    %567 = vmatpush1.msra.mxu0 0.0
    %568 = vmatprep.subr.mxu0 0.0
    %569 = vmatpush1.msra.mxu0 0.0
    %570 = vmatprep.subr.mxu0 0.0
    %571 = vmatpush1.msra.mxu0 0.0
    %572 = vmatprep.subr.mxu0 0.0
    %573 = vmatpush1.msra.mxu0 0.0
    %574 = vmatprep.subr.mxu0 0.0
    %575 = vmatpush1.msra.mxu0 0.0
    %576 = vmatprep.subr.mxu0 0.0
    %577 = vmatpush1.msra.mxu0 0.0
    %578 = vmatprep.subr.mxu0 0.0
    %579 = vmatpush1.msra.mxu0 0.0
    %580 = vmatprep.subr.mxu0 0.0
    %581 = vmatpush1.msra.mxu0 0.0
    %582 = vmatprep.subr.mxu0 0.0
    %583 = vmatpush1.msra.mxu0 0.0
    %584 = vmatprep.subr.mxu0 0.0
    %585 = vmatpush1.msra.mxu0 0.0
    %586 = vmatprep.subr.mxu0 0.0
    %587 = vmatpush1.msra.mxu0 0.0
    %588 = vmatprep.subr.mxu0 0.0
    %589 = vmatpush1.msra.mxu0 0.0
    %590 = vmatprep.subr.mxu0 0.0
    %591 = vmatpush1.msra.mxu0 0.0
    %592 = vmatprep.subr.mxu0 0.0
    %593 = vmatpush1.msra.mxu0 0.0
    %594 = vmatprep.subr.mxu0 0.0
    %595 = vmatpush1.msra.mxu0 0.0
    %596 = vmatprep.subr.mxu0 0.0
    %597 = vmatpush1.msra.mxu0 0.0
    %598 = vmatprep.subr.mxu0 0.0
    %599 = vmatpush1.msra.mxu0 0.0
    %600 = vmatprep.subr.mxu0 0.0
    %601 = vmatpush1.msra.mxu0 0.0
    %602 = vmatprep.mubr.f32.mxu0 0.0
    %603 = vmatmul.mubr.f32.gmra.mrb[0].mxu0 %v82
    %v604 = vpop.f32.mrb[0].mxu0
    %v605 = vadd.f32 0.0, %v604
    %v606 = vpop.f32.mrb[0].mxu0
    %v607 = vadd.f32 0.0, %v606
    %608 = vmatprep.mubr.f32.mxu0 0.0
    %609 = vmatmul.mubr.f32.gmra.mrb[0].mxu0 %v85
    %v610 = vpop.f32.mrb[0].mxu0
    %v611 = vadd.f32 0.0, %v610
    %v612 = vpop.f32.mrb[0].mxu0
    %v613 = vadd.f32 0.0, %v612
    %614 = vmatprep.mubr.f32.mxu0 0.0
    %615 = vmatmul.mubr.f32.gmra.mrb[0].mxu0 %v88
    %v616 = vpop.f32.mrb[0].mxu0
    %v617 = vadd.f32 0.0, %v616
    %v618 = vpop.f32.mrb[0].mxu0
    %v619 = vadd.f32 0.0, %v618
    %620 = vmatprep.mubr.f32.mxu0 0.0
    %621 = vmatmul.mubr.f32.gmra.mrb[0].mxu0 %v91
    %v622 = vpop.f32.mrb[0].mxu0
    %v623 = vadd.f32 0.0, %v622
    %v624 = vpop.f32.mrb[0].mxu0
    %v625 = vadd.f32 0.0, %v624
    %626 = vdwg.mxu0
    %627 = vmatprep.subr.mxu0 %v29
    %628 = vmatpush1.msra.mxu0 %v28
    %629 = vmatprep.subr.mxu0 0.0
    %630 = vmatpush1.msra.mxu0 0.0
    %631 = vmatprep.subr.mxu0 0.0
    %632 = vmatpush1.msra.mxu0 0.0
    %633 = vmatprep.subr.mxu0 0.0
    %634 = vmatpush1.msra.mxu0 0.0
    %635 = vmatprep.subr.mxu0 0.0
    %636 = vmatpush1.msra.mxu0 0.0
    %637 = vmatprep.subr.mxu0 0.0
    %638 = vmatpush1.msra.mxu0 0.0
    %639 = vmatprep.subr.mxu0 0.0
    %640 = vmatpush1.msra.mxu0 0.0
    %641 = vmatprep.subr.mxu0 0.0
    %642 = vmatpush1.msra.mxu0 0.0
    %643 = vmatprep.subr.mxu0 0.0
    %644 = vmatpush1.msra.mxu0 0.0
    %645 = vmatprep.subr.mxu0 0.0
    %646 = vmatpush1.msra.mxu0 0.0
    %647 = vmatprep.subr.mxu0 0.0
    %648 = vmatpush1.msra.mxu0 0.0
    %649 = vmatprep.subr.mxu0 0.0
    %650 = vmatpush1.msra.mxu0 0.0
    %651 = vmatprep.subr.mxu0 0.0
    %652 = vmatpush1.msra.mxu0 0.0
    %653 = vmatprep.subr.mxu0 0.0
    %654 = vmatpush1.msra.mxu0 0.0
    %655 = vmatprep.subr.mxu0 0.0
    %656 = vmatpush1.msra.mxu0 0.0
    %657 = vmatprep.subr.mxu0 0.0
    %658 = vmatpush1.msra.mxu0 0.0
    %659 = vmatprep.subr.mxu0 0.0
    %660 = vmatpush1.msra.mxu0 0.0
    %661 = vmatprep.subr.mxu0 0.0
    %662 = vmatpush1.msra.mxu0 0.0
    %663 = vmatprep.subr.mxu0 0.0
    %664 = vmatpush1.msra.mxu0 0.0
    %665 = vmatprep.subr.mxu0 0.0
    %666 = vmatpush1.msra.mxu0 0.0
    %667 = vmatprep.subr.mxu0 0.0
    %668 = vmatpush1.msra.mxu0 0.0
    %669 = vmatprep.subr.mxu0 0.0
    %670 = vmatpush1.msra.mxu0 0.0
    %671 = vmatprep.subr.mxu0 0.0
    %672 = vmatpush1.msra.mxu0 0.0
    %673 = vmatprep.subr.mxu0 0.0
    %674 = vmatpush1.msra.mxu0 0.0
    %675 = vmatprep.subr.mxu0 0.0
    %676 = vmatpush1.msra.mxu0 0.0
    %677 = vmatprep.subr.mxu0 0.0
    %678 = vmatpush1.msra.mxu0 0.0
    %679 = vmatprep.subr.mxu0 0.0
    %680 = vmatpush1.msra.mxu0 0.0
    %681 = vmatprep.subr.mxu0 0.0
    %682 = vmatpush1.msra.mxu0 0.0
    %683 = vmatprep.subr.mxu0 0.0
    %684 = vmatpush1.msra.mxu0 0.0
    %685 = vmatprep.subr.mxu0 0.0
    %686 = vmatpush1.msra.mxu0 0.0
    %687 = vmatprep.subr.mxu0 0.0
    %688 = vmatpush1.msra.mxu0 0.0
    %689 = vmatprep.subr.mxu0 0.0
    %690 = vmatpush1.msra.mxu0 0.0
    %691 = vmatprep.mubr.f32.mxu0 0.0
    %692 = vmatmul.mubr.f32.gmra.mrb[0].mxu0 %v82
    %v693 = vpop.f32.mrb[0].mxu0
    %v694 = vadd.f32 0.0, %v693
    %v695 = vpop.f32.mrb[0].mxu0
    %v696 = vadd.f32 0.0, %v695
    %697 = vmatprep.mubr.f32.mxu0 0.0
    %698 = vmatmul.mubr.f32.gmra.mrb[0].mxu0 %v85
    %v699 = vpop.f32.mrb[0].mxu0
    %v700 = vadd.f32 0.0, %v699
    %v701 = vpop.f32.mrb[0].mxu0
    %v702 = vadd.f32 0.0, %v701
    %703 = vmatprep.mubr.f32.mxu0 0.0
    %704 = vmatmul.mubr.f32.gmra.mrb[0].mxu0 %v88
    %v705 = vpop.f32.mrb[0].mxu0
    %v706 = vadd.f32 0.0, %v705
    %v707 = vpop.f32.mrb[0].mxu0
    %v708 = vadd.f32 0.0, %v707
    %709 = vmatprep.mubr.f32.mxu0 0.0
    %710 = vmatmul.mubr.f32.gmra.mrb[0].mxu0 %v91
    %v711 = vpop.f32.mrb[0].mxu0
    %v712 = vadd.f32 0.0, %v711
    %v713 = vpop.f32.mrb[0].mxu0
    %v714 = vadd.f32 0.0, %v713
    %715 = vdwg.mxu0
    %716 = vmatprep.subr.mxu0 %v31
    %717 = vmatpush1.msra.mxu0 %v30
    %718 = vmatprep.subr.mxu0 0.0
    %719 = vmatpush1.msra.mxu0 0.0
    %720 = vmatprep.subr.mxu0 0.0
    %721 = vmatpush1.msra.mxu0 0.0
    %722 = vmatprep.subr.mxu0 0.0
    %723 = vmatpush1.msra.mxu0 0.0
    %724 = vmatprep.subr.mxu0 0.0
    %725 = vmatpush1.msra.mxu0 0.0
    %726 = vmatprep.subr.mxu0 0.0
    %727 = vmatpush1.msra.mxu0 0.0
    %728 = vmatprep.subr.mxu0 0.0
    %729 = vmatpush1.msra.mxu0 0.0
    %730 = vmatprep.subr.mxu0 0.0
    %731 = vmatpush1.msra.mxu0 0.0
    %732 = vmatprep.subr.mxu0 0.0
    %733 = vmatpush1.msra.mxu0 0.0
    %734 = vmatprep.subr.mxu0 0.0
    %735 = vmatpush1.msra.mxu0 0.0
    %736 = vmatprep.subr.mxu0 0.0
    %737 = vmatpush1.msra.mxu0 0.0
    %738 = vmatprep.subr.mxu0 0.0
    %739 = vmatpush1.msra.mxu0 0.0
    %740 = vmatprep.subr.mxu0 0.0
    %741 = vmatpush1.msra.mxu0 0.0
    %742 = vmatprep.subr.mxu0 0.0
    %743 = vmatpush1.msra.mxu0 0.0
    %744 = vmatprep.subr.mxu0 0.0
    %745 = vmatpush1.msra.mxu0 0.0
    %746 = vmatprep.subr.mxu0 0.0
    %747 = vmatpush1.msra.mxu0 0.0
    %748 = vmatprep.subr.mxu0 0.0
    %749 = vmatpush1.msra.mxu0 0.0
    %750 = vmatprep.subr.mxu0 0.0
    %751 = vmatpush1.msra.mxu0 0.0
    %752 = vmatprep.subr.mxu0 0.0
    %753 = vmatpush1.msra.mxu0 0.0
    %754 = vmatprep.subr.mxu0 0.0
    %755 = vmatpush1.msra.mxu0 0.0
    %756 = vmatprep.subr.mxu0 0.0
    %757 = vmatpush1.msra.mxu0 0.0
    %758 = vmatprep.subr.mxu0 0.0
    %759 = vmatpush1.msra.mxu0 0.0
    %760 = vmatprep.subr.mxu0 0.0
    %761 = vmatpush1.msra.mxu0 0.0
    %762 = vmatprep.subr.mxu0 0.0
    %763 = vmatpush1.msra.mxu0 0.0
    %764 = vmatprep.subr.mxu0 0.0
    %765 = vmatpush1.msra.mxu0 0.0
    %766 = vmatprep.subr.mxu0 0.0
    %767 = vmatpush1.msra.mxu0 0.0
    %768 = vmatprep.subr.mxu0 0.0
    %769 = vmatpush1.msra.mxu0 0.0
    %770 = vmatprep.subr.mxu0 0.0
    %771 = vmatpush1.msra.mxu0 0.0
    %772 = vmatprep.subr.mxu0 0.0
    %773 = vmatpush1.msra.mxu0 0.0
    %774 = vmatprep.subr.mxu0 0.0
    %775 = vmatpush1.msra.mxu0 0.0
    %776 = vmatprep.subr.mxu0 0.0
    %777 = vmatpush1.msra.mxu0 0.0
    %778 = vmatprep.subr.mxu0 0.0
    %779 = vmatpush1.msra.mxu0 0.0
    %780 = vmatprep.mubr.f32.mxu0 0.0
    %781 = vmatmul.mubr.f32.gmra.mrb[0].mxu0 %v82
    %v782 = vpop.f32.mrb[0].mxu0
    %v783 = vadd.f32 0.0, %v782
    %v784 = vpop.f32.mrb[0].mxu0
    %v785 = vadd.f32 0.0, %v784
    %786 = vmatprep.mubr.f32.mxu0 0.0
    %787 = vmatmul.mubr.f32.gmra.mrb[0].mxu0 %v85
    %v788 = vpop.f32.mrb[0].mxu0
    %v789 = vadd.f32 0.0, %v788
    %v790 = vpop.f32.mrb[0].mxu0
    %v791 = vadd.f32 0.0, %v790
    %792 = vmatprep.mubr.f32.mxu0 0.0
    %793 = vmatmul.mubr.f32.gmra.mrb[0].mxu0 %v88
    %v794 = vpop.f32.mrb[0].mxu0
    %v795 = vadd.f32 0.0, %v794
    %v796 = vpop.f32.mrb[0].mxu0
    %v797 = vadd.f32 0.0, %v796
    %798 = vmatprep.mubr.f32.mxu0 0.0
    %799 = vmatmul.mubr.f32.gmra.mrb[0].mxu0 %v91
    %v800 = vpop.f32.mrb[0].mxu0
    %v801 = vadd.f32 0.0, %v800
    %v802 = vpop.f32.mrb[0].mxu0
    %v803 = vadd.f32 0.0, %v802
    %804 = vdwg.mxu0
    %805 = vmatprep.subr.mxu0 %v33
    %806 = vmatpush1.msra.mxu0 %v32
    %807 = vmatprep.subr.mxu0 0.0
    %808 = vmatpush1.msra.mxu0 0.0
    %809 = vmatprep.subr.mxu0 0.0
    %810 = vmatpush1.msra.mxu0 0.0
    %811 = vmatprep.subr.mxu0 0.0
    %812 = vmatpush1.msra.mxu0 0.0
    %813 = vmatprep.subr.mxu0 0.0
    %814 = vmatpush1.msra.mxu0 0.0
    %815 = vmatprep.subr.mxu0 0.0
    %816 = vmatpush1.msra.mxu0 0.0
    %817 = vmatprep.subr.mxu0 0.0
    %818 = vmatpush1.msra.mxu0 0.0
    %819 = vmatprep.subr.mxu0 0.0
    %820 = vmatpush1.msra.mxu0 0.0
    %821 = vmatprep.subr.mxu0 0.0
    %822 = vmatpush1.msra.mxu0 0.0
    %823 = vmatprep.subr.mxu0 0.0
    %824 = vmatpush1.msra.mxu0 0.0
    %825 = vmatprep.subr.mxu0 0.0
    %826 = vmatpush1.msra.mxu0 0.0
    %827 = vmatprep.subr.mxu0 0.0
    %828 = vmatpush1.msra.mxu0 0.0
    %829 = vmatprep.subr.mxu0 0.0
    %830 = vmatpush1.msra.mxu0 0.0
    %831 = vmatprep.subr.mxu0 0.0
    %832 = vmatpush1.msra.mxu0 0.0
    %833 = vmatprep.subr.mxu0 0.0
    %834 = vmatpush1.msra.mxu0 0.0
    %835 = vmatprep.subr.mxu0 0.0
    %836 = vmatpush1.msra.mxu0 0.0
    %837 = vmatprep.subr.mxu0 0.0
    %838 = vmatpush1.msra.mxu0 0.0
    %839 = vmatprep.subr.mxu0 0.0
    %840 = vmatpush1.msra.mxu0 0.0
    %841 = vmatprep.subr.mxu0 0.0
    %842 = vmatpush1.msra.mxu0 0.0
    %843 = vmatprep.subr.mxu0 0.0
    %844 = vmatpush1.msra.mxu0 0.0
    %845 = vmatprep.subr.mxu0 0.0
    %846 = vmatpush1.msra.mxu0 0.0
    %847 = vmatprep.subr.mxu0 0.0
    %848 = vmatpush1.msra.mxu0 0.0
    %849 = vmatprep.subr.mxu0 0.0
    %850 = vmatpush1.msra.mxu0 0.0
    %851 = vmatprep.subr.mxu0 0.0
    %852 = vmatpush1.msra.mxu0 0.0
    %853 = vmatprep.subr.mxu0 0.0
    %854 = vmatpush1.msra.mxu0 0.0
    %855 = vmatprep.subr.mxu0 0.0
    %856 = vmatpush1.msra.mxu0 0.0
    %857 = vmatprep.subr.mxu0 0.0
    %858 = vmatpush1.msra.mxu0 0.0
    %859 = vmatprep.subr.mxu0 0.0
    %860 = vmatpush1.msra.mxu0 0.0
    %861 = vmatprep.subr.mxu0 0.0
    %862 = vmatpush1.msra.mxu0 0.0
    %863 = vmatprep.subr.mxu0 0.0
    %864 = vmatpush1.msra.mxu0 0.0
    %865 = vmatprep.subr.mxu0 0.0
    %866 = vmatpush1.msra.mxu0 0.0
    %867 = vmatprep.subr.mxu0 0.0
    %868 = vmatpush1.msra.mxu0 0.0
    %869 = vmatprep.mubr.f32.mxu0 0.0
    %870 = vmatmul.mubr.f32.gmra.mrb[0].mxu0 %v82
    %v871 = vpop.f32.mrb[0].mxu0
    %v872 = vadd.f32 0.0, %v871
    %v873 = vpop.f32.mrb[0].mxu0
    %v874 = vadd.f32 0.0, %v873
    %875 = vmatprep.mubr.f32.mxu0 0.0
    %876 = vmatmul.mubr.f32.gmra.mrb[0].mxu0 %v85
    %v877 = vpop.f32.mrb[0].mxu0
    %v878 = vadd.f32 0.0, %v877
    %v879 = vpop.f32.mrb[0].mxu0
    %v880 = vadd.f32 0.0, %v879
    %881 = vmatprep.mubr.f32.mxu0 0.0
    %882 = vmatmul.mubr.f32.gmra.mrb[0].mxu0 %v88
    %v883 = vpop.f32.mrb[0].mxu0
    %v884 = vadd.f32 0.0, %v883
    %v885 = vpop.f32.mrb[0].mxu0
    %v886 = vadd.f32 0.0, %v885
    %887 = vmatprep.mubr.f32.mxu0 0.0
    %888 = vmatmul.mubr.f32.gmra.mrb[0].mxu0 %v91
    %v889 = vpop.f32.mrb[0].mxu0
    %v890 = vadd.f32 0.0, %v889
    %v891 = vpop.f32.mrb[0].mxu0
    %v892 = vadd.f32 0.0, %v891
    %893 = vdwg.mxu0
    %894 = vmatprep.subr.mxu0 %v35
    %895 = vmatpush1.msra.mxu0 %v34
    %896 = vmatprep.subr.mxu0 0.0
    %897 = vmatpush1.msra.mxu0 0.0
    %898 = vmatprep.subr.mxu0 0.0
    %899 = vmatpush1.msra.mxu0 0.0
    %900 = vmatprep.subr.mxu0 0.0
    %901 = vmatpush1.msra.mxu0 0.0
    %902 = vmatprep.subr.mxu0 0.0
    %903 = vmatpush1.msra.mxu0 0.0
    %904 = vmatprep.subr.mxu0 0.0
    %905 = vmatpush1.msra.mxu0 0.0
    %906 = vmatprep.subr.mxu0 0.0
    %907 = vmatpush1.msra.mxu0 0.0
    %908 = vmatprep.subr.mxu0 0.0
    %909 = vmatpush1.msra.mxu0 0.0
    %910 = vmatprep.subr.mxu0 0.0
    %911 = vmatpush1.msra.mxu0 0.0
    %912 = vmatprep.subr.mxu0 0.0
    %913 = vmatpush1.msra.mxu0 0.0
    %914 = vmatprep.subr.mxu0 0.0
    %915 = vmatpush1.msra.mxu0 0.0
    %916 = vmatprep.subr.mxu0 0.0
    %917 = vmatpush1.msra.mxu0 0.0
    %918 = vmatprep.subr.mxu0 0.0
    %919 = vmatpush1.msra.mxu0 0.0
    %920 = vmatprep.subr.mxu0 0.0
    %921 = vmatpush1.msra.mxu0 0.0
    %922 = vmatprep.subr.mxu0 0.0
    %923 = vmatpush1.msra.mxu0 0.0
    %924 = vmatprep.subr.mxu0 0.0
    %925 = vmatpush1.msra.mxu0 0.0
    %926 = vmatprep.subr.mxu0 0.0
    %927 = vmatpush1.msra.mxu0 0.0
    %928 = vmatprep.subr.mxu0 0.0
    %929 = vmatpush1.msra.mxu0 0.0
    %930 = vmatprep.subr.mxu0 0.0
    %931 = vmatpush1.msra.mxu0 0.0
    %932 = vmatprep.subr.mxu0 0.0
    %933 = vmatpush1.msra.mxu0 0.0
    %934 = vmatprep.subr.mxu0 0.0
    %935 = vmatpush1.msra.mxu0 0.0
    %936 = vmatprep.subr.mxu0 0.0
    %937 = vmatpush1.msra.mxu0 0.0
    %938 = vmatprep.subr.mxu0 0.0
    %939 = vmatpush1.msra.mxu0 0.0
    %940 = vmatprep.subr.mxu0 0.0
    %941 = vmatpush1.msra.mxu0 0.0
    %942 = vmatprep.subr.mxu0 0.0
    %943 = vmatpush1.msra.mxu0 0.0
    %944 = vmatprep.subr.mxu0 0.0
    %945 = vmatpush1.msra.mxu0 0.0
    %946 = vmatprep.subr.mxu0 0.0
    %947 = vmatpush1.msra.mxu0 0.0
    %948 = vmatprep.subr.mxu0 0.0
    %949 = vmatpush1.msra.mxu0 0.0
    %950 = vmatprep.subr.mxu0 0.0
    %951 = vmatpush1.msra.mxu0 0.0
    %952 = vmatprep.subr.mxu0 0.0
    %953 = vmatpush1.msra.mxu0 0.0
    %954 = vmatprep.subr.mxu0 0.0
    %955 = vmatpush1.msra.mxu0 0.0
    %956 = vmatprep.subr.mxu0 0.0
    %957 = vmatpush1.msra.mxu0 0.0
    %958 = vmatprep.mubr.f32.mxu0 0.0
    %959 = vmatmul.mubr.f32.gmra.mrb[0].mxu0 %v82
    %v960 = vpop.f32.mrb[0].mxu0
    %v961 = vadd.f32 0.0, %v960
    %v962 = vpop.f32.mrb[0].mxu0
    %v963 = vadd.f32 0.0, %v962
    %964 = vmatprep.mubr.f32.mxu0 0.0
    %965 = vmatmul.mubr.f32.gmra.mrb[0].mxu0 %v85
    %v966 = vpop.f32.mrb[0].mxu0
    %v967 = vadd.f32 0.0, %v966
    %v968 = vpop.f32.mrb[0].mxu0
    %v969 = vadd.f32 0.0, %v968
    %970 = vmatprep.mubr.f32.mxu0 0.0
    %971 = vmatmul.mubr.f32.gmra.mrb[0].mxu0 %v88
    %v972 = vpop.f32.mrb[0].mxu0
    %v973 = vadd.f32 0.0, %v972
    %v974 = vpop.f32.mrb[0].mxu0
    %v975 = vadd.f32 0.0, %v974
    %976 = vmatprep.mubr.f32.mxu0 0.0
    %977 = vmatmul.mubr.f32.gmra.mrb[0].mxu0 %v91
    %v978 = vpop.f32.mrb[0].mxu0
    %v979 = vadd.f32 0.0, %v978
    %v980 = vpop.f32.mrb[0].mxu0
    %v981 = vadd.f32 0.0, %v980
    %982 = vdwg.mxu0
    %983 = vmatprep.subr.mxu0 %v37
    %984 = vmatpush1.msra.mxu0 %v36
    %985 = vmatprep.subr.mxu0 0.0
    %986 = vmatpush1.msra.mxu0 0.0
    %987 = vmatprep.subr.mxu0 0.0
    %988 = vmatpush1.msra.mxu0 0.0
    %989 = vmatprep.subr.mxu0 0.0
    %990 = vmatpush1.msra.mxu0 0.0
    %991 = vmatprep.subr.mxu0 0.0
    %992 = vmatpush1.msra.mxu0 0.0
    %993 = vmatprep.subr.mxu0 0.0
    %994 = vmatpush1.msra.mxu0 0.0
    %995 = vmatprep.subr.mxu0 0.0
    %996 = vmatpush1.msra.mxu0 0.0
    %997 = vmatprep.subr.mxu0 0.0
    %998 = vmatpush1.msra.mxu0 0.0
    %999 = vmatprep.subr.mxu0 0.0
    %1000 = vmatpush1.msra.mxu0 0.0
    %1001 = vmatprep.subr.mxu0 0.0
    %1002 = vmatpush1.msra.mxu0 0.0
    %1003 = vmatprep.subr.mxu0 0.0
    %1004 = vmatpush1.msra.mxu0 0.0
    %1005 = vmatprep.subr.mxu0 0.0
    %1006 = vmatpush1.msra.mxu0 0.0
    %1007 = vmatprep.subr.mxu0 0.0
    %1008 = vmatpush1.msra.mxu0 0.0
    %1009 = vmatprep.subr.mxu0 0.0
    %1010 = vmatpush1.msra.mxu0 0.0
    %1011 = vmatprep.subr.mxu0 0.0
    %1012 = vmatpush1.msra.mxu0 0.0
    %1013 = vmatprep.subr.mxu0 0.0
    %1014 = vmatpush1.msra.mxu0 0.0
    %1015 = vmatprep.subr.mxu0 0.0
    %1016 = vmatpush1.msra.mxu0 0.0
    %1017 = vmatprep.subr.mxu0 0.0
    %1018 = vmatpush1.msra.mxu0 0.0
    %1019 = vmatprep.subr.mxu0 0.0
    %1020 = vmatpush1.msra.mxu0 0.0
    %1021 = vmatprep.subr.mxu0 0.0
    %1022 = vmatpush1.msra.mxu0 0.0
    %1023 = vmatprep.subr.mxu0 0.0
    %1024 = vmatpush1.msra.mxu0 0.0
    %1025 = vmatprep.subr.mxu0 0.0
    %1026 = vmatpush1.msra.mxu0 0.0
    %1027 = vmatprep.subr.mxu0 0.0
    %1028 = vmatpush1.msra.mxu0 0.0
    %1029 = vmatprep.subr.mxu0 0.0
    %1030 = vmatpush1.msra.mxu0 0.0
    %1031 = vmatprep.subr.mxu0 0.0
    %1032 = vmatpush1.msra.mxu0 0.0
    %1033 = vmatprep.subr.mxu0 0.0
    %1034 = vmatpush1.msra.mxu0 0.0
    %1035 = vmatprep.subr.mxu0 0.0
    %1036 = vmatpush1.msra.mxu0 0.0
    %1037 = vmatprep.subr.mxu0 0.0
    %1038 = vmatpush1.msra.mxu0 0.0
    %1039 = vmatprep.subr.mxu0 0.0
    %1040 = vmatpush1.msra.mxu0 0.0
    %1041 = vmatprep.subr.mxu0 0.0
    %1042 = vmatpush1.msra.mxu0 0.0
    %1043 = vmatprep.subr.mxu0 0.0
    %1044 = vmatpush1.msra.mxu0 0.0
    %1045 = vmatprep.subr.mxu0 0.0
    %1046 = vmatpush1.msra.mxu0 0.0
    %1047 = vmatprep.mubr.f32.mxu0 0.0
    %1048 = vmatmul.mubr.f32.gmra.mrb[0].mxu0 %v82
    %v1049 = vpop.f32.mrb[0].mxu0
    %v1050 = vadd.f32 0.0, %v1049
    %v1051 = vpop.f32.mrb[0].mxu0
    %v1052 = vadd.f32 0.0, %v1051
    %1053 = vmatprep.mubr.f32.mxu0 0.0
    %1054 = vmatmul.mubr.f32.gmra.mrb[0].mxu0 %v85
    %v1055 = vpop.f32.mrb[0].mxu0
    %v1056 = vadd.f32 0.0, %v1055
    %v1057 = vpop.f32.mrb[0].mxu0
    %v1058 = vadd.f32 0.0, %v1057
    %1059 = vmatprep.mubr.f32.mxu0 0.0
    %1060 = vmatmul.mubr.f32.gmra.mrb[0].mxu0 %v88
    %v1061 = vpop.f32.mrb[0].mxu0
    %v1062 = vadd.f32 0.0, %v1061
    %v1063 = vpop.f32.mrb[0].mxu0
    %v1064 = vadd.f32 0.0, %v1063
    %1065 = vmatprep.mubr.f32.mxu0 0.0
    %1066 = vmatmul.mubr.f32.gmra.mrb[0].mxu0 %v91
    %v1067 = vpop.f32.mrb[0].mxu0
    %v1068 = vadd.f32 0.0, %v1067
    %v1069 = vpop.f32.mrb[0].mxu0
    %v1070 = vadd.f32 0.0, %v1069
    %1071 = vdwg.mxu0
    %1072 = vmatprep.subr.mxu0 %v39
    %1073 = vmatpush1.msra.mxu0 %v38
    %1074 = vmatprep.subr.mxu0 0.0
    %1075 = vmatpush1.msra.mxu0 0.0
    %1076 = vmatprep.subr.mxu0 0.0
    %1077 = vmatpush1.msra.mxu0 0.0
    %1078 = vmatprep.subr.mxu0 0.0
    %1079 = vmatpush1.msra.mxu0 0.0
    %1080 = vmatprep.subr.mxu0 0.0
    %1081 = vmatpush1.msra.mxu0 0.0
    %1082 = vmatprep.subr.mxu0 0.0
    %1083 = vmatpush1.msra.mxu0 0.0
    %1084 = vmatprep.subr.mxu0 0.0
    %1085 = vmatpush1.msra.mxu0 0.0
    %1086 = vmatprep.subr.mxu0 0.0
    %1087 = vmatpush1.msra.mxu0 0.0
    %1088 = vmatprep.subr.mxu0 0.0
    %1089 = vmatpush1.msra.mxu0 0.0
    %1090 = vmatprep.subr.mxu0 0.0
    %1091 = vmatpush1.msra.mxu0 0.0
    %1092 = vmatprep.subr.mxu0 0.0
    %1093 = vmatpush1.msra.mxu0 0.0
    %1094 = vmatprep.subr.mxu0 0.0
    %1095 = vmatpush1.msra.mxu0 0.0
    %1096 = vmatprep.subr.mxu0 0.0
    %1097 = vmatpush1.msra.mxu0 0.0
    %1098 = vmatprep.subr.mxu0 0.0
    %1099 = vmatpush1.msra.mxu0 0.0
    %1100 = vmatprep.subr.mxu0 0.0
    %1101 = vmatpush1.msra.mxu0 0.0
    %1102 = vmatprep.subr.mxu0 0.0
    %1103 = vmatpush1.msra.mxu0 0.0
    %1104 = vmatprep.subr.mxu0 0.0
    %1105 = vmatpush1.msra.mxu0 0.0
    %1106 = vmatprep.subr.mxu0 0.0
    %1107 = vmatpush1.msra.mxu0 0.0
    %1108 = vmatprep.subr.mxu0 0.0
    %1109 = vmatpush1.msra.mxu0 0.0
    %1110 = vmatprep.subr.mxu0 0.0
    %1111 = vmatpush1.msra.mxu0 0.0
    %1112 = vmatprep.subr.mxu0 0.0
    %1113 = vmatpush1.msra.mxu0 0.0
    %1114 = vmatprep.subr.mxu0 0.0
    %1115 = vmatpush1.msra.mxu0 0.0
    %1116 = vmatprep.subr.mxu0 0.0
    %1117 = vmatpush1.msra.mxu0 0.0
    %1118 = vmatprep.subr.mxu0 0.0
    %1119 = vmatpush1.msra.mxu0 0.0
    %1120 = vmatprep.subr.mxu0 0.0
    %1121 = vmatpush1.msra.mxu0 0.0
    %1122 = vmatprep.subr.mxu0 0.0
    %1123 = vmatpush1.msra.mxu0 0.0
    %1124 = vmatprep.subr.mxu0 0.0
    %1125 = vmatpush1.msra.mxu0 0.0
    %1126 = vmatprep.subr.mxu0 0.0
    %1127 = vmatpush1.msra.mxu0 0.0
    %1128 = vmatprep.subr.mxu0 0.0
    %1129 = vmatpush1.msra.mxu0 0.0
    %1130 = vmatprep.subr.mxu0 0.0
    %1131 = vmatpush1.msra.mxu0 0.0
    %1132 = vmatprep.subr.mxu0 0.0
    %1133 = vmatpush1.msra.mxu0 0.0
    %1134 = vmatprep.subr.mxu0 0.0
    %1135 = vmatpush1.msra.mxu0 0.0
    %1136 = vmatprep.mubr.f32.mxu0 0.0
    %1137 = vmatmul.mubr.f32.gmra.mrb[0].mxu0 %v82
    %v1138 = vpop.f32.mrb[0].mxu0
    %v1139 = vadd.f32 0.0, %v1138
    %v1140 = vpop.f32.mrb[0].mxu0
    %v1141 = vadd.f32 0.0, %v1140
    %1142 = vmatprep.mubr.f32.mxu0 0.0
    %1143 = vmatmul.mubr.f32.gmra.mrb[0].mxu0 %v85
    %v1144 = vpop.f32.mrb[0].mxu0
    %v1145 = vadd.f32 0.0, %v1144
    %v1146 = vpop.f32.mrb[0].mxu0
    %v1147 = vadd.f32 0.0, %v1146
    %1148 = vmatprep.mubr.f32.mxu0 0.0
    %1149 = vmatmul.mubr.f32.gmra.mrb[0].mxu0 %v88
    %v1150 = vpop.f32.mrb[0].mxu0
    %v1151 = vadd.f32 0.0, %v1150
    %v1152 = vpop.f32.mrb[0].mxu0
    %v1153 = vadd.f32 0.0, %v1152
    %1154 = vmatprep.mubr.f32.mxu0 0.0
    %1155 = vmatmul.mubr.f32.gmra.mrb[0].mxu0 %v91
    %v1156 = vpop.f32.mrb[0].mxu0
    %v1157 = vadd.f32 0.0, %v1156
    %v1158 = vpop.f32.mrb[0].mxu0
    %v1159 = vadd.f32 0.0, %v1158
    %1160 = vdwg.mxu0
    %1161 = vmatprep.subr.mxu0 %v41
    %1162 = vmatpush1.msra.mxu0 %v40
    %1163 = vmatprep.subr.mxu0 0.0
    %1164 = vmatpush1.msra.mxu0 0.0
    %1165 = vmatprep.subr.mxu0 0.0
    %1166 = vmatpush1.msra.mxu0 0.0
    %1167 = vmatprep.subr.mxu0 0.0
    %1168 = vmatpush1.msra.mxu0 0.0
    %1169 = vmatprep.subr.mxu0 0.0
    %1170 = vmatpush1.msra.mxu0 0.0
    %1171 = vmatprep.subr.mxu0 0.0
    %1172 = vmatpush1.msra.mxu0 0.0
    %1173 = vmatprep.subr.mxu0 0.0
    %1174 = vmatpush1.msra.mxu0 0.0
    %1175 = vmatprep.subr.mxu0 0.0
    %1176 = vmatpush1.msra.mxu0 0.0
    %1177 = vmatprep.subr.mxu0 0.0
    %1178 = vmatpush1.msra.mxu0 0.0
    %1179 = vmatprep.subr.mxu0 0.0
    %1180 = vmatpush1.msra.mxu0 0.0
    %1181 = vmatprep.subr.mxu0 0.0
    %1182 = vmatpush1.msra.mxu0 0.0
    %1183 = vmatprep.subr.mxu0 0.0
    %1184 = vmatpush1.msra.mxu0 0.0
    %1185 = vmatprep.subr.mxu0 0.0
    %1186 = vmatpush1.msra.mxu0 0.0
    %1187 = vmatprep.subr.mxu0 0.0
    %1188 = vmatpush1.msra.mxu0 0.0
    %1189 = vmatprep.subr.mxu0 0.0
    %1190 = vmatpush1.msra.mxu0 0.0
    %1191 = vmatprep.subr.mxu0 0.0
    %1192 = vmatpush1.msra.mxu0 0.0
    %1193 = vmatprep.subr.mxu0 0.0
    %1194 = vmatpush1.msra.mxu0 0.0
    %1195 = vmatprep.subr.mxu0 0.0
    %1196 = vmatpush1.msra.mxu0 0.0
    %1197 = vmatprep.subr.mxu0 0.0
    %1198 = vmatpush1.msra.mxu0 0.0
    %1199 = vmatprep.subr.mxu0 0.0
    %1200 = vmatpush1.msra.mxu0 0.0
    %1201 = vmatprep.subr.mxu0 0.0
    %1202 = vmatpush1.msra.mxu0 0.0
    %1203 = vmatprep.subr.mxu0 0.0
    %1204 = vmatpush1.msra.mxu0 0.0
    %1205 = vmatprep.subr.mxu0 0.0
    %1206 = vmatpush1.msra.mxu0 0.0
    %1207 = vmatprep.subr.mxu0 0.0
    %1208 = vmatpush1.msra.mxu0 0.0
    %1209 = vmatprep.subr.mxu0 0.0
    %1210 = vmatpush1.msra.mxu0 0.0
    %1211 = vmatprep.subr.mxu0 0.0
    %1212 = vmatpush1.msra.mxu0 0.0
    %1213 = vmatprep.subr.mxu0 0.0
    %1214 = vmatpush1.msra.mxu0 0.0
    %1215 = vmatprep.subr.mxu0 0.0
    %1216 = vmatpush1.msra.mxu0 0.0
    %1217 = vmatprep.subr.mxu0 0.0
    %1218 = vmatpush1.msra.mxu0 0.0
    %1219 = vmatprep.subr.mxu0 0.0
    %1220 = vmatpush1.msra.mxu0 0.0
    %1221 = vmatprep.subr.mxu0 0.0
    %1222 = vmatpush1.msra.mxu0 0.0
    %1223 = vmatprep.subr.mxu0 0.0
    %1224 = vmatpush1.msra.mxu0 0.0
    %1225 = vmatprep.mubr.f32.mxu0 0.0
    %1226 = vmatmul.mubr.f32.gmra.mrb[0].mxu0 %v82
    %v1227 = vpop.f32.mrb[0].mxu0
    %v1228 = vadd.f32 0.0, %v1227
    %v1229 = vpop.f32.mrb[0].mxu0
    %v1230 = vadd.f32 0.0, %v1229
    %1231 = vmatprep.mubr.f32.mxu0 0.0
    %1232 = vmatmul.mubr.f32.gmra.mrb[0].mxu0 %v85
    %v1233 = vpop.f32.mrb[0].mxu0
    %v1234 = vadd.f32 0.0, %v1233
    %v1235 = vpop.f32.mrb[0].mxu0
    %v1236 = vadd.f32 0.0, %v1235
    %1237 = vmatprep.mubr.f32.mxu0 0.0
    %1238 = vmatmul.mubr.f32.gmra.mrb[0].mxu0 %v88
    %v1239 = vpop.f32.mrb[0].mxu0
    %v1240 = vadd.f32 0.0, %v1239
    %v1241 = vpop.f32.mrb[0].mxu0
    %v1242 = vadd.f32 0.0, %v1241
    %1243 = vmatprep.mubr.f32.mxu0 0.0
    %1244 = vmatmul.mubr.f32.gmra.mrb[0].mxu0 %v91
    %v1245 = vpop.f32.mrb[0].mxu0
    %v1246 = vadd.f32 0.0, %v1245
    %v1247 = vpop.f32.mrb[0].mxu0
    %v1248 = vadd.f32 0.0, %v1247
    %1249 = vdwg.mxu0
    %1250 = vmatprep.subr.mxu0 %v43
    %1251 = vmatpush1.msra.mxu0 %v42
    %1252 = vmatprep.subr.mxu0 0.0
    %1253 = vmatpush1.msra.mxu0 0.0
    %1254 = vmatprep.subr.mxu0 0.0
    %1255 = vmatpush1.msra.mxu0 0.0
    %1256 = vmatprep.subr.mxu0 0.0
    %1257 = vmatpush1.msra.mxu0 0.0
    %1258 = vmatprep.subr.mxu0 0.0
    %1259 = vmatpush1.msra.mxu0 0.0
    %1260 = vmatprep.subr.mxu0 0.0
    %1261 = vmatpush1.msra.mxu0 0.0
    %1262 = vmatprep.subr.mxu0 0.0
    %1263 = vmatpush1.msra.mxu0 0.0
    %1264 = vmatprep.subr.mxu0 0.0
    %1265 = vmatpush1.msra.mxu0 0.0
    %1266 = vmatprep.subr.mxu0 0.0
    %1267 = vmatpush1.msra.mxu0 0.0
    %1268 = vmatprep.subr.mxu0 0.0
    %1269 = vmatpush1.msra.mxu0 0.0
    %1270 = vmatprep.subr.mxu0 0.0
    %1271 = vmatpush1.msra.mxu0 0.0
    %1272 = vmatprep.subr.mxu0 0.0
    %1273 = vmatpush1.msra.mxu0 0.0
    %1274 = vmatprep.subr.mxu0 0.0
    %1275 = vmatpush1.msra.mxu0 0.0
    %1276 = vmatprep.subr.mxu0 0.0
    %1277 = vmatpush1.msra.mxu0 0.0
    %1278 = vmatprep.subr.mxu0 0.0
    %1279 = vmatpush1.msra.mxu0 0.0
    %1280 = vmatprep.subr.mxu0 0.0
    %1281 = vmatpush1.msra.mxu0 0.0
    %1282 = vmatprep.subr.mxu0 0.0
    %1283 = vmatpush1.msra.mxu0 0.0
    %1284 = vmatprep.subr.mxu0 0.0
    %1285 = vmatpush1.msra.mxu0 0.0
    %1286 = vmatprep.subr.mxu0 0.0
    %1287 = vmatpush1.msra.mxu0 0.0
    %1288 = vmatprep.subr.mxu0 0.0
    %1289 = vmatpush1.msra.mxu0 0.0
    %1290 = vmatprep.subr.mxu0 0.0
    %1291 = vmatpush1.msra.mxu0 0.0
    %1292 = vmatprep.subr.mxu0 0.0
    %1293 = vmatpush1.msra.mxu0 0.0
    %1294 = vmatprep.subr.mxu0 0.0
    %1295 = vmatpush1.msra.mxu0 0.0
    %1296 = vmatprep.subr.mxu0 0.0
    %1297 = vmatpush1.msra.mxu0 0.0
    %1298 = vmatprep.subr.mxu0 0.0
    %1299 = vmatpush1.msra.mxu0 0.0
    %1300 = vmatprep.subr.mxu0 0.0
    %1301 = vmatpush1.msra.mxu0 0.0
    %1302 = vmatprep.subr.mxu0 0.0
    %1303 = vmatpush1.msra.mxu0 0.0
    %1304 = vmatprep.subr.mxu0 0.0
    %1305 = vmatpush1.msra.mxu0 0.0
    %1306 = vmatprep.subr.mxu0 0.0
    %1307 = vmatpush1.msra.mxu0 0.0
    %1308 = vmatprep.subr.mxu0 0.0
    %1309 = vmatpush1.msra.mxu0 0.0
    %1310 = vmatprep.subr.mxu0 0.0
    %1311 = vmatpush1.msra.mxu0 0.0
    %1312 = vmatprep.subr.mxu0 0.0
    %1313 = vmatpush1.msra.mxu0 0.0
    %1314 = vmatprep.mubr.f32.mxu0 0.0
    %1315 = vmatmul.mubr.f32.gmra.mrb[0].mxu0 %v82
    %v1316 = vpop.f32.mrb[0].mxu0
    %v1317 = vadd.f32 0.0, %v1316
    %v1318 = vpop.f32.mrb[0].mxu0
    %v1319 = vadd.f32 0.0, %v1318
    %1320 = vmatprep.mubr.f32.mxu0 0.0
    %1321 = vmatmul.mubr.f32.gmra.mrb[0].mxu0 %v85
    %v1322 = vpop.f32.mrb[0].mxu0
    %v1323 = vadd.f32 0.0, %v1322
    %v1324 = vpop.f32.mrb[0].mxu0
    %v1325 = vadd.f32 0.0, %v1324
    %1326 = vmatprep.mubr.f32.mxu0 0.0
    %1327 = vmatmul.mubr.f32.gmra.mrb[0].mxu0 %v88
    %v1328 = vpop.f32.mrb[0].mxu0
    %v1329 = vadd.f32 0.0, %v1328
    %v1330 = vpop.f32.mrb[0].mxu0
    %v1331 = vadd.f32 0.0, %v1330
    %1332 = vmatprep.mubr.f32.mxu0 0.0
    %1333 = vmatmul.mubr.f32.gmra.mrb[0].mxu0 %v91
    %v1334 = vpop.f32.mrb[0].mxu0
    %v1335 = vadd.f32 0.0, %v1334
    %v1336 = vpop.f32.mrb[0].mxu0
    %v1337 = vadd.f32 0.0, %v1336
    %1338 = vdwg.mxu0
    %1339 = vmatprep.subr.mxu0 %v45
    %1340 = vmatpush1.msra.mxu0 %v44
    %1341 = vmatprep.subr.mxu0 0.0
    %1342 = vmatpush1.msra.mxu0 0.0
    %1343 = vmatprep.subr.mxu0 0.0
    %1344 = vmatpush1.msra.mxu0 0.0
    %1345 = vmatprep.subr.mxu0 0.0
    %1346 = vmatpush1.msra.mxu0 0.0
    %1347 = vmatprep.subr.mxu0 0.0
    %1348 = vmatpush1.msra.mxu0 0.0
    %1349 = vmatprep.subr.mxu0 0.0
    %1350 = vmatpush1.msra.mxu0 0.0
    %1351 = vmatprep.subr.mxu0 0.0
    %1352 = vmatpush1.msra.mxu0 0.0
    %1353 = vmatprep.subr.mxu0 0.0
    %1354 = vmatpush1.msra.mxu0 0.0
    %1355 = vmatprep.subr.mxu0 0.0
    %1356 = vmatpush1.msra.mxu0 0.0
    %1357 = vmatprep.subr.mxu0 0.0
    %1358 = vmatpush1.msra.mxu0 0.0
    %1359 = vmatprep.subr.mxu0 0.0
    %1360 = vmatpush1.msra.mxu0 0.0
    %1361 = vmatprep.subr.mxu0 0.0
    %1362 = vmatpush1.msra.mxu0 0.0
    %1363 = vmatprep.subr.mxu0 0.0
    %1364 = vmatpush1.msra.mxu0 0.0
    %1365 = vmatprep.subr.mxu0 0.0
    %1366 = vmatpush1.msra.mxu0 0.0
    %1367 = vmatprep.subr.mxu0 0.0
    %1368 = vmatpush1.msra.mxu0 0.0
    %1369 = vmatprep.subr.mxu0 0.0
    %1370 = vmatpush1.msra.mxu0 0.0
    %1371 = vmatprep.subr.mxu0 0.0
    %1372 = vmatpush1.msra.mxu0 0.0
    %1373 = vmatprep.subr.mxu0 0.0
    %1374 = vmatpush1.msra.mxu0 0.0
    %1375 = vmatprep.subr.mxu0 0.0
    %1376 = vmatpush1.msra.mxu0 0.0
    %1377 = vmatprep.subr.mxu0 0.0
    %1378 = vmatpush1.msra.mxu0 0.0
    %1379 = vmatprep.subr.mxu0 0.0
    %1380 = vmatpush1.msra.mxu0 0.0
    %1381 = vmatprep.subr.mxu0 0.0
    %1382 = vmatpush1.msra.mxu0 0.0
    %1383 = vmatprep.subr.mxu0 0.0
    %1384 = vmatpush1.msra.mxu0 0.0
    %1385 = vmatprep.subr.mxu0 0.0
    %1386 = vmatpush1.msra.mxu0 0.0
    %1387 = vmatprep.subr.mxu0 0.0
    %1388 = vmatpush1.msra.mxu0 0.0
    %1389 = vmatprep.subr.mxu0 0.0
    %1390 = vmatpush1.msra.mxu0 0.0
    %1391 = vmatprep.subr.mxu0 0.0
    %1392 = vmatpush1.msra.mxu0 0.0
    %1393 = vmatprep.subr.mxu0 0.0
    %1394 = vmatpush1.msra.mxu0 0.0
    %1395 = vmatprep.subr.mxu0 0.0
    %1396 = vmatpush1.msra.mxu0 0.0
    %1397 = vmatprep.subr.mxu0 0.0
    %1398 = vmatpush1.msra.mxu0 0.0
    %1399 = vmatprep.subr.mxu0 0.0
    %1400 = vmatpush1.msra.mxu0 0.0
    %1401 = vmatprep.subr.mxu0 0.0
    %1402 = vmatpush1.msra.mxu0 0.0
    %1403 = vmatprep.mubr.f32.mxu0 0.0
    %1404 = vmatmul.mubr.f32.gmra.mrb[0].mxu0 %v82
    %v1405 = vpop.f32.mrb[0].mxu0
    %v1406 = vadd.f32 0.0, %v1405
    %v1407 = vpop.f32.mrb[0].mxu0
    %v1408 = vadd.f32 0.0, %v1407
    %1409 = vmatprep.mubr.f32.mxu0 0.0
    %1410 = vmatmul.mubr.f32.gmra.mrb[0].mxu0 %v85
    %v1411 = vpop.f32.mrb[0].mxu0
    %v1412 = vadd.f32 0.0, %v1411
    %v1413 = vpop.f32.mrb[0].mxu0
    %v1414 = vadd.f32 0.0, %v1413
    %1415 = vmatprep.mubr.f32.mxu0 0.0
    %1416 = vmatmul.mubr.f32.gmra.mrb[0].mxu0 %v88
    %v1417 = vpop.f32.mrb[0].mxu0
    %v1418 = vadd.f32 0.0, %v1417
    %v1419 = vpop.f32.mrb[0].mxu0
    %v1420 = vadd.f32 0.0, %v1419
    %1421 = vmatprep.mubr.f32.mxu0 0.0
    %1422 = vmatmul.mubr.f32.gmra.mrb[0].mxu0 %v91
    %v1423 = vpop.f32.mrb[0].mxu0
    %v1424 = vadd.f32 0.0, %v1423
    %v1425 = vpop.f32.mrb[0].mxu0
    %v1426 = vadd.f32 0.0, %v1425
    %1427 = vdwg.mxu0
    %1428 = vmatprep.subr.mxu0 %v47
    %1429 = vmatpush1.msra.mxu0 %v46
    %1430 = vmatprep.subr.mxu0 0.0
    %1431 = vmatpush1.msra.mxu0 0.0
    %1432 = vmatprep.subr.mxu0 0.0
    %1433 = vmatpush1.msra.mxu0 0.0
    %1434 = vmatprep.subr.mxu0 0.0
    %1435 = vmatpush1.msra.mxu0 0.0
    %1436 = vmatprep.subr.mxu0 0.0
    %1437 = vmatpush1.msra.mxu0 0.0
    %1438 = vmatprep.subr.mxu0 0.0
    %1439 = vmatpush1.msra.mxu0 0.0
    %1440 = vmatprep.subr.mxu0 0.0
    %1441 = vmatpush1.msra.mxu0 0.0
    %1442 = vmatprep.subr.mxu0 0.0
    %1443 = vmatpush1.msra.mxu0 0.0
    %1444 = vmatprep.subr.mxu0 0.0
    %1445 = vmatpush1.msra.mxu0 0.0
    %1446 = vmatprep.subr.mxu0 0.0
    %1447 = vmatpush1.msra.mxu0 0.0
    %1448 = vmatprep.subr.mxu0 0.0
    %1449 = vmatpush1.msra.mxu0 0.0
    %1450 = vmatprep.subr.mxu0 0.0
    %1451 = vmatpush1.msra.mxu0 0.0
    %1452 = vmatprep.subr.mxu0 0.0
    %1453 = vmatpush1.msra.mxu0 0.0
    %1454 = vmatprep.subr.mxu0 0.0
    %1455 = vmatpush1.msra.mxu0 0.0
    %1456 = vmatprep.subr.mxu0 0.0
    %1457 = vmatpush1.msra.mxu0 0.0
    %1458 = vmatprep.subr.mxu0 0.0
    %1459 = vmatpush1.msra.mxu0 0.0
    %1460 = vmatprep.subr.mxu0 0.0
    %1461 = vmatpush1.msra.mxu0 0.0
    %1462 = vmatprep.subr.mxu0 0.0
    %1463 = vmatpush1.msra.mxu0 0.0
    %1464 = vmatprep.subr.mxu0 0.0
    %1465 = vmatpush1.msra.mxu0 0.0
    %1466 = vmatprep.subr.mxu0 0.0
    %1467 = vmatpush1.msra.mxu0 0.0
    %1468 = vmatprep.subr.mxu0 0.0
    %1469 = vmatpush1.msra.mxu0 0.0
    %1470 = vmatprep.subr.mxu0 0.0
    %1471 = vmatpush1.msra.mxu0 0.0
    %1472 = vmatprep.subr.mxu0 0.0
    %1473 = vmatpush1.msra.mxu0 0.0
    %1474 = vmatprep.subr.mxu0 0.0
    %1475 = vmatpush1.msra.mxu0 0.0
    %1476 = vmatprep.subr.mxu0 0.0
    %1477 = vmatpush1.msra.mxu0 0.0
    %1478 = vmatprep.subr.mxu0 0.0
    %1479 = vmatpush1.msra.mxu0 0.0
    %1480 = vmatprep.subr.mxu0 0.0
    %1481 = vmatpush1.msra.mxu0 0.0
    %1482 = vmatprep.subr.mxu0 0.0
    %1483 = vmatpush1.msra.mxu0 0.0
    %1484 = vmatprep.subr.mxu0 0.0
    %1485 = vmatpush1.msra.mxu0 0.0
    %1486 = vmatprep.subr.mxu0 0.0
    %1487 = vmatpush1.msra.mxu0 0.0
    %1488 = vmatprep.subr.mxu0 0.0
    %1489 = vmatpush1.msra.mxu0 0.0
    %1490 = vmatprep.subr.mxu0 0.0
    %1491 = vmatpush1.msra.mxu0 0.0
    %1492 = vmatprep.mubr.f32.mxu0 0.0
    %1493 = vmatmul.mubr.f32.gmra.mrb[0].mxu0 %v82
    %v1494 = vpop.f32.mrb[0].mxu0
    %v1495 = vadd.f32 0.0, %v1494
    %v1496 = vpop.f32.mrb[0].mxu0
    %v1497 = vadd.f32 0.0, %v1496
    %1498 = vmatprep.mubr.f32.mxu0 0.0
    %1499 = vmatmul.mubr.f32.gmra.mrb[0].mxu0 %v85
    %v1500 = vpop.f32.mrb[0].mxu0
    %v1501 = vadd.f32 0.0, %v1500
    %v1502 = vpop.f32.mrb[0].mxu0
    %v1503 = vadd.f32 0.0, %v1502
    %1504 = vmatprep.mubr.f32.mxu0 0.0
    %1505 = vmatmul.mubr.f32.gmra.mrb[0].mxu0 %v88
    %v1506 = vpop.f32.mrb[0].mxu0
    %v1507 = vadd.f32 0.0, %v1506
    %v1508 = vpop.f32.mrb[0].mxu0
    %v1509 = vadd.f32 0.0, %v1508
    %1510 = vmatprep.mubr.f32.mxu0 0.0
    %1511 = vmatmul.mubr.f32.gmra.mrb[0].mxu0 %v91
    %v1512 = vpop.f32.mrb[0].mxu0
    %v1513 = vadd.f32 0.0, %v1512
    %v1514 = vpop.f32.mrb[0].mxu0
    %v1515 = vadd.f32 0.0, %v1514
    %1516 = vdwg.mxu0
    %v1517 = vmax.f32 %v160, 0.0
    %v1518 = vmax.f32 %v162, 0.0
    %v1519 = vmax.f32 %v249, 0.0
    %v1520 = vmax.f32 %v251, 0.0
    %v1521 = vmax.f32 %v338, 0.0
    %v1522 = vmax.f32 %v340, 0.0
    %v1523 = vmax.f32 %v427, 0.0
    %v1524 = vmax.f32 %v429, 0.0
    %v1525 = vmax.f32 %v516, 0.0
    %v1526 = vmax.f32 %v518, 0.0
    %v1527 = vmax.f32 %v605, 0.0
    %v1528 = vmax.f32 %v607, 0.0
    %v1529 = vmax.f32 %v694, 0.0
    %v1530 = vmax.f32 %v696, 0.0
    %v1531 = vmax.f32 %v783, 0.0
    %v1532 = vmax.f32 %v785, 0.0
    %v1533 = vmax.f32 %v872, 0.0
    %v1534 = vmax.f32 %v874, 0.0
    %v1535 = vmax.f32 %v961, 0.0
    %v1536 = vmax.f32 %v963, 0.0
    %v1537 = vmax.f32 %v1050, 0.0
    %v1538 = vmax.f32 %v1052, 0.0
    %v1539 = vmax.f32 %v1139, 0.0
    %v1540 = vmax.f32 %v1141, 0.0
    %v1541 = vmax.f32 %v1228, 0.0
    %v1542 = vmax.f32 %v1230, 0.0
    %v1543 = vmax.f32 %v1317, 0.0
    %v1544 = vmax.f32 %v1319, 0.0
    %v1545 = vmax.f32 %v1406, 0.0
    %v1546 = vmax.f32 %v1408, 0.0
    %v1547 = vmax.f32 %v1495, 0.0
    %v1548 = vmax.f32 %v1497, 0.0
    %v1549 = vmax.f32 %v166, 0.0
    %v1550 = vmax.f32 %v168, 0.0
    %v1551 = vmax.f32 %v255, 0.0
    %v1552 = vmax.f32 %v257, 0.0
    %v1553 = vmax.f32 %v344, 0.0
    %v1554 = vmax.f32 %v346, 0.0
    %v1555 = vmax.f32 %v433, 0.0
    %v1556 = vmax.f32 %v435, 0.0
    %v1557 = vmax.f32 %v522, 0.0
    %v1558 = vmax.f32 %v524, 0.0
    %v1559 = vmax.f32 %v611, 0.0
    %v1560 = vmax.f32 %v613, 0.0
    %v1561 = vmax.f32 %v700, 0.0
    %v1562 = vmax.f32 %v702, 0.0
    %v1563 = vmax.f32 %v789, 0.0
    %v1564 = vmax.f32 %v791, 0.0
    %v1565 = vmax.f32 %v878, 0.0
    %v1566 = vmax.f32 %v880, 0.0
    %v1567 = vmax.f32 %v967, 0.0
    %v1568 = vmax.f32 %v969, 0.0
    %v1569 = vmax.f32 %v1056, 0.0
    %v1570 = vmax.f32 %v1058, 0.0
    %v1571 = vmax.f32 %v1145, 0.0
    %v1572 = vmax.f32 %v1147, 0.0
    %v1573 = vmax.f32 %v1234, 0.0
    %v1574 = vmax.f32 %v1236, 0.0
    %v1575 = vmax.f32 %v1323, 0.0
    %v1576 = vmax.f32 %v1325, 0.0
    %v1577 = vmax.f32 %v1412, 0.0
    %v1578 = vmax.f32 %v1414, 0.0
    %v1579 = vmax.f32 %v1501, 0.0
    %v1580 = vmax.f32 %v1503, 0.0
    %v1581 = vmax.f32 %v172, 0.0
    %v1582 = vmax.f32 %v174, 0.0
    %v1583 = vmax.f32 %v261, 0.0
    %v1584 = vmax.f32 %v263, 0.0
    %v1585 = vmax.f32 %v350, 0.0
    %v1586 = vmax.f32 %v352, 0.0
    %v1587 = vmax.f32 %v439, 0.0
    %v1588 = vmax.f32 %v441, 0.0
    %v1589 = vmax.f32 %v528, 0.0
    %v1590 = vmax.f32 %v530, 0.0
    %v1591 = vmax.f32 %v617, 0.0
    %v1592 = vmax.f32 %v619, 0.0
    %v1593 = vmax.f32 %v706, 0.0
    %v1594 = vmax.f32 %v708, 0.0
    %v1595 = vmax.f32 %v795, 0.0
    %v1596 = vmax.f32 %v797, 0.0
    %v1597 = vmax.f32 %v884, 0.0
    %v1598 = vmax.f32 %v886, 0.0
    %v1599 = vmax.f32 %v973, 0.0
    %v1600 = vmax.f32 %v975, 0.0
    %v1601 = vmax.f32 %v1062, 0.0
    %v1602 = vmax.f32 %v1064, 0.0
    %v1603 = vmax.f32 %v1151, 0.0
    %v1604 = vmax.f32 %v1153, 0.0
    %v1605 = vmax.f32 %v1240, 0.0
    %v1606 = vmax.f32 %v1242, 0.0
    %v1607 = vmax.f32 %v1329, 0.0
    %v1608 = vmax.f32 %v1331, 0.0
    %v1609 = vmax.f32 %v1418, 0.0
    %v1610 = vmax.f32 %v1420, 0.0
    %v1611 = vmax.f32 %v1507, 0.0
    %v1612 = vmax.f32 %v1509, 0.0
    %v1613 = vmax.f32 %v178, 0.0
    %v1614 = vmax.f32 %v180, 0.0
    %v1615 = vmax.f32 %v267, 0.0
    %v1616 = vmax.f32 %v269, 0.0
    %v1617 = vmax.f32 %v356, 0.0
    %v1618 = vmax.f32 %v358, 0.0
    %v1619 = vmax.f32 %v445, 0.0
    %v1620 = vmax.f32 %v447, 0.0
    %v1621 = vmax.f32 %v534, 0.0
    %v1622 = vmax.f32 %v536, 0.0
    %v1623 = vmax.f32 %v623, 0.0
    %v1624 = vmax.f32 %v625, 0.0
    %v1625 = vmax.f32 %v712, 0.0
    %v1626 = vmax.f32 %v714, 0.0
    %v1627 = vmax.f32 %v801, 0.0
    %v1628 = vmax.f32 %v803, 0.0
    %v1629 = vmax.f32 %v890, 0.0
    %v1630 = vmax.f32 %v892, 0.0
    %v1631 = vmax.f32 %v979, 0.0
    %v1632 = vmax.f32 %v981, 0.0
    %v1633 = vmax.f32 %v1068, 0.0
    %v1634 = vmax.f32 %v1070, 0.0
    %v1635 = vmax.f32 %v1157, 0.0
    %v1636 = vmax.f32 %v1159, 0.0
    %v1637 = vmax.f32 %v1246, 0.0
    %v1638 = vmax.f32 %v1248, 0.0
    %v1639 = vmax.f32 %v1335, 0.0
    %v1640 = vmax.f32 %v1337, 0.0
    %v1641 = vmax.f32 %v1424, 0.0
    %v1642 = vmax.f32 %v1426, 0.0
    %v1643 = vmax.f32 %v1513, 0.0
    %v1644 = vmax.f32 %v1515, 0.0
    %v1645 = vld [vmem:[%s1] sm:$0xff]
    %v1646 = vld [vmem:[%s1 + $0x8] sm:$0xff]
    %v1647 = vld [vmem:[%s1 + $0x10] sm:$0xff]
    %v1648 = vld [vmem:[%s1 + $0x18] sm:$0xff]
    %v1649 = vld [vmem:[%s1 + $0x20] sm:$0xff]
    %v1650 = vld [vmem:[%s1 + $0x28] sm:$0xff]
    %v1651 = vld [vmem:[%s1 + $0x30] sm:$0xff]
    %v1652 = vld [vmem:[%s1 + $0x38] sm:$0xff]
    %v1653 = vld [vmem:[%s1 + $0x40] sm:$0xff]
    %v1654 = vld [vmem:[%s1 + $0x48] sm:$0xff]
    %v1655 = vld [vmem:[%s1 + $0x50] sm:$0xff]
    %v1656 = vld [vmem:[%s1 + $0x58] sm:$0xff]
    %v1657 = vld [vmem:[%s1 + $0x60] sm:$0xff]
    %v1658 = vld [vmem:[%s1 + $0x68] sm:$0xff]
    %v1659 = vld [vmem:[%s1 + $0x70] sm:$0xff]
    %v1660 = vld [vmem:[%s1 + $0x78] sm:$0xff]
    %v1661 = vld [vmem:[%s1 + $0x80] sm:$0xff]
    %v1662 = vld [vmem:[%s1 + $0x88] sm:$0xff]
    %v1663 = vld [vmem:[%s1 + $0x90] sm:$0xff]
    %v1664 = vld [vmem:[%s1 + $0x98] sm:$0xff]
    %v1665 = vld [vmem:[%s1 + $0xa0] sm:$0xff]
    %v1666 = vld [vmem:[%s1 + $0xa8] sm:$0xff]
    %v1667 = vld [vmem:[%s1 + $0xb0] sm:$0xff]
    %v1668 = vld [vmem:[%s1 + $0xb8] sm:$0xff]
    %v1669 = vld [vmem:[%s1 + $0xc0] sm:$0xff]
    %v1670 = vld [vmem:[%s1 + $0xc8] sm:$0xff]
    %v1671 = vld [vmem:[%s1 + $0xd0] sm:$0xff]
    %v1672 = vld [vmem:[%s1 + $0xd8] sm:$0xff]
    %v1673 = vld [vmem:[%s1 + $0xe0] sm:$0xff]
    %v1674 = vld [vmem:[%s1 + $0xe8] sm:$0xff]
    %v1675 = vld [vmem:[%s1 + $0xf0] sm:$0xff]
    %v1676 = vld [vmem:[%s1 + $0xf8] sm:$0xff]
    %v1677 = vld [vmem:[%s1 + $0x100] sm:$0xff]
    %v1678 = vld [vmem:[%s1 + $0x108] sm:$0xff]
    %v1679 = vld [vmem:[%s1 + $0x110] sm:$0xff]
    %v1680 = vld [vmem:[%s1 + $0x118] sm:$0xff]
    %v1681 = vld [vmem:[%s1 + $0x120] sm:$0xff]
    %v1682 = vld [vmem:[%s1 + $0x128] sm:$0xff]
    %v1683 = vld [vmem:[%s1 + $0x130] sm:$0xff]
    %v1684 = vld [vmem:[%s1 + $0x138] sm:$0xff]
    %v1685 = vld [vmem:[%s1 + $0x140] sm:$0xff]
    %v1686 = vld [vmem:[%s1 + $0x148] sm:$0xff]
    %v1687 = vld [vmem:[%s1 + $0x150] sm:$0xff]
    %v1688 = vld [vmem:[%s1 + $0x158] sm:$0xff]
    %v1689 = vld [vmem:[%s1 + $0x160] sm:$0xff]
    %v1690 = vld [vmem:[%s1 + $0x168] sm:$0xff]
    %v1691 = vld [vmem:[%s1 + $0x170] sm:$0xff]
    %v1692 = vld [vmem:[%s1 + $0x178] sm:$0xff]
    %v1693 = vld [vmem:[%s1 + $0x180] sm:$0xff]
    %v1694 = vld [vmem:[%s1 + $0x188] sm:$0xff]
    %v1695 = vld [vmem:[%s1 + $0x190] sm:$0xff]
    %v1696 = vld [vmem:[%s1 + $0x198] sm:$0xff]
    %v1697 = vld [vmem:[%s1 + $0x1a0] sm:$0xff]
    %v1698 = vld [vmem:[%s1 + $0x1a8] sm:$0xff]
    %v1699 = vld [vmem:[%s1 + $0x1b0] sm:$0xff]
    %v1700 = vld [vmem:[%s1 + $0x1b8] sm:$0xff]
    %v1701 = vld [vmem:[%s1 + $0x1c0] sm:$0xff]
    %v1702 = vld [vmem:[%s1 + $0x1c8] sm:$0xff]
    %v1703 = vld [vmem:[%s1 + $0x1d0] sm:$0xff]
    %v1704 = vld [vmem:[%s1 + $0x1d8] sm:$0xff]
    %v1705 = vld [vmem:[%s1 + $0x1e0] sm:$0xff]
    %v1706 = vld [vmem:[%s1 + $0x1e8] sm:$0xff]
    %v1707 = vld [vmem:[%s1 + $0x1f0] sm:$0xff]
    %v1708 = vld [vmem:[%s1 + $0x1f8] sm:$0xff]
    %1709 = vmatprep.subr.mxu0 %v1646
    %1710 = vmatpush1.xpose.msra.mxu0 %v1645
    %1711 = vmatprep.subr.mxu0 %v1678
    %1712 = vmatpush1.xpose.msra.mxu0 %v1677
    %1713 = vmatprep.subr.mxu0 0.0
    %1714 = vmatpush1.xpose.msra.mxu0 0.0
    %1715 = vmatprep.subr.mxu0 0.0
    %1716 = vmatpush1.xpose.msra.mxu0 0.0
    %1717 = vmatprep.subr.mxu0 0.0
    %1718 = vmatpush1.xpose.msra.mxu0 0.0
    %1719 = vmatprep.subr.mxu0 0.0
    %1720 = vmatpush1.xpose.msra.mxu0 0.0
    %1721 = vmatprep.subr.mxu0 0.0
    %1722 = vmatpush1.xpose.msra.mxu0 0.0
    %1723 = vmatprep.subr.mxu0 0.0
    %1724 = vmatpush1.xpose.msra.mxu0 0.0
    %1725 = vmatprep.subr.mxu0 0.0
    %1726 = vmatpush1.xpose.msra.mxu0 0.0
    %1727 = vmatprep.subr.mxu0 0.0
    %1728 = vmatpush1.xpose.msra.mxu0 0.0
    %1729 = vmatprep.subr.mxu0 0.0
    %1730 = vmatpush1.xpose.msra.mxu0 0.0
    %1731 = vmatprep.subr.mxu0 0.0
    %1732 = vmatpush1.xpose.msra.mxu0 0.0
    %1733 = vmatprep.subr.mxu0 0.0
    %1734 = vmatpush1.xpose.msra.mxu0 0.0
    %1735 = vmatprep.subr.mxu0 0.0
    %1736 = vmatpush1.xpose.msra.mxu0 0.0
    %1737 = vmatprep.subr.mxu0 0.0
    %1738 = vmatpush1.xpose.msra.mxu0 0.0
    %1739 = vmatprep.subr.mxu0 0.0
    %1740 = vmatpush1.xpose.msra.mxu0 0.0
    %1741 = vmatprep.subr.mxu0 0.0
    %1742 = vmatpush1.xpose.msra.mxu0 0.0
    %1743 = vmatprep.subr.mxu0 0.0
    %1744 = vmatpush1.xpose.msra.mxu0 0.0
    %1745 = vmatprep.subr.mxu0 0.0
    %1746 = vmatpush1.xpose.msra.mxu0 0.0
    %1747 = vmatprep.subr.mxu0 0.0
    %1748 = vmatpush1.xpose.msra.mxu0 0.0
    %1749 = vmatprep.subr.mxu0 0.0
    %1750 = vmatpush1.xpose.msra.mxu0 0.0
    %1751 = vmatprep.subr.mxu0 0.0
    %1752 = vmatpush1.xpose.msra.mxu0 0.0
    %1753 = vmatprep.subr.mxu0 0.0
    %1754 = vmatpush1.xpose.msra.mxu0 0.0
    %1755 = vmatprep.subr.mxu0 0.0
    %1756 = vmatpush1.xpose.msra.mxu0 0.0
    %1757 = vmatprep.subr.mxu0 0.0
    %1758 = vmatpush1.xpose.msra.mxu0 0.0
    %1759 = vmatprep.subr.mxu0 0.0
    %1760 = vmatpush1.xpose.msra.mxu0 0.0
    %1761 = vmatprep.subr.mxu0 0.0
    %1762 = vmatpush1.xpose.msra.mxu0 0.0
    %1763 = vmatprep.subr.mxu0 0.0
    %1764 = vmatpush1.xpose.msra.mxu0 0.0
    %1765 = vmatprep.subr.mxu0 0.0
    %1766 = vmatpush1.xpose.msra.mxu0 0.0
    %1767 = vmatprep.subr.mxu0 0.0
    %1768 = vmatpush1.xpose.msra.mxu0 0.0
    %1769 = vmatprep.subr.mxu0 0.0
    %1770 = vmatpush1.xpose.msra.mxu0 0.0
    %1771 = vmatprep.subr.mxu0 0.0
    %1772 = vmatpush1.xpose.msra.mxu0 0.0
    %1773 = vmatprep.mubr.f32.mxu0 %v1518
    %1774 = vmatmul.mubr.f32.gmra.mrb[0].mxu0 %v1517
    %v1775 = vpop.f32.mrb[0].mxu0
    %v1776 = vadd.f32 0.0, %v1775
    %v1777 = vpop.f32.mrb[0].mxu0
    %1778 = vmatprep.mubr.f32.mxu0 %v1550
    %1779 = vmatmul.mubr.f32.gmra.mrb[0].mxu0 %v1549
    %v1780 = vpop.f32.mrb[0].mxu0
    %v1781 = vadd.f32 0.0, %v1780
    %v1782 = vpop.f32.mrb[0].mxu0
    %1783 = vmatprep.mubr.f32.mxu0 %v1582
    %1784 = vmatmul.mubr.f32.gmra.mrb[0].mxu0 %v1581
    %v1785 = vpop.f32.mrb[0].mxu0
    %v1786 = vadd.f32 0.0, %v1785
    %v1787 = vpop.f32.mrb[0].mxu0
    %1788 = vmatprep.mubr.f32.mxu0 %v1614
    %1789 = vmatmul.mubr.f32.gmra.mrb[0].mxu0 %v1613
    %v1790 = vpop.f32.mrb[0].mxu0
    %v1791 = vadd.f32 0.0, %v1790
    %v1792 = vpop.f32.mrb[0].mxu0
    %1793 = vdwg.mxu0
    %1794 = vmatprep.subr.mxu0 %v1648
    %1795 = vmatpush1.xpose.msra.mxu0 %v1647
    %1796 = vmatprep.subr.mxu0 %v1680
    %1797 = vmatpush1.xpose.msra.mxu0 %v1679
    %1798 = vmatprep.subr.mxu0 0.0
    %1799 = vmatpush1.xpose.msra.mxu0 0.0
    %1800 = vmatprep.subr.mxu0 0.0
    %1801 = vmatpush1.xpose.msra.mxu0 0.0
    %1802 = vmatprep.subr.mxu0 0.0
    %1803 = vmatpush1.xpose.msra.mxu0 0.0
    %1804 = vmatprep.subr.mxu0 0.0
    %1805 = vmatpush1.xpose.msra.mxu0 0.0
    %1806 = vmatprep.subr.mxu0 0.0
    %1807 = vmatpush1.xpose.msra.mxu0 0.0
    %1808 = vmatprep.subr.mxu0 0.0
    %1809 = vmatpush1.xpose.msra.mxu0 0.0
    %1810 = vmatprep.subr.mxu0 0.0
    %1811 = vmatpush1.xpose.msra.mxu0 0.0
    %1812 = vmatprep.subr.mxu0 0.0
    %1813 = vmatpush1.xpose.msra.mxu0 0.0
    %1814 = vmatprep.subr.mxu0 0.0
    %1815 = vmatpush1.xpose.msra.mxu0 0.0
    %1816 = vmatprep.subr.mxu0 0.0
    %1817 = vmatpush1.xpose.msra.mxu0 0.0
    %1818 = vmatprep.subr.mxu0 0.0
    %1819 = vmatpush1.xpose.msra.mxu0 0.0
    %1820 = vmatprep.subr.mxu0 0.0
    %1821 = vmatpush1.xpose.msra.mxu0 0.0
    %1822 = vmatprep.subr.mxu0 0.0
    %1823 = vmatpush1.xpose.msra.mxu0 0.0
    %1824 = vmatprep.subr.mxu0 0.0
    %1825 = vmatpush1.xpose.msra.mxu0 0.0
    %1826 = vmatprep.subr.mxu0 0.0
    %1827 = vmatpush1.xpose.msra.mxu0 0.0
    %1828 = vmatprep.subr.mxu0 0.0
    %1829 = vmatpush1.xpose.msra.mxu0 0.0
    %1830 = vmatprep.subr.mxu0 0.0
    %1831 = vmatpush1.xpose.msra.mxu0 0.0
    %1832 = vmatprep.subr.mxu0 0.0
    %1833 = vmatpush1.xpose.msra.mxu0 0.0
    %1834 = vmatprep.subr.mxu0 0.0
    %1835 = vmatpush1.xpose.msra.mxu0 0.0
    %1836 = vmatprep.subr.mxu0 0.0
    %1837 = vmatpush1.xpose.msra.mxu0 0.0
    %1838 = vmatprep.subr.mxu0 0.0
    %1839 = vmatpush1.xpose.msra.mxu0 0.0
    %1840 = vmatprep.subr.mxu0 0.0
    %1841 = vmatpush1.xpose.msra.mxu0 0.0
    %1842 = vmatprep.subr.mxu0 0.0
    %1843 = vmatpush1.xpose.msra.mxu0 0.0
    %1844 = vmatprep.subr.mxu0 0.0
    %1845 = vmatpush1.xpose.msra.mxu0 0.0
    %1846 = vmatprep.subr.mxu0 0.0
    %1847 = vmatpush1.xpose.msra.mxu0 0.0
    %1848 = vmatprep.subr.mxu0 0.0
    %1849 = vmatpush1.xpose.msra.mxu0 0.0
    %1850 = vmatprep.subr.mxu0 0.0
    %1851 = vmatpush1.xpose.msra.mxu0 0.0
    %1852 = vmatprep.subr.mxu0 0.0
    %1853 = vmatpush1.xpose.msra.mxu0 0.0
    %1854 = vmatprep.subr.mxu0 0.0
    %1855 = vmatpush1.xpose.msra.mxu0 0.0
    %1856 = vmatprep.subr.mxu0 0.0
    %1857 = vmatpush1.xpose.msra.mxu0 0.0
    %1858 = vmatprep.mubr.f32.mxu0 %v1520
    %1859 = vmatmul.mubr.f32.gmra.mrb[0].mxu0 %v1519
    %v1860 = vpop.f32.mrb[0].mxu0
    %v1861 = vadd.f32 %v1776, %v1860
    %v1862 = vpop.f32.mrb[0].mxu0
    %1863 = vmatprep.mubr.f32.mxu0 %v1552
    %1864 = vmatmul.mubr.f32.gmra.mrb[0].mxu0 %v1551
    %v1865 = vpop.f32.mrb[0].mxu0
    %v1866 = vadd.f32 %v1781, %v1865
    %v1867 = vpop.f32.mrb[0].mxu0
    %1868 = vmatprep.mubr.f32.mxu0 %v1584
    %1869 = vmatmul.mubr.f32.gmra.mrb[0].mxu0 %v1583
    %v1870 = vpop.f32.mrb[0].mxu0
    %v1871 = vadd.f32 %v1786, %v1870
    %v1872 = vpop.f32.mrb[0].mxu0
    %1873 = vmatprep.mubr.f32.mxu0 %v1616
    %1874 = vmatmul.mubr.f32.gmra.mrb[0].mxu0 %v1615
    %v1875 = vpop.f32.mrb[0].mxu0
    %v1876 = vadd.f32 %v1791, %v1875
    %v1877 = vpop.f32.mrb[0].mxu0
    %1878 = vdwg.mxu0
    %1879 = vmatprep.subr.mxu0 %v1650
    %1880 = vmatpush1.xpose.msra.mxu0 %v1649
    %1881 = vmatprep.subr.mxu0 %v1682
    %1882 = vmatpush1.xpose.msra.mxu0 %v1681
    %1883 = vmatprep.subr.mxu0 0.0
    %1884 = vmatpush1.xpose.msra.mxu0 0.0
    %1885 = vmatprep.subr.mxu0 0.0
    %1886 = vmatpush1.xpose.msra.mxu0 0.0
    %1887 = vmatprep.subr.mxu0 0.0
    %1888 = vmatpush1.xpose.msra.mxu0 0.0
    %1889 = vmatprep.subr.mxu0 0.0
    %1890 = vmatpush1.xpose.msra.mxu0 0.0
    %1891 = vmatprep.subr.mxu0 0.0
    %1892 = vmatpush1.xpose.msra.mxu0 0.0
    %1893 = vmatprep.subr.mxu0 0.0
    %1894 = vmatpush1.xpose.msra.mxu0 0.0
    %1895 = vmatprep.subr.mxu0 0.0
    %1896 = vmatpush1.xpose.msra.mxu0 0.0
    %1897 = vmatprep.subr.mxu0 0.0
    %1898 = vmatpush1.xpose.msra.mxu0 0.0
    %1899 = vmatprep.subr.mxu0 0.0
    %1900 = vmatpush1.xpose.msra.mxu0 0.0
    %1901 = vmatprep.subr.mxu0 0.0
    %1902 = vmatpush1.xpose.msra.mxu0 0.0
    %1903 = vmatprep.subr.mxu0 0.0
    %1904 = vmatpush1.xpose.msra.mxu0 0.0
    %1905 = vmatprep.subr.mxu0 0.0
    %1906 = vmatpush1.xpose.msra.mxu0 0.0
    %1907 = vmatprep.subr.mxu0 0.0
    %1908 = vmatpush1.xpose.msra.mxu0 0.0
    %1909 = vmatprep.subr.mxu0 0.0
    %1910 = vmatpush1.xpose.msra.mxu0 0.0
    %1911 = vmatprep.subr.mxu0 0.0
    %1912 = vmatpush1.xpose.msra.mxu0 0.0
    %1913 = vmatprep.subr.mxu0 0.0
    %1914 = vmatpush1.xpose.msra.mxu0 0.0
    %1915 = vmatprep.subr.mxu0 0.0
    %1916 = vmatpush1.xpose.msra.mxu0 0.0
    %1917 = vmatprep.subr.mxu0 0.0
    %1918 = vmatpush1.xpose.msra.mxu0 0.0
    %1919 = vmatprep.subr.mxu0 0.0
    %1920 = vmatpush1.xpose.msra.mxu0 0.0
    %1921 = vmatprep.subr.mxu0 0.0
    %1922 = vmatpush1.xpose.msra.mxu0 0.0
    %1923 = vmatprep.subr.mxu0 0.0
    %1924 = vmatpush1.xpose.msra.mxu0 0.0
    %1925 = vmatprep.subr.mxu0 0.0
    %1926 = vmatpush1.xpose.msra.mxu0 0.0
    %1927 = vmatprep.subr.mxu0 0.0
    %1928 = vmatpush1.xpose.msra.mxu0 0.0
    %1929 = vmatprep.subr.mxu0 0.0
    %1930 = vmatpush1.xpose.msra.mxu0 0.0
    %1931 = vmatprep.subr.mxu0 0.0
    %1932 = vmatpush1.xpose.msra.mxu0 0.0
    %1933 = vmatprep.subr.mxu0 0.0
    %1934 = vmatpush1.xpose.msra.mxu0 0.0
    %1935 = vmatprep.subr.mxu0 0.0
    %1936 = vmatpush1.xpose.msra.mxu0 0.0
    %1937 = vmatprep.subr.mxu0 0.0
    %1938 = vmatpush1.xpose.msra.mxu0 0.0
    %1939 = vmatprep.subr.mxu0 0.0
    %1940 = vmatpush1.xpose.msra.mxu0 0.0
    %1941 = vmatprep.subr.mxu0 0.0
    %1942 = vmatpush1.xpose.msra.mxu0 0.0
    %1943 = vmatprep.mubr.f32.mxu0 %v1522
    %1944 = vmatmul.mubr.f32.gmra.mrb[0].mxu0 %v1521
    %v1945 = vpop.f32.mrb[0].mxu0
    %v1946 = vadd.f32 %v1861, %v1945
    %v1947 = vpop.f32.mrb[0].mxu0
    %1948 = vmatprep.mubr.f32.mxu0 %v1554
    %1949 = vmatmul.mubr.f32.gmra.mrb[0].mxu0 %v1553
    %v1950 = vpop.f32.mrb[0].mxu0
    %v1951 = vadd.f32 %v1866, %v1950
    %v1952 = vpop.f32.mrb[0].mxu0
    %1953 = vmatprep.mubr.f32.mxu0 %v1586
    %1954 = vmatmul.mubr.f32.gmra.mrb[0].mxu0 %v1585
    %v1955 = vpop.f32.mrb[0].mxu0
    %v1956 = vadd.f32 %v1871, %v1955
    %v1957 = vpop.f32.mrb[0].mxu0
    %1958 = vmatprep.mubr.f32.mxu0 %v1618
    %1959 = vmatmul.mubr.f32.gmra.mrb[0].mxu0 %v1617
    %v1960 = vpop.f32.mrb[0].mxu0
    %v1961 = vadd.f32 %v1876, %v1960
    %v1962 = vpop.f32.mrb[0].mxu0
    %1963 = vdwg.mxu0
    %1964 = vmatprep.subr.mxu0 %v1652
    %1965 = vmatpush1.xpose.msra.mxu0 %v1651
    %1966 = vmatprep.subr.mxu0 %v1684
    %1967 = vmatpush1.xpose.msra.mxu0 %v1683
    %1968 = vmatprep.subr.mxu0 0.0
    %1969 = vmatpush1.xpose.msra.mxu0 0.0
    %1970 = vmatprep.subr.mxu0 0.0
    %1971 = vmatpush1.xpose.msra.mxu0 0.0
    %1972 = vmatprep.subr.mxu0 0.0
    %1973 = vmatpush1.xpose.msra.mxu0 0.0
    %1974 = vmatprep.subr.mxu0 0.0
    %1975 = vmatpush1.xpose.msra.mxu0 0.0
    %1976 = vmatprep.subr.mxu0 0.0
    %1977 = vmatpush1.xpose.msra.mxu0 0.0
    %1978 = vmatprep.subr.mxu0 0.0
    %1979 = vmatpush1.xpose.msra.mxu0 0.0
    %1980 = vmatprep.subr.mxu0 0.0
    %1981 = vmatpush1.xpose.msra.mxu0 0.0
    %1982 = vmatprep.subr.mxu0 0.0
    %1983 = vmatpush1.xpose.msra.mxu0 0.0
    %1984 = vmatprep.subr.mxu0 0.0
    %1985 = vmatpush1.xpose.msra.mxu0 0.0
    %1986 = vmatprep.subr.mxu0 0.0
    %1987 = vmatpush1.xpose.msra.mxu0 0.0
    %1988 = vmatprep.subr.mxu0 0.0
    %1989 = vmatpush1.xpose.msra.mxu0 0.0
    %1990 = vmatprep.subr.mxu0 0.0
    %1991 = vmatpush1.xpose.msra.mxu0 0.0
    %1992 = vmatprep.subr.mxu0 0.0
    %1993 = vmatpush1.xpose.msra.mxu0 0.0
    %1994 = vmatprep.subr.mxu0 0.0
    %1995 = vmatpush1.xpose.msra.mxu0 0.0
    %1996 = vmatprep.subr.mxu0 0.0
    %1997 = vmatpush1.xpose.msra.mxu0 0.0
    %1998 = vmatprep.subr.mxu0 0.0
    %1999 = vmatpush1.xpose.msra.mxu0 0.0
    %2000 = vmatprep.subr.mxu0 0.0
    %2001 = vmatpush1.xpose.msra.mxu0 0.0
    %2002 = vmatprep.subr.mxu0 0.0
    %2003 = vmatpush1.xpose.msra.mxu0 0.0
    %2004 = vmatprep.subr.mxu0 0.0
    %2005 = vmatpush1.xpose.msra.mxu0 0.0
    %2006 = vmatprep.subr.mxu0 0.0
    %2007 = vmatpush1.xpose.msra.mxu0 0.0
    %2008 = vmatprep.subr.mxu0 0.0
    %2009 = vmatpush1.xpose.msra.mxu0 0.0
    %2010 = vmatprep.subr.mxu0 0.0
    %2011 = vmatpush1.xpose.msra.mxu0 0.0
    %2012 = vmatprep.subr.mxu0 0.0
    %2013 = vmatpush1.xpose.msra.mxu0 0.0
    %2014 = vmatprep.subr.mxu0 0.0
    %2015 = vmatpush1.xpose.msra.mxu0 0.0
    %2016 = vmatprep.subr.mxu0 0.0
    %2017 = vmatpush1.xpose.msra.mxu0 0.0
    %2018 = vmatprep.subr.mxu0 0.0
    %2019 = vmatpush1.xpose.msra.mxu0 0.0
    %2020 = vmatprep.subr.mxu0 0.0
    %2021 = vmatpush1.xpose.msra.mxu0 0.0
    %2022 = vmatprep.subr.mxu0 0.0
    %2023 = vmatpush1.xpose.msra.mxu0 0.0
    %2024 = vmatprep.subr.mxu0 0.0
    %2025 = vmatpush1.xpose.msra.mxu0 0.0
    %2026 = vmatprep.subr.mxu0 0.0
    %2027 = vmatpush1.xpose.msra.mxu0 0.0
    %2028 = vmatprep.mubr.f32.mxu0 %v1524
    %2029 = vmatmul.mubr.f32.gmra.mrb[0].mxu0 %v1523
    %v2030 = vpop.f32.mrb[0].mxu0
    %v2031 = vadd.f32 %v1946, %v2030
    %v2032 = vpop.f32.mrb[0].mxu0
    %2033 = vmatprep.mubr.f32.mxu0 %v1556
    %2034 = vmatmul.mubr.f32.gmra.mrb[0].mxu0 %v1555
    %v2035 = vpop.f32.mrb[0].mxu0
    %v2036 = vadd.f32 %v1951, %v2035
    %v2037 = vpop.f32.mrb[0].mxu0
    %2038 = vmatprep.mubr.f32.mxu0 %v1588
    %2039 = vmatmul.mubr.f32.gmra.mrb[0].mxu0 %v1587
    %v2040 = vpop.f32.mrb[0].mxu0
    %v2041 = vadd.f32 %v1956, %v2040
    %v2042 = vpop.f32.mrb[0].mxu0
    %2043 = vmatprep.mubr.f32.mxu0 %v1620
    %2044 = vmatmul.mubr.f32.gmra.mrb[0].mxu0 %v1619
    %v2045 = vpop.f32.mrb[0].mxu0
    %v2046 = vadd.f32 %v1961, %v2045
    %v2047 = vpop.f32.mrb[0].mxu0
    %2048 = vdwg.mxu0
    %2049 = vmatprep.subr.mxu0 %v1654
    %2050 = vmatpush1.xpose.msra.mxu0 %v1653
    %2051 = vmatprep.subr.mxu0 %v1686
    %2052 = vmatpush1.xpose.msra.mxu0 %v1685
    %2053 = vmatprep.subr.mxu0 0.0
    %2054 = vmatpush1.xpose.msra.mxu0 0.0
    %2055 = vmatprep.subr.mxu0 0.0
    %2056 = vmatpush1.xpose.msra.mxu0 0.0
    %2057 = vmatprep.subr.mxu0 0.0
    %2058 = vmatpush1.xpose.msra.mxu0 0.0
    %2059 = vmatprep.subr.mxu0 0.0
    %2060 = vmatpush1.xpose.msra.mxu0 0.0
    %2061 = vmatprep.subr.mxu0 0.0
    %2062 = vmatpush1.xpose.msra.mxu0 0.0
    %2063 = vmatprep.subr.mxu0 0.0
    %2064 = vmatpush1.xpose.msra.mxu0 0.0
    %2065 = vmatprep.subr.mxu0 0.0
    %2066 = vmatpush1.xpose.msra.mxu0 0.0
    %2067 = vmatprep.subr.mxu0 0.0
    %2068 = vmatpush1.xpose.msra.mxu0 0.0
    %2069 = vmatprep.subr.mxu0 0.0
    %2070 = vmatpush1.xpose.msra.mxu0 0.0
    %2071 = vmatprep.subr.mxu0 0.0
    %2072 = vmatpush1.xpose.msra.mxu0 0.0
    %2073 = vmatprep.subr.mxu0 0.0
    %2074 = vmatpush1.xpose.msra.mxu0 0.0
    %2075 = vmatprep.subr.mxu0 0.0
    %2076 = vmatpush1.xpose.msra.mxu0 0.0
    %2077 = vmatprep.subr.mxu0 0.0
    %2078 = vmatpush1.xpose.msra.mxu0 0.0
    %2079 = vmatprep.subr.mxu0 0.0
    %2080 = vmatpush1.xpose.msra.mxu0 0.0
    %2081 = vmatprep.subr.mxu0 0.0
    %2082 = vmatpush1.xpose.msra.mxu0 0.0
    %2083 = vmatprep.subr.mxu0 0.0
    %2084 = vmatpush1.xpose.msra.mxu0 0.0
    %2085 = vmatprep.subr.mxu0 0.0
    %2086 = vmatpush1.xpose.msra.mxu0 0.0
    %2087 = vmatprep.subr.mxu0 0.0
    %2088 = vmatpush1.xpose.msra.mxu0 0.0
    %2089 = vmatprep.subr.mxu0 0.0
    %2090 = vmatpush1.xpose.msra.mxu0 0.0
    %2091 = vmatprep.subr.mxu0 0.0
    %2092 = vmatpush1.xpose.msra.mxu0 0.0
    %2093 = vmatprep.subr.mxu0 0.0
    %2094 = vmatpush1.xpose.msra.mxu0 0.0
    %2095 = vmatprep.subr.mxu0 0.0
    %2096 = vmatpush1.xpose.msra.mxu0 0.0
    %2097 = vmatprep.subr.mxu0 0.0
    %2098 = vmatpush1.xpose.msra.mxu0 0.0
    %2099 = vmatprep.subr.mxu0 0.0
    %2100 = vmatpush1.xpose.msra.mxu0 0.0
    %2101 = vmatprep.subr.mxu0 0.0
    %2102 = vmatpush1.xpose.msra.mxu0 0.0
    %2103 = vmatprep.subr.mxu0 0.0
    %2104 = vmatpush1.xpose.msra.mxu0 0.0
    %2105 = vmatprep.subr.mxu0 0.0
    %2106 = vmatpush1.xpose.msra.mxu0 0.0
    %2107 = vmatprep.subr.mxu0 0.0
    %2108 = vmatpush1.xpose.msra.mxu0 0.0
    %2109 = vmatprep.subr.mxu0 0.0
    %2110 = vmatpush1.xpose.msra.mxu0 0.0
    %2111 = vmatprep.subr.mxu0 0.0
    %2112 = vmatpush1.xpose.msra.mxu0 0.0
    %2113 = vmatprep.mubr.f32.mxu0 %v1526
    %2114 = vmatmul.mubr.f32.gmra.mrb[0].mxu0 %v1525
    %v2115 = vpop.f32.mrb[0].mxu0
    %v2116 = vadd.f32 %v2031, %v2115
    %v2117 = vpop.f32.mrb[0].mxu0
    %2118 = vmatprep.mubr.f32.mxu0 %v1558
    %2119 = vmatmul.mubr.f32.gmra.mrb[0].mxu0 %v1557
    %v2120 = vpop.f32.mrb[0].mxu0
    %v2121 = vadd.f32 %v2036, %v2120
    %v2122 = vpop.f32.mrb[0].mxu0
    %2123 = vmatprep.mubr.f32.mxu0 %v1590
    %2124 = vmatmul.mubr.f32.gmra.mrb[0].mxu0 %v1589
    %v2125 = vpop.f32.mrb[0].mxu0
    %v2126 = vadd.f32 %v2041, %v2125
    %v2127 = vpop.f32.mrb[0].mxu0
    %2128 = vmatprep.mubr.f32.mxu0 %v1622
    %2129 = vmatmul.mubr.f32.gmra.mrb[0].mxu0 %v1621
    %v2130 = vpop.f32.mrb[0].mxu0
    %v2131 = vadd.f32 %v2046, %v2130
    %v2132 = vpop.f32.mrb[0].mxu0
    %2133 = vdwg.mxu0
    %2134 = vmatprep.subr.mxu0 %v1656
    %2135 = vmatpush1.xpose.msra.mxu0 %v1655
    %2136 = vmatprep.subr.mxu0 %v1688
    %2137 = vmatpush1.xpose.msra.mxu0 %v1687
    %2138 = vmatprep.subr.mxu0 0.0
    %2139 = vmatpush1.xpose.msra.mxu0 0.0
    %2140 = vmatprep.subr.mxu0 0.0
    %2141 = vmatpush1.xpose.msra.mxu0 0.0
    %2142 = vmatprep.subr.mxu0 0.0
    %2143 = vmatpush1.xpose.msra.mxu0 0.0
    %2144 = vmatprep.subr.mxu0 0.0
    %2145 = vmatpush1.xpose.msra.mxu0 0.0
    %2146 = vmatprep.subr.mxu0 0.0
    %2147 = vmatpush1.xpose.msra.mxu0 0.0
    %2148 = vmatprep.subr.mxu0 0.0
    %2149 = vmatpush1.xpose.msra.mxu0 0.0
    %2150 = vmatprep.subr.mxu0 0.0
    %2151 = vmatpush1.xpose.msra.mxu0 0.0
    %2152 = vmatprep.subr.mxu0 0.0
    %2153 = vmatpush1.xpose.msra.mxu0 0.0
    %2154 = vmatprep.subr.mxu0 0.0
    %2155 = vmatpush1.xpose.msra.mxu0 0.0
    %2156 = vmatprep.subr.mxu0 0.0
    %2157 = vmatpush1.xpose.msra.mxu0 0.0
    %2158 = vmatprep.subr.mxu0 0.0
    %2159 = vmatpush1.xpose.msra.mxu0 0.0
    %2160 = vmatprep.subr.mxu0 0.0
    %2161 = vmatpush1.xpose.msra.mxu0 0.0
    %2162 = vmatprep.subr.mxu0 0.0
    %2163 = vmatpush1.xpose.msra.mxu0 0.0
    %2164 = vmatprep.subr.mxu0 0.0
    %2165 = vmatpush1.xpose.msra.mxu0 0.0
    %2166 = vmatprep.subr.mxu0 0.0
    %2167 = vmatpush1.xpose.msra.mxu0 0.0
    %2168 = vmatprep.subr.mxu0 0.0
    %2169 = vmatpush1.xpose.msra.mxu0 0.0
    %2170 = vmatprep.subr.mxu0 0.0
    %2171 = vmatpush1.xpose.msra.mxu0 0.0
    %2172 = vmatprep.subr.mxu0 0.0
    %2173 = vmatpush1.xpose.msra.mxu0 0.0
    %2174 = vmatprep.subr.mxu0 0.0
    %2175 = vmatpush1.xpose.msra.mxu0 0.0
    %2176 = vmatprep.subr.mxu0 0.0
    %2177 = vmatpush1.xpose.msra.mxu0 0.0
    %2178 = vmatprep.subr.mxu0 0.0
    %2179 = vmatpush1.xpose.msra.mxu0 0.0
    %2180 = vmatprep.subr.mxu0 0.0
    %2181 = vmatpush1.xpose.msra.mxu0 0.0
    %2182 = vmatprep.subr.mxu0 0.0
    %2183 = vmatpush1.xpose.msra.mxu0 0.0
    %2184 = vmatprep.subr.mxu0 0.0
    %2185 = vmatpush1.xpose.msra.mxu0 0.0
    %2186 = vmatprep.subr.mxu0 0.0
    %2187 = vmatpush1.xpose.msra.mxu0 0.0
    %2188 = vmatprep.subr.mxu0 0.0
    %2189 = vmatpush1.xpose.msra.mxu0 0.0
    %2190 = vmatprep.subr.mxu0 0.0
    %2191 = vmatpush1.xpose.msra.mxu0 0.0
    %2192 = vmatprep.subr.mxu0 0.0
    %2193 = vmatpush1.xpose.msra.mxu0 0.0
    %2194 = vmatprep.subr.mxu0 0.0
    %2195 = vmatpush1.xpose.msra.mxu0 0.0
    %2196 = vmatprep.subr.mxu0 0.0
    %2197 = vmatpush1.xpose.msra.mxu0 0.0
    %2198 = vmatprep.mubr.f32.mxu0 %v1528
    %2199 = vmatmul.mubr.f32.gmra.mrb[0].mxu0 %v1527
    %v2200 = vpop.f32.mrb[0].mxu0
    %v2201 = vadd.f32 %v2116, %v2200
    %v2202 = vpop.f32.mrb[0].mxu0
    %2203 = vmatprep.mubr.f32.mxu0 %v1560
    %2204 = vmatmul.mubr.f32.gmra.mrb[0].mxu0 %v1559
    %v2205 = vpop.f32.mrb[0].mxu0
    %v2206 = vadd.f32 %v2121, %v2205
    %v2207 = vpop.f32.mrb[0].mxu0
    %2208 = vmatprep.mubr.f32.mxu0 %v1592
    %2209 = vmatmul.mubr.f32.gmra.mrb[0].mxu0 %v1591
    %v2210 = vpop.f32.mrb[0].mxu0
    %v2211 = vadd.f32 %v2126, %v2210
    %v2212 = vpop.f32.mrb[0].mxu0
    %2213 = vmatprep.mubr.f32.mxu0 %v1624
    %2214 = vmatmul.mubr.f32.gmra.mrb[0].mxu0 %v1623
    %v2215 = vpop.f32.mrb[0].mxu0
    %v2216 = vadd.f32 %v2131, %v2215
    %v2217 = vpop.f32.mrb[0].mxu0
    %2218 = vdwg.mxu0
    %2219 = vmatprep.subr.mxu0 %v1658
    %2220 = vmatpush1.xpose.msra.mxu0 %v1657
    %2221 = vmatprep.subr.mxu0 %v1690
    %2222 = vmatpush1.xpose.msra.mxu0 %v1689
    %2223 = vmatprep.subr.mxu0 0.0
    %2224 = vmatpush1.xpose.msra.mxu0 0.0
    %2225 = vmatprep.subr.mxu0 0.0
    %2226 = vmatpush1.xpose.msra.mxu0 0.0
    %2227 = vmatprep.subr.mxu0 0.0
    %2228 = vmatpush1.xpose.msra.mxu0 0.0
    %2229 = vmatprep.subr.mxu0 0.0
    %2230 = vmatpush1.xpose.msra.mxu0 0.0
    %2231 = vmatprep.subr.mxu0 0.0
    %2232 = vmatpush1.xpose.msra.mxu0 0.0
    %2233 = vmatprep.subr.mxu0 0.0
    %2234 = vmatpush1.xpose.msra.mxu0 0.0
    %2235 = vmatprep.subr.mxu0 0.0
    %2236 = vmatpush1.xpose.msra.mxu0 0.0
    %2237 = vmatprep.subr.mxu0 0.0
    %2238 = vmatpush1.xpose.msra.mxu0 0.0
    %2239 = vmatprep.subr.mxu0 0.0
    %2240 = vmatpush1.xpose.msra.mxu0 0.0
    %2241 = vmatprep.subr.mxu0 0.0
    %2242 = vmatpush1.xpose.msra.mxu0 0.0
    %2243 = vmatprep.subr.mxu0 0.0
    %2244 = vmatpush1.xpose.msra.mxu0 0.0
    %2245 = vmatprep.subr.mxu0 0.0
    %2246 = vmatpush1.xpose.msra.mxu0 0.0
    %2247 = vmatprep.subr.mxu0 0.0
    %2248 = vmatpush1.xpose.msra.mxu0 0.0
    %2249 = vmatprep.subr.mxu0 0.0
    %2250 = vmatpush1.xpose.msra.mxu0 0.0
    %2251 = vmatprep.subr.mxu0 0.0
    %2252 = vmatpush1.xpose.msra.mxu0 0.0
    %2253 = vmatprep.subr.mxu0 0.0
    %2254 = vmatpush1.xpose.msra.mxu0 0.0
    %2255 = vmatprep.subr.mxu0 0.0
    %2256 = vmatpush1.xpose.msra.mxu0 0.0
    %2257 = vmatprep.subr.mxu0 0.0
    %2258 = vmatpush1.xpose.msra.mxu0 0.0
    %2259 = vmatprep.subr.mxu0 0.0
    %2260 = vmatpush1.xpose.msra.mxu0 0.0
    %2261 = vmatprep.subr.mxu0 0.0
    %2262 = vmatpush1.xpose.msra.mxu0 0.0
    %2263 = vmatprep.subr.mxu0 0.0
    %2264 = vmatpush1.xpose.msra.mxu0 0.0
    %2265 = vmatprep.subr.mxu0 0.0
    %2266 = vmatpush1.xpose.msra.mxu0 0.0
    %2267 = vmatprep.subr.mxu0 0.0
    %2268 = vmatpush1.xpose.msra.mxu0 0.0
    %2269 = vmatprep.subr.mxu0 0.0
    %2270 = vmatpush1.xpose.msra.mxu0 0.0
    %2271 = vmatprep.subr.mxu0 0.0
    %2272 = vmatpush1.xpose.msra.mxu0 0.0
    %2273 = vmatprep.subr.mxu0 0.0
    %2274 = vmatpush1.xpose.msra.mxu0 0.0
    %2275 = vmatprep.subr.mxu0 0.0
    %2276 = vmatpush1.xpose.msra.mxu0 0.0
    %2277 = vmatprep.subr.mxu0 0.0
    %2278 = vmatpush1.xpose.msra.mxu0 0.0
    %2279 = vmatprep.subr.mxu0 0.0
    %2280 = vmatpush1.xpose.msra.mxu0 0.0
    %2281 = vmatprep.subr.mxu0 0.0
    %2282 = vmatpush1.xpose.msra.mxu0 0.0
    %2283 = vmatprep.mubr.f32.mxu0 %v1530
    %2284 = vmatmul.mubr.f32.gmra.mrb[0].mxu0 %v1529
    %v2285 = vpop.f32.mrb[0].mxu0
    %v2286 = vadd.f32 %v2201, %v2285
    %v2287 = vpop.f32.mrb[0].mxu0
    %2288 = vmatprep.mubr.f32.mxu0 %v1562
    %2289 = vmatmul.mubr.f32.gmra.mrb[0].mxu0 %v1561
    %v2290 = vpop.f32.mrb[0].mxu0
    %v2291 = vadd.f32 %v2206, %v2290
    %v2292 = vpop.f32.mrb[0].mxu0
    %2293 = vmatprep.mubr.f32.mxu0 %v1594
    %2294 = vmatmul.mubr.f32.gmra.mrb[0].mxu0 %v1593
    %v2295 = vpop.f32.mrb[0].mxu0
    %v2296 = vadd.f32 %v2211, %v2295
    %v2297 = vpop.f32.mrb[0].mxu0
    %2298 = vmatprep.mubr.f32.mxu0 %v1626
    %2299 = vmatmul.mubr.f32.gmra.mrb[0].mxu0 %v1625
    %v2300 = vpop.f32.mrb[0].mxu0
    %v2301 = vadd.f32 %v2216, %v2300
    %v2302 = vpop.f32.mrb[0].mxu0
    %2303 = vdwg.mxu0
    %2304 = vmatprep.subr.mxu0 %v1660
    %2305 = vmatpush1.xpose.msra.mxu0 %v1659
    %2306 = vmatprep.subr.mxu0 %v1692
    %2307 = vmatpush1.xpose.msra.mxu0 %v1691
    %2308 = vmatprep.subr.mxu0 0.0
    %2309 = vmatpush1.xpose.msra.mxu0 0.0
    %2310 = vmatprep.subr.mxu0 0.0
    %2311 = vmatpush1.xpose.msra.mxu0 0.0
    %2312 = vmatprep.subr.mxu0 0.0
    %2313 = vmatpush1.xpose.msra.mxu0 0.0
    %2314 = vmatprep.subr.mxu0 0.0
    %2315 = vmatpush1.xpose.msra.mxu0 0.0
    %2316 = vmatprep.subr.mxu0 0.0
    %2317 = vmatpush1.xpose.msra.mxu0 0.0
    %2318 = vmatprep.subr.mxu0 0.0
    %2319 = vmatpush1.xpose.msra.mxu0 0.0
    %2320 = vmatprep.subr.mxu0 0.0
    %2321 = vmatpush1.xpose.msra.mxu0 0.0
    %2322 = vmatprep.subr.mxu0 0.0
    %2323 = vmatpush1.xpose.msra.mxu0 0.0
    %2324 = vmatprep.subr.mxu0 0.0
    %2325 = vmatpush1.xpose.msra.mxu0 0.0
    %2326 = vmatprep.subr.mxu0 0.0
    %2327 = vmatpush1.xpose.msra.mxu0 0.0
    %2328 = vmatprep.subr.mxu0 0.0
    %2329 = vmatpush1.xpose.msra.mxu0 0.0
    %2330 = vmatprep.subr.mxu0 0.0
    %2331 = vmatpush1.xpose.msra.mxu0 0.0
    %2332 = vmatprep.subr.mxu0 0.0
    %2333 = vmatpush1.xpose.msra.mxu0 0.0
    %2334 = vmatprep.subr.mxu0 0.0
    %2335 = vmatpush1.xpose.msra.mxu0 0.0
    %2336 = vmatprep.subr.mxu0 0.0
    %2337 = vmatpush1.xpose.msra.mxu0 0.0
    %2338 = vmatprep.subr.mxu0 0.0
    %2339 = vmatpush1.xpose.msra.mxu0 0.0
    %2340 = vmatprep.subr.mxu0 0.0
    %2341 = vmatpush1.xpose.msra.mxu0 0.0
    %2342 = vmatprep.subr.mxu0 0.0
    %2343 = vmatpush1.xpose.msra.mxu0 0.0
    %2344 = vmatprep.subr.mxu0 0.0
    %2345 = vmatpush1.xpose.msra.mxu0 0.0
    %2346 = vmatprep.subr.mxu0 0.0
    %2347 = vmatpush1.xpose.msra.mxu0 0.0
    %2348 = vmatprep.subr.mxu0 0.0
    %2349 = vmatpush1.xpose.msra.mxu0 0.0
    %2350 = vmatprep.subr.mxu0 0.0
    %2351 = vmatpush1.xpose.msra.mxu0 0.0
    %2352 = vmatprep.subr.mxu0 0.0
    %2353 = vmatpush1.xpose.msra.mxu0 0.0
    %2354 = vmatprep.subr.mxu0 0.0
    %2355 = vmatpush1.xpose.msra.mxu0 0.0
    %2356 = vmatprep.subr.mxu0 0.0
    %2357 = vmatpush1.xpose.msra.mxu0 0.0
    %2358 = vmatprep.subr.mxu0 0.0
    %2359 = vmatpush1.xpose.msra.mxu0 0.0
    %2360 = vmatprep.subr.mxu0 0.0
    %2361 = vmatpush1.xpose.msra.mxu0 0.0
    %2362 = vmatprep.subr.mxu0 0.0
    %2363 = vmatpush1.xpose.msra.mxu0 0.0
    %2364 = vmatprep.subr.mxu0 0.0
    %2365 = vmatpush1.xpose.msra.mxu0 0.0
    %2366 = vmatprep.subr.mxu0 0.0
    %2367 = vmatpush1.xpose.msra.mxu0 0.0
    %2368 = vmatprep.mubr.f32.mxu0 %v1532
    %2369 = vmatmul.mubr.f32.gmra.mrb[0].mxu0 %v1531
    %v2370 = vpop.f32.mrb[0].mxu0
    %v2371 = vadd.f32 %v2286, %v2370
    %v2372 = vpop.f32.mrb[0].mxu0
    %2373 = vmatprep.mubr.f32.mxu0 %v1564
    %2374 = vmatmul.mubr.f32.gmra.mrb[0].mxu0 %v1563
    %v2375 = vpop.f32.mrb[0].mxu0
    %v2376 = vadd.f32 %v2291, %v2375
    %v2377 = vpop.f32.mrb[0].mxu0
    %2378 = vmatprep.mubr.f32.mxu0 %v1596
    %2379 = vmatmul.mubr.f32.gmra.mrb[0].mxu0 %v1595
    %v2380 = vpop.f32.mrb[0].mxu0
    %v2381 = vadd.f32 %v2296, %v2380
    %v2382 = vpop.f32.mrb[0].mxu0
    %2383 = vmatprep.mubr.f32.mxu0 %v1628
    %2384 = vmatmul.mubr.f32.gmra.mrb[0].mxu0 %v1627
    %v2385 = vpop.f32.mrb[0].mxu0
    %v2386 = vadd.f32 %v2301, %v2385
    %v2387 = vpop.f32.mrb[0].mxu0
    %2388 = vdwg.mxu0
    %2389 = vmatprep.subr.mxu0 %v1662
    %2390 = vmatpush1.xpose.msra.mxu0 %v1661
    %2391 = vmatprep.subr.mxu0 %v1694
    %2392 = vmatpush1.xpose.msra.mxu0 %v1693
    %2393 = vmatprep.subr.mxu0 0.0
    %2394 = vmatpush1.xpose.msra.mxu0 0.0
    %2395 = vmatprep.subr.mxu0 0.0
    %2396 = vmatpush1.xpose.msra.mxu0 0.0
    %2397 = vmatprep.subr.mxu0 0.0
    %2398 = vmatpush1.xpose.msra.mxu0 0.0
    %2399 = vmatprep.subr.mxu0 0.0
    %2400 = vmatpush1.xpose.msra.mxu0 0.0
    %2401 = vmatprep.subr.mxu0 0.0
    %2402 = vmatpush1.xpose.msra.mxu0 0.0
    %2403 = vmatprep.subr.mxu0 0.0
    %2404 = vmatpush1.xpose.msra.mxu0 0.0
    %2405 = vmatprep.subr.mxu0 0.0
    %2406 = vmatpush1.xpose.msra.mxu0 0.0
    %2407 = vmatprep.subr.mxu0 0.0
    %2408 = vmatpush1.xpose.msra.mxu0 0.0
    %2409 = vmatprep.subr.mxu0 0.0
    %2410 = vmatpush1.xpose.msra.mxu0 0.0
    %2411 = vmatprep.subr.mxu0 0.0
    %2412 = vmatpush1.xpose.msra.mxu0 0.0
    %2413 = vmatprep.subr.mxu0 0.0
    %2414 = vmatpush1.xpose.msra.mxu0 0.0
    %2415 = vmatprep.subr.mxu0 0.0
    %2416 = vmatpush1.xpose.msra.mxu0 0.0
    %2417 = vmatprep.subr.mxu0 0.0
    %2418 = vmatpush1.xpose.msra.mxu0 0.0
    %2419 = vmatprep.subr.mxu0 0.0
    %2420 = vmatpush1.xpose.msra.mxu0 0.0
    %2421 = vmatprep.subr.mxu0 0.0
    %2422 = vmatpush1.xpose.msra.mxu0 0.0
    %2423 = vmatprep.subr.mxu0 0.0
    %2424 = vmatpush1.xpose.msra.mxu0 0.0
    %2425 = vmatprep.subr.mxu0 0.0
    %2426 = vmatpush1.xpose.msra.mxu0 0.0
    %2427 = vmatprep.subr.mxu0 0.0
    %2428 = vmatpush1.xpose.msra.mxu0 0.0
    %2429 = vmatprep.subr.mxu0 0.0
    %2430 = vmatpush1.xpose.msra.mxu0 0.0
    %2431 = vmatprep.subr.mxu0 0.0
    %2432 = vmatpush1.xpose.msra.mxu0 0.0
    %2433 = vmatprep.subr.mxu0 0.0
    %2434 = vmatpush1.xpose.msra.mxu0 0.0
    %2435 = vmatprep.subr.mxu0 0.0
    %2436 = vmatpush1.xpose.msra.mxu0 0.0
    %2437 = vmatprep.subr.mxu0 0.0
    %2438 = vmatpush1.xpose.msra.mxu0 0.0
    %2439 = vmatprep.subr.mxu0 0.0
    %2440 = vmatpush1.xpose.msra.mxu0 0.0
    %2441 = vmatprep.subr.mxu0 0.0
    %2442 = vmatpush1.xpose.msra.mxu0 0.0
    %2443 = vmatprep.subr.mxu0 0.0
    %2444 = vmatpush1.xpose.msra.mxu0 0.0
    %2445 = vmatprep.subr.mxu0 0.0
    %2446 = vmatpush1.xpose.msra.mxu0 0.0
    %2447 = vmatprep.subr.mxu0 0.0
    %2448 = vmatpush1.xpose.msra.mxu0 0.0
    %2449 = vmatprep.subr.mxu0 0.0
    %2450 = vmatpush1.xpose.msra.mxu0 0.0
    %2451 = vmatprep.subr.mxu0 0.0
    %2452 = vmatpush1.xpose.msra.mxu0 0.0
    %2453 = vmatprep.mubr.f32.mxu0 %v1534
    %2454 = vmatmul.mubr.f32.gmra.mrb[0].mxu0 %v1533
    %v2455 = vpop.f32.mrb[0].mxu0
    %v2456 = vadd.f32 %v2371, %v2455
    %v2457 = vpop.f32.mrb[0].mxu0
    %2458 = vmatprep.mubr.f32.mxu0 %v1566
    %2459 = vmatmul.mubr.f32.gmra.mrb[0].mxu0 %v1565
    %v2460 = vpop.f32.mrb[0].mxu0
    %v2461 = vadd.f32 %v2376, %v2460
    %v2462 = vpop.f32.mrb[0].mxu0
    %2463 = vmatprep.mubr.f32.mxu0 %v1598
    %2464 = vmatmul.mubr.f32.gmra.mrb[0].mxu0 %v1597
    %v2465 = vpop.f32.mrb[0].mxu0
    %v2466 = vadd.f32 %v2381, %v2465
    %v2467 = vpop.f32.mrb[0].mxu0
    %2468 = vmatprep.mubr.f32.mxu0 %v1630
    %2469 = vmatmul.mubr.f32.gmra.mrb[0].mxu0 %v1629
    %v2470 = vpop.f32.mrb[0].mxu0
    %v2471 = vadd.f32 %v2386, %v2470
    %v2472 = vpop.f32.mrb[0].mxu0
    %2473 = vdwg.mxu0
    %2474 = vmatprep.subr.mxu0 %v1664
    %2475 = vmatpush1.xpose.msra.mxu0 %v1663
    %2476 = vmatprep.subr.mxu0 %v1696
    %2477 = vmatpush1.xpose.msra.mxu0 %v1695
    %2478 = vmatprep.subr.mxu0 0.0
    %2479 = vmatpush1.xpose.msra.mxu0 0.0
    %2480 = vmatprep.subr.mxu0 0.0
    %2481 = vmatpush1.xpose.msra.mxu0 0.0
    %2482 = vmatprep.subr.mxu0 0.0
    %2483 = vmatpush1.xpose.msra.mxu0 0.0
    %2484 = vmatprep.subr.mxu0 0.0
    %2485 = vmatpush1.xpose.msra.mxu0 0.0
    %2486 = vmatprep.subr.mxu0 0.0
    %2487 = vmatpush1.xpose.msra.mxu0 0.0
    %2488 = vmatprep.subr.mxu0 0.0
    %2489 = vmatpush1.xpose.msra.mxu0 0.0
    %2490 = vmatprep.subr.mxu0 0.0
    %2491 = vmatpush1.xpose.msra.mxu0 0.0
    %2492 = vmatprep.subr.mxu0 0.0
    %2493 = vmatpush1.xpose.msra.mxu0 0.0
    %2494 = vmatprep.subr.mxu0 0.0
    %2495 = vmatpush1.xpose.msra.mxu0 0.0
    %2496 = vmatprep.subr.mxu0 0.0
    %2497 = vmatpush1.xpose.msra.mxu0 0.0
    %2498 = vmatprep.subr.mxu0 0.0
    %2499 = vmatpush1.xpose.msra.mxu0 0.0
    %2500 = vmatprep.subr.mxu0 0.0
    %2501 = vmatpush1.xpose.msra.mxu0 0.0
    %2502 = vmatprep.subr.mxu0 0.0
    %2503 = vmatpush1.xpose.msra.mxu0 0.0
    %2504 = vmatprep.subr.mxu0 0.0
    %2505 = vmatpush1.xpose.msra.mxu0 0.0
    %2506 = vmatprep.subr.mxu0 0.0
    %2507 = vmatpush1.xpose.msra.mxu0 0.0
    %2508 = vmatprep.subr.mxu0 0.0
    %2509 = vmatpush1.xpose.msra.mxu0 0.0
    %2510 = vmatprep.subr.mxu0 0.0
    %2511 = vmatpush1.xpose.msra.mxu0 0.0
    %2512 = vmatprep.subr.mxu0 0.0
    %2513 = vmatpush1.xpose.msra.mxu0 0.0
    %2514 = vmatprep.subr.mxu0 0.0
    %2515 = vmatpush1.xpose.msra.mxu0 0.0
    %2516 = vmatprep.subr.mxu0 0.0
    %2517 = vmatpush1.xpose.msra.mxu0 0.0
    %2518 = vmatprep.subr.mxu0 0.0
    %2519 = vmatpush1.xpose.msra.mxu0 0.0
    %2520 = vmatprep.subr.mxu0 0.0
    %2521 = vmatpush1.xpose.msra.mxu0 0.0
    %2522 = vmatprep.subr.mxu0 0.0
    %2523 = vmatpush1.xpose.msra.mxu0 0.0
    %2524 = vmatprep.subr.mxu0 0.0
    %2525 = vmatpush1.xpose.msra.mxu0 0.0
    %2526 = vmatprep.subr.mxu0 0.0
    %2527 = vmatpush1.xpose.msra.mxu0 0.0
    %2528 = vmatprep.subr.mxu0 0.0
    %2529 = vmatpush1.xpose.msra.mxu0 0.0
    %2530 = vmatprep.subr.mxu0 0.0
    %2531 = vmatpush1.xpose.msra.mxu0 0.0
    %2532 = vmatprep.subr.mxu0 0.0
    %2533 = vmatpush1.xpose.msra.mxu0 0.0
    %2534 = vmatprep.subr.mxu0 0.0
    %2535 = vmatpush1.xpose.msra.mxu0 0.0
    %2536 = vmatprep.subr.mxu0 0.0
    %2537 = vmatpush1.xpose.msra.mxu0 0.0
    %2538 = vmatprep.mubr.f32.mxu0 %v1536
    %2539 = vmatmul.mubr.f32.gmra.mrb[0].mxu0 %v1535
    %v2540 = vpop.f32.mrb[0].mxu0
    %v2541 = vadd.f32 %v2456, %v2540
    %v2542 = vpop.f32.mrb[0].mxu0
    %2543 = vmatprep.mubr.f32.mxu0 %v1568
    %2544 = vmatmul.mubr.f32.gmra.mrb[0].mxu0 %v1567
    %v2545 = vpop.f32.mrb[0].mxu0
    %v2546 = vadd.f32 %v2461, %v2545
    %v2547 = vpop.f32.mrb[0].mxu0
    %2548 = vmatprep.mubr.f32.mxu0 %v1600
    %2549 = vmatmul.mubr.f32.gmra.mrb[0].mxu0 %v1599
    %v2550 = vpop.f32.mrb[0].mxu0
    %v2551 = vadd.f32 %v2466, %v2550
    %v2552 = vpop.f32.mrb[0].mxu0
    %2553 = vmatprep.mubr.f32.mxu0 %v1632
    %2554 = vmatmul.mubr.f32.gmra.mrb[0].mxu0 %v1631
    %v2555 = vpop.f32.mrb[0].mxu0
    %v2556 = vadd.f32 %v2471, %v2555
    %v2557 = vpop.f32.mrb[0].mxu0
    %2558 = vdwg.mxu0
    %2559 = vmatprep.subr.mxu0 %v1666
    %2560 = vmatpush1.xpose.msra.mxu0 %v1665
    %2561 = vmatprep.subr.mxu0 %v1698
    %2562 = vmatpush1.xpose.msra.mxu0 %v1697
    %2563 = vmatprep.subr.mxu0 0.0
    %2564 = vmatpush1.xpose.msra.mxu0 0.0
    %2565 = vmatprep.subr.mxu0 0.0
    %2566 = vmatpush1.xpose.msra.mxu0 0.0
    %2567 = vmatprep.subr.mxu0 0.0
    %2568 = vmatpush1.xpose.msra.mxu0 0.0
    %2569 = vmatprep.subr.mxu0 0.0
    %2570 = vmatpush1.xpose.msra.mxu0 0.0
    %2571 = vmatprep.subr.mxu0 0.0
    %2572 = vmatpush1.xpose.msra.mxu0 0.0
    %2573 = vmatprep.subr.mxu0 0.0
    %2574 = vmatpush1.xpose.msra.mxu0 0.0
    %2575 = vmatprep.subr.mxu0 0.0
    %2576 = vmatpush1.xpose.msra.mxu0 0.0
    %2577 = vmatprep.subr.mxu0 0.0
    %2578 = vmatpush1.xpose.msra.mxu0 0.0
    %2579 = vmatprep.subr.mxu0 0.0
    %2580 = vmatpush1.xpose.msra.mxu0 0.0
    %2581 = vmatprep.subr.mxu0 0.0
    %2582 = vmatpush1.xpose.msra.mxu0 0.0
    %2583 = vmatprep.subr.mxu0 0.0
    %2584 = vmatpush1.xpose.msra.mxu0 0.0
    %2585 = vmatprep.subr.mxu0 0.0
    %2586 = vmatpush1.xpose.msra.mxu0 0.0
    %2587 = vmatprep.subr.mxu0 0.0
    %2588 = vmatpush1.xpose.msra.mxu0 0.0
    %2589 = vmatprep.subr.mxu0 0.0
    %2590 = vmatpush1.xpose.msra.mxu0 0.0
    %2591 = vmatprep.subr.mxu0 0.0
    %2592 = vmatpush1.xpose.msra.mxu0 0.0
    %2593 = vmatprep.subr.mxu0 0.0
    %2594 = vmatpush1.xpose.msra.mxu0 0.0
    %2595 = vmatprep.subr.mxu0 0.0
    %2596 = vmatpush1.xpose.msra.mxu0 0.0
    %2597 = vmatprep.subr.mxu0 0.0
    %2598 = vmatpush1.xpose.msra.mxu0 0.0
    %2599 = vmatprep.subr.mxu0 0.0
    %2600 = vmatpush1.xpose.msra.mxu0 0.0
    %2601 = vmatprep.subr.mxu0 0.0
    %2602 = vmatpush1.xpose.msra.mxu0 0.0
    %2603 = vmatprep.subr.mxu0 0.0
    %2604 = vmatpush1.xpose.msra.mxu0 0.0
    %2605 = vmatprep.subr.mxu0 0.0
    %2606 = vmatpush1.xpose.msra.mxu0 0.0
    %2607 = vmatprep.subr.mxu0 0.0
    %2608 = vmatpush1.xpose.msra.mxu0 0.0
    %2609 = vmatprep.subr.mxu0 0.0
    %2610 = vmatpush1.xpose.msra.mxu0 0.0
    %2611 = vmatprep.subr.mxu0 0.0
    %2612 = vmatpush1.xpose.msra.mxu0 0.0
    %2613 = vmatprep.subr.mxu0 0.0
    %2614 = vmatpush1.xpose.msra.mxu0 0.0
    %2615 = vmatprep.subr.mxu0 0.0
    %2616 = vmatpush1.xpose.msra.mxu0 0.0
    %2617 = vmatprep.subr.mxu0 0.0
    %2618 = vmatpush1.xpose.msra.mxu0 0.0
    %2619 = vmatprep.subr.mxu0 0.0
    %2620 = vmatpush1.xpose.msra.mxu0 0.0
    %2621 = vmatprep.subr.mxu0 0.0
    %2622 = vmatpush1.xpose.msra.mxu0 0.0
    %2623 = vmatprep.mubr.f32.mxu0 %v1538
    %2624 = vmatmul.mubr.f32.gmra.mrb[0].mxu0 %v1537
    %v2625 = vpop.f32.mrb[0].mxu0
    %v2626 = vadd.f32 %v2541, %v2625
    %v2627 = vpop.f32.mrb[0].mxu0
    %2628 = vmatprep.mubr.f32.mxu0 %v1570
    %2629 = vmatmul.mubr.f32.gmra.mrb[0].mxu0 %v1569
    %v2630 = vpop.f32.mrb[0].mxu0
    %v2631 = vadd.f32 %v2546, %v2630
    %v2632 = vpop.f32.mrb[0].mxu0
    %2633 = vmatprep.mubr.f32.mxu0 %v1602
    %2634 = vmatmul.mubr.f32.gmra.mrb[0].mxu0 %v1601
    %v2635 = vpop.f32.mrb[0].mxu0
    %v2636 = vadd.f32 %v2551, %v2635
    %v2637 = vpop.f32.mrb[0].mxu0
    %2638 = vmatprep.mubr.f32.mxu0 %v1634
    %2639 = vmatmul.mubr.f32.gmra.mrb[0].mxu0 %v1633
    %v2640 = vpop.f32.mrb[0].mxu0
    %v2641 = vadd.f32 %v2556, %v2640
    %v2642 = vpop.f32.mrb[0].mxu0
    %2643 = vdwg.mxu0
    %2644 = vmatprep.subr.mxu0 %v1668
    %2645 = vmatpush1.xpose.msra.mxu0 %v1667
    %2646 = vmatprep.subr.mxu0 %v1700
    %2647 = vmatpush1.xpose.msra.mxu0 %v1699
    %2648 = vmatprep.subr.mxu0 0.0
    %2649 = vmatpush1.xpose.msra.mxu0 0.0
    %2650 = vmatprep.subr.mxu0 0.0
    %2651 = vmatpush1.xpose.msra.mxu0 0.0
    %2652 = vmatprep.subr.mxu0 0.0
    %2653 = vmatpush1.xpose.msra.mxu0 0.0
    %2654 = vmatprep.subr.mxu0 0.0
    %2655 = vmatpush1.xpose.msra.mxu0 0.0
    %2656 = vmatprep.subr.mxu0 0.0
    %2657 = vmatpush1.xpose.msra.mxu0 0.0
    %2658 = vmatprep.subr.mxu0 0.0
    %2659 = vmatpush1.xpose.msra.mxu0 0.0
    %2660 = vmatprep.subr.mxu0 0.0
    %2661 = vmatpush1.xpose.msra.mxu0 0.0
    %2662 = vmatprep.subr.mxu0 0.0
    %2663 = vmatpush1.xpose.msra.mxu0 0.0
    %2664 = vmatprep.subr.mxu0 0.0
    %2665 = vmatpush1.xpose.msra.mxu0 0.0
    %2666 = vmatprep.subr.mxu0 0.0
    %2667 = vmatpush1.xpose.msra.mxu0 0.0
    %2668 = vmatprep.subr.mxu0 0.0
    %2669 = vmatpush1.xpose.msra.mxu0 0.0
    %2670 = vmatprep.subr.mxu0 0.0
    %2671 = vmatpush1.xpose.msra.mxu0 0.0
    %2672 = vmatprep.subr.mxu0 0.0
    %2673 = vmatpush1.xpose.msra.mxu0 0.0
    %2674 = vmatprep.subr.mxu0 0.0
    %2675 = vmatpush1.xpose.msra.mxu0 0.0
    %2676 = vmatprep.subr.mxu0 0.0
    %2677 = vmatpush1.xpose.msra.mxu0 0.0
    %2678 = vmatprep.subr.mxu0 0.0
    %2679 = vmatpush1.xpose.msra.mxu0 0.0
    %2680 = vmatprep.subr.mxu0 0.0
    %2681 = vmatpush1.xpose.msra.mxu0 0.0
    %2682 = vmatprep.subr.mxu0 0.0
    %2683 = vmatpush1.xpose.msra.mxu0 0.0
    %2684 = vmatprep.subr.mxu0 0.0
    %2685 = vmatpush1.xpose.msra.mxu0 0.0
    %2686 = vmatprep.subr.mxu0 0.0
    %2687 = vmatpush1.xpose.msra.mxu0 0.0
    %2688 = vmatprep.subr.mxu0 0.0
    %2689 = vmatpush1.xpose.msra.mxu0 0.0
    %2690 = vmatprep.subr.mxu0 0.0
    %2691 = vmatpush1.xpose.msra.mxu0 0.0
    %2692 = vmatprep.subr.mxu0 0.0
    %2693 = vmatpush1.xpose.msra.mxu0 0.0
    %2694 = vmatprep.subr.mxu0 0.0
    %2695 = vmatpush1.xpose.msra.mxu0 0.0
    %2696 = vmatprep.subr.mxu0 0.0
    %2697 = vmatpush1.xpose.msra.mxu0 0.0
    %2698 = vmatprep.subr.mxu0 0.0
    %2699 = vmatpush1.xpose.msra.mxu0 0.0
    %2700 = vmatprep.subr.mxu0 0.0
    %2701 = vmatpush1.xpose.msra.mxu0 0.0
    %2702 = vmatprep.subr.mxu0 0.0
    %2703 = vmatpush1.xpose.msra.mxu0 0.0
    %2704 = vmatprep.subr.mxu0 0.0
    %2705 = vmatpush1.xpose.msra.mxu0 0.0
    %2706 = vmatprep.subr.mxu0 0.0
    %2707 = vmatpush1.xpose.msra.mxu0 0.0
    %2708 = vmatprep.mubr.f32.mxu0 %v1540
    %2709 = vmatmul.mubr.f32.gmra.mrb[0].mxu0 %v1539
    %v2710 = vpop.f32.mrb[0].mxu0
    %v2711 = vadd.f32 %v2626, %v2710
    %v2712 = vpop.f32.mrb[0].mxu0
    %2713 = vmatprep.mubr.f32.mxu0 %v1572
    %2714 = vmatmul.mubr.f32.gmra.mrb[0].mxu0 %v1571
    %v2715 = vpop.f32.mrb[0].mxu0
    %v2716 = vadd.f32 %v2631, %v2715
    %v2717 = vpop.f32.mrb[0].mxu0
    %2718 = vmatprep.mubr.f32.mxu0 %v1604
    %2719 = vmatmul.mubr.f32.gmra.mrb[0].mxu0 %v1603
    %v2720 = vpop.f32.mrb[0].mxu0
    %v2721 = vadd.f32 %v2636, %v2720
    %v2722 = vpop.f32.mrb[0].mxu0
    %2723 = vmatprep.mubr.f32.mxu0 %v1636
    %2724 = vmatmul.mubr.f32.gmra.mrb[0].mxu0 %v1635
    %v2725 = vpop.f32.mrb[0].mxu0
    %v2726 = vadd.f32 %v2641, %v2725
    %v2727 = vpop.f32.mrb[0].mxu0
    %2728 = vdwg.mxu0
    %2729 = vmatprep.subr.mxu0 %v1670
    %2730 = vmatpush1.xpose.msra.mxu0 %v1669
    %2731 = vmatprep.subr.mxu0 %v1702
    %2732 = vmatpush1.xpose.msra.mxu0 %v1701
    %2733 = vmatprep.subr.mxu0 0.0
    %2734 = vmatpush1.xpose.msra.mxu0 0.0
    %2735 = vmatprep.subr.mxu0 0.0
    %2736 = vmatpush1.xpose.msra.mxu0 0.0
    %2737 = vmatprep.subr.mxu0 0.0
    %2738 = vmatpush1.xpose.msra.mxu0 0.0
    %2739 = vmatprep.subr.mxu0 0.0
    %2740 = vmatpush1.xpose.msra.mxu0 0.0
    %2741 = vmatprep.subr.mxu0 0.0
    %2742 = vmatpush1.xpose.msra.mxu0 0.0
    %2743 = vmatprep.subr.mxu0 0.0
    %2744 = vmatpush1.xpose.msra.mxu0 0.0
    %2745 = vmatprep.subr.mxu0 0.0
    %2746 = vmatpush1.xpose.msra.mxu0 0.0
    %2747 = vmatprep.subr.mxu0 0.0
    %2748 = vmatpush1.xpose.msra.mxu0 0.0
    %2749 = vmatprep.subr.mxu0 0.0
    %2750 = vmatpush1.xpose.msra.mxu0 0.0
    %2751 = vmatprep.subr.mxu0 0.0
    %2752 = vmatpush1.xpose.msra.mxu0 0.0
    %2753 = vmatprep.subr.mxu0 0.0
    %2754 = vmatpush1.xpose.msra.mxu0 0.0
    %2755 = vmatprep.subr.mxu0 0.0
    %2756 = vmatpush1.xpose.msra.mxu0 0.0
    %2757 = vmatprep.subr.mxu0 0.0
    %2758 = vmatpush1.xpose.msra.mxu0 0.0
    %2759 = vmatprep.subr.mxu0 0.0
    %2760 = vmatpush1.xpose.msra.mxu0 0.0
    %2761 = vmatprep.subr.mxu0 0.0
    %2762 = vmatpush1.xpose.msra.mxu0 0.0
    %2763 = vmatprep.subr.mxu0 0.0
    %2764 = vmatpush1.xpose.msra.mxu0 0.0
    %2765 = vmatprep.subr.mxu0 0.0
    %2766 = vmatpush1.xpose.msra.mxu0 0.0
    %2767 = vmatprep.subr.mxu0 0.0
    %2768 = vmatpush1.xpose.msra.mxu0 0.0
    %2769 = vmatprep.subr.mxu0 0.0
    %2770 = vmatpush1.xpose.msra.mxu0 0.0
    %2771 = vmatprep.subr.mxu0 0.0
    %2772 = vmatpush1.xpose.msra.mxu0 0.0
    %2773 = vmatprep.subr.mxu0 0.0
    %2774 = vmatpush1.xpose.msra.mxu0 0.0
    %2775 = vmatprep.subr.mxu0 0.0
    %2776 = vmatpush1.xpose.msra.mxu0 0.0
    %2777 = vmatprep.subr.mxu0 0.0
    %2778 = vmatpush1.xpose.msra.mxu0 0.0
    %2779 = vmatprep.subr.mxu0 0.0
    %2780 = vmatpush1.xpose.msra.mxu0 0.0
    %2781 = vmatprep.subr.mxu0 0.0
    %2782 = vmatpush1.xpose.msra.mxu0 0.0
    %2783 = vmatprep.subr.mxu0 0.0
    %2784 = vmatpush1.xpose.msra.mxu0 0.0
    %2785 = vmatprep.subr.mxu0 0.0
    %2786 = vmatpush1.xpose.msra.mxu0 0.0
    %2787 = vmatprep.subr.mxu0 0.0
    %2788 = vmatpush1.xpose.msra.mxu0 0.0
    %2789 = vmatprep.subr.mxu0 0.0
    %2790 = vmatpush1.xpose.msra.mxu0 0.0
    %2791 = vmatprep.subr.mxu0 0.0
    %2792 = vmatpush1.xpose.msra.mxu0 0.0
    %2793 = vmatprep.mubr.f32.mxu0 %v1542
    %2794 = vmatmul.mubr.f32.gmra.mrb[0].mxu0 %v1541
    %v2795 = vpop.f32.mrb[0].mxu0
    %v2796 = vadd.f32 %v2711, %v2795
    %v2797 = vpop.f32.mrb[0].mxu0
    %2798 = vmatprep.mubr.f32.mxu0 %v1574
    %2799 = vmatmul.mubr.f32.gmra.mrb[0].mxu0 %v1573
    %v2800 = vpop.f32.mrb[0].mxu0
    %v2801 = vadd.f32 %v2716, %v2800
    %v2802 = vpop.f32.mrb[0].mxu0
    %2803 = vmatprep.mubr.f32.mxu0 %v1606
    %2804 = vmatmul.mubr.f32.gmra.mrb[0].mxu0 %v1605
    %v2805 = vpop.f32.mrb[0].mxu0
    %v2806 = vadd.f32 %v2721, %v2805
    %v2807 = vpop.f32.mrb[0].mxu0
    %2808 = vmatprep.mubr.f32.mxu0 %v1638
    %2809 = vmatmul.mubr.f32.gmra.mrb[0].mxu0 %v1637
    %v2810 = vpop.f32.mrb[0].mxu0
    %v2811 = vadd.f32 %v2726, %v2810
    %v2812 = vpop.f32.mrb[0].mxu0
    %2813 = vdwg.mxu0
    %2814 = vmatprep.subr.mxu0 %v1672
    %2815 = vmatpush1.xpose.msra.mxu0 %v1671
    %2816 = vmatprep.subr.mxu0 %v1704
    %2817 = vmatpush1.xpose.msra.mxu0 %v1703
    %2818 = vmatprep.subr.mxu0 0.0
    %2819 = vmatpush1.xpose.msra.mxu0 0.0
    %2820 = vmatprep.subr.mxu0 0.0
    %2821 = vmatpush1.xpose.msra.mxu0 0.0
    %2822 = vmatprep.subr.mxu0 0.0
    %2823 = vmatpush1.xpose.msra.mxu0 0.0
    %2824 = vmatprep.subr.mxu0 0.0
    %2825 = vmatpush1.xpose.msra.mxu0 0.0
    %2826 = vmatprep.subr.mxu0 0.0
    %2827 = vmatpush1.xpose.msra.mxu0 0.0
    %2828 = vmatprep.subr.mxu0 0.0
    %2829 = vmatpush1.xpose.msra.mxu0 0.0
    %2830 = vmatprep.subr.mxu0 0.0
    %2831 = vmatpush1.xpose.msra.mxu0 0.0
    %2832 = vmatprep.subr.mxu0 0.0
    %2833 = vmatpush1.xpose.msra.mxu0 0.0
    %2834 = vmatprep.subr.mxu0 0.0
    %2835 = vmatpush1.xpose.msra.mxu0 0.0
    %2836 = vmatprep.subr.mxu0 0.0
    %2837 = vmatpush1.xpose.msra.mxu0 0.0
    %2838 = vmatprep.subr.mxu0 0.0
    %2839 = vmatpush1.xpose.msra.mxu0 0.0
    %2840 = vmatprep.subr.mxu0 0.0
    %2841 = vmatpush1.xpose.msra.mxu0 0.0
    %2842 = vmatprep.subr.mxu0 0.0
    %2843 = vmatpush1.xpose.msra.mxu0 0.0
    %2844 = vmatprep.subr.mxu0 0.0
    %2845 = vmatpush1.xpose.msra.mxu0 0.0
    %2846 = vmatprep.subr.mxu0 0.0
    %2847 = vmatpush1.xpose.msra.mxu0 0.0
    %2848 = vmatprep.subr.mxu0 0.0
    %2849 = vmatpush1.xpose.msra.mxu0 0.0
    %2850 = vmatprep.subr.mxu0 0.0
    %2851 = vmatpush1.xpose.msra.mxu0 0.0
    %2852 = vmatprep.subr.mxu0 0.0
    %2853 = vmatpush1.xpose.msra.mxu0 0.0
    %2854 = vmatprep.subr.mxu0 0.0
    %2855 = vmatpush1.xpose.msra.mxu0 0.0
    %2856 = vmatprep.subr.mxu0 0.0
    %2857 = vmatpush1.xpose.msra.mxu0 0.0
    %2858 = vmatprep.subr.mxu0 0.0
    %2859 = vmatpush1.xpose.msra.mxu0 0.0
    %2860 = vmatprep.subr.mxu0 0.0
    %2861 = vmatpush1.xpose.msra.mxu0 0.0
    %2862 = vmatprep.subr.mxu0 0.0
    %2863 = vmatpush1.xpose.msra.mxu0 0.0
    %2864 = vmatprep.subr.mxu0 0.0
    %2865 = vmatpush1.xpose.msra.mxu0 0.0
    %2866 = vmatprep.subr.mxu0 0.0
    %2867 = vmatpush1.xpose.msra.mxu0 0.0
    %2868 = vmatprep.subr.mxu0 0.0
    %2869 = vmatpush1.xpose.msra.mxu0 0.0
    %2870 = vmatprep.subr.mxu0 0.0
    %2871 = vmatpush1.xpose.msra.mxu0 0.0
    %2872 = vmatprep.subr.mxu0 0.0
    %2873 = vmatpush1.xpose.msra.mxu0 0.0
    %2874 = vmatprep.subr.mxu0 0.0
    %2875 = vmatpush1.xpose.msra.mxu0 0.0
    %2876 = vmatprep.subr.mxu0 0.0
    %2877 = vmatpush1.xpose.msra.mxu0 0.0
    %2878 = vmatprep.mubr.f32.mxu0 %v1544
    %2879 = vmatmul.mubr.f32.gmra.mrb[0].mxu0 %v1543
    %v2880 = vpop.f32.mrb[0].mxu0
    %v2881 = vadd.f32 %v2796, %v2880
    %v2882 = vpop.f32.mrb[0].mxu0
    %2883 = vmatprep.mubr.f32.mxu0 %v1576
    %2884 = vmatmul.mubr.f32.gmra.mrb[0].mxu0 %v1575
    %v2885 = vpop.f32.mrb[0].mxu0
    %v2886 = vadd.f32 %v2801, %v2885
    %v2887 = vpop.f32.mrb[0].mxu0
    %2888 = vmatprep.mubr.f32.mxu0 %v1608
    %2889 = vmatmul.mubr.f32.gmra.mrb[0].mxu0 %v1607
    %v2890 = vpop.f32.mrb[0].mxu0
    %v2891 = vadd.f32 %v2806, %v2890
    %v2892 = vpop.f32.mrb[0].mxu0
    %2893 = vmatprep.mubr.f32.mxu0 %v1640
    %2894 = vmatmul.mubr.f32.gmra.mrb[0].mxu0 %v1639
    %v2895 = vpop.f32.mrb[0].mxu0
    %v2896 = vadd.f32 %v2811, %v2895
    %v2897 = vpop.f32.mrb[0].mxu0
    %2898 = vdwg.mxu0
    %2899 = vmatprep.subr.mxu0 %v1674
    %2900 = vmatpush1.xpose.msra.mxu0 %v1673
    %2901 = vmatprep.subr.mxu0 %v1706
    %2902 = vmatpush1.xpose.msra.mxu0 %v1705
    %2903 = vmatprep.subr.mxu0 0.0
    %2904 = vmatpush1.xpose.msra.mxu0 0.0
    %2905 = vmatprep.subr.mxu0 0.0
    %2906 = vmatpush1.xpose.msra.mxu0 0.0
    %2907 = vmatprep.subr.mxu0 0.0
    %2908 = vmatpush1.xpose.msra.mxu0 0.0
    %2909 = vmatprep.subr.mxu0 0.0
    %2910 = vmatpush1.xpose.msra.mxu0 0.0
    %2911 = vmatprep.subr.mxu0 0.0
    %2912 = vmatpush1.xpose.msra.mxu0 0.0
    %2913 = vmatprep.subr.mxu0 0.0
    %2914 = vmatpush1.xpose.msra.mxu0 0.0
    %2915 = vmatprep.subr.mxu0 0.0
    %2916 = vmatpush1.xpose.msra.mxu0 0.0
    %2917 = vmatprep.subr.mxu0 0.0
    %2918 = vmatpush1.xpose.msra.mxu0 0.0
    %2919 = vmatprep.subr.mxu0 0.0
    %2920 = vmatpush1.xpose.msra.mxu0 0.0
    %2921 = vmatprep.subr.mxu0 0.0
    %2922 = vmatpush1.xpose.msra.mxu0 0.0
    %2923 = vmatprep.subr.mxu0 0.0
    %2924 = vmatpush1.xpose.msra.mxu0 0.0
    %2925 = vmatprep.subr.mxu0 0.0
    %2926 = vmatpush1.xpose.msra.mxu0 0.0
    %2927 = vmatprep.subr.mxu0 0.0
    %2928 = vmatpush1.xpose.msra.mxu0 0.0
    %2929 = vmatprep.subr.mxu0 0.0
    %2930 = vmatpush1.xpose.msra.mxu0 0.0
    %2931 = vmatprep.subr.mxu0 0.0
    %2932 = vmatpush1.xpose.msra.mxu0 0.0
    %2933 = vmatprep.subr.mxu0 0.0
    %2934 = vmatpush1.xpose.msra.mxu0 0.0
    %2935 = vmatprep.subr.mxu0 0.0
    %2936 = vmatpush1.xpose.msra.mxu0 0.0
    %2937 = vmatprep.subr.mxu0 0.0
    %2938 = vmatpush1.xpose.msra.mxu0 0.0
    %2939 = vmatprep.subr.mxu0 0.0
    %2940 = vmatpush1.xpose.msra.mxu0 0.0
    %2941 = vmatprep.subr.mxu0 0.0
    %2942 = vmatpush1.xpose.msra.mxu0 0.0
    %2943 = vmatprep.subr.mxu0 0.0
    %2944 = vmatpush1.xpose.msra.mxu0 0.0
    %2945 = vmatprep.subr.mxu0 0.0
    %2946 = vmatpush1.xpose.msra.mxu0 0.0
    %2947 = vmatprep.subr.mxu0 0.0
    %2948 = vmatpush1.xpose.msra.mxu0 0.0
    %2949 = vmatprep.subr.mxu0 0.0
    %2950 = vmatpush1.xpose.msra.mxu0 0.0
    %2951 = vmatprep.subr.mxu0 0.0
    %2952 = vmatpush1.xpose.msra.mxu0 0.0
    %2953 = vmatprep.subr.mxu0 0.0
    %2954 = vmatpush1.xpose.msra.mxu0 0.0
    %2955 = vmatprep.subr.mxu0 0.0
    %2956 = vmatpush1.xpose.msra.mxu0 0.0
    %2957 = vmatprep.subr.mxu0 0.0
    %2958 = vmatpush1.xpose.msra.mxu0 0.0
    %2959 = vmatprep.subr.mxu0 0.0
    %2960 = vmatpush1.xpose.msra.mxu0 0.0
    %2961 = vmatprep.subr.mxu0 0.0
    %2962 = vmatpush1.xpose.msra.mxu0 0.0
    %2963 = vmatprep.mubr.f32.mxu0 %v1546
    %2964 = vmatmul.mubr.f32.gmra.mrb[0].mxu0 %v1545
    %v2965 = vpop.f32.mrb[0].mxu0
    %v2966 = vadd.f32 %v2881, %v2965
    %v2967 = vpop.f32.mrb[0].mxu0
    %2968 = vmatprep.mubr.f32.mxu0 %v1578
    %2969 = vmatmul.mubr.f32.gmra.mrb[0].mxu0 %v1577
    %v2970 = vpop.f32.mrb[0].mxu0
    %v2971 = vadd.f32 %v2886, %v2970
    %v2972 = vpop.f32.mrb[0].mxu0
    %2973 = vmatprep.mubr.f32.mxu0 %v1610
    %2974 = vmatmul.mubr.f32.gmra.mrb[0].mxu0 %v1609
    %v2975 = vpop.f32.mrb[0].mxu0
    %v2976 = vadd.f32 %v2891, %v2975
    %v2977 = vpop.f32.mrb[0].mxu0
    %2978 = vmatprep.mubr.f32.mxu0 %v1642
    %2979 = vmatmul.mubr.f32.gmra.mrb[0].mxu0 %v1641
    %v2980 = vpop.f32.mrb[0].mxu0
    %v2981 = vadd.f32 %v2896, %v2980
    %v2982 = vpop.f32.mrb[0].mxu0
    %2983 = vdwg.mxu0
    %2984 = vmatprep.subr.mxu0 %v1676
    %2985 = vmatpush1.xpose.msra.mxu0 %v1675
    %2986 = vmatprep.subr.mxu0 %v1708
    %2987 = vmatpush1.xpose.msra.mxu0 %v1707
    %2988 = vmatprep.subr.mxu0 0.0
    %2989 = vmatpush1.xpose.msra.mxu0 0.0
    %2990 = vmatprep.subr.mxu0 0.0
    %2991 = vmatpush1.xpose.msra.mxu0 0.0
    %2992 = vmatprep.subr.mxu0 0.0
    %2993 = vmatpush1.xpose.msra.mxu0 0.0
    %2994 = vmatprep.subr.mxu0 0.0
    %2995 = vmatpush1.xpose.msra.mxu0 0.0
    %2996 = vmatprep.subr.mxu0 0.0
    %2997 = vmatpush1.xpose.msra.mxu0 0.0
    %2998 = vmatprep.subr.mxu0 0.0
    %2999 = vmatpush1.xpose.msra.mxu0 0.0
    %3000 = vmatprep.subr.mxu0 0.0
    %3001 = vmatpush1.xpose.msra.mxu0 0.0
    %3002 = vmatprep.subr.mxu0 0.0
    %3003 = vmatpush1.xpose.msra.mxu0 0.0
    %3004 = vmatprep.subr.mxu0 0.0
    %3005 = vmatpush1.xpose.msra.mxu0 0.0
    %3006 = vmatprep.subr.mxu0 0.0
    %3007 = vmatpush1.xpose.msra.mxu0 0.0
    %3008 = vmatprep.subr.mxu0 0.0
    %3009 = vmatpush1.xpose.msra.mxu0 0.0
    %3010 = vmatprep.subr.mxu0 0.0
    %3011 = vmatpush1.xpose.msra.mxu0 0.0
    %3012 = vmatprep.subr.mxu0 0.0
    %3013 = vmatpush1.xpose.msra.mxu0 0.0
    %3014 = vmatprep.subr.mxu0 0.0
    %3015 = vmatpush1.xpose.msra.mxu0 0.0
    %3016 = vmatprep.subr.mxu0 0.0
    %3017 = vmatpush1.xpose.msra.mxu0 0.0
    %3018 = vmatprep.subr.mxu0 0.0
    %3019 = vmatpush1.xpose.msra.mxu0 0.0
    %3020 = vmatprep.subr.mxu0 0.0
    %3021 = vmatpush1.xpose.msra.mxu0 0.0
    %3022 = vmatprep.subr.mxu0 0.0
    %3023 = vmatpush1.xpose.msra.mxu0 0.0
    %3024 = vmatprep.subr.mxu0 0.0
    %3025 = vmatpush1.xpose.msra.mxu0 0.0
    %3026 = vmatprep.subr.mxu0 0.0
    %3027 = vmatpush1.xpose.msra.mxu0 0.0
    %3028 = vmatprep.subr.mxu0 0.0
    %3029 = vmatpush1.xpose.msra.mxu0 0.0
    %3030 = vmatprep.subr.mxu0 0.0
    %3031 = vmatpush1.xpose.msra.mxu0 0.0
    %3032 = vmatprep.subr.mxu0 0.0
    %3033 = vmatpush1.xpose.msra.mxu0 0.0
    %3034 = vmatprep.subr.mxu0 0.0
    %3035 = vmatpush1.xpose.msra.mxu0 0.0
    %3036 = vmatprep.subr.mxu0 0.0
    %3037 = vmatpush1.xpose.msra.mxu0 0.0
    %3038 = vmatprep.subr.mxu0 0.0
    %3039 = vmatpush1.xpose.msra.mxu0 0.0
    %3040 = vmatprep.subr.mxu0 0.0
    %3041 = vmatpush1.xpose.msra.mxu0 0.0
    %3042 = vmatprep.subr.mxu0 0.0
    %3043 = vmatpush1.xpose.msra.mxu0 0.0
    %3044 = vmatprep.subr.mxu0 0.0
    %3045 = vmatpush1.xpose.msra.mxu0 0.0
    %3046 = vmatprep.subr.mxu0 0.0
    %3047 = vmatpush1.xpose.msra.mxu0 0.0
    %3048 = vmatprep.mubr.f32.mxu0 %v1548
    %3049 = vmatmul.mubr.f32.gmra.mrb[0].mxu0 %v1547
    %v3050 = vpop.f32.mrb[0].mxu0
    %v3051 = vadd.f32 %v2966, %v3050
    %v3052 = vpop.f32.mrb[0].mxu0
    %3053 = vmatprep.mubr.f32.mxu0 %v1580
    %3054 = vmatmul.mubr.f32.gmra.mrb[0].mxu0 %v1579
    %v3055 = vpop.f32.mrb[0].mxu0
    %v3056 = vadd.f32 %v2971, %v3055
    %v3057 = vpop.f32.mrb[0].mxu0
    %3058 = vmatprep.mubr.f32.mxu0 %v1612
    %3059 = vmatmul.mubr.f32.gmra.mrb[0].mxu0 %v1611
    %v3060 = vpop.f32.mrb[0].mxu0
    %v3061 = vadd.f32 %v2976, %v3060
    %v3062 = vpop.f32.mrb[0].mxu0
    %3063 = vmatprep.mubr.f32.mxu0 %v1644
    %3064 = vmatmul.mubr.f32.gmra.mrb[0].mxu0 %v1643
    %v3065 = vpop.f32.mrb[0].mxu0
    %v3066 = vadd.f32 %v2981, %v3065
    %v3067 = vpop.f32.mrb[0].mxu0
    %3068 = vdwg.mxu0
    %v3069 = vld [vmem:[%s2 + $0x8] sm:$0xff]
    %v3070 = vld [vmem:[%s2 + $0x10] sm:$0xff]
    %v3071 = vld [vmem:[%s2 + $0x18] sm:$0xff]
    %v3072 = vld [vmem:[%s2 + $0x20] sm:$0xff]
    %v3073 = vld [vmem:[%s2 + $0x28] sm:$0x1]
    %v3074 = vlaneseq
    %v3075 = vshrl.u32 %v3074, 7
    %v3076 = vsub.s32 0, %v3075
    %v3077 = vrot.slane %v3073, %v3076
    %3078 = vxpose.xlu0.b32.start [1/16] %v3051, 128
    %3079 = vxpose.xlu0.b32.cont [2/16] %v3056, 128
    %3080 = vxpose.xlu0.b32.cont [3/16] %v3061, 128
    %3081 = vxpose.xlu0.b32.cont [4/16] %v3066, 128
    %3082 = vxpose.xlu0.b32.cont [5/16] 0.0, 128
    %3083 = vxpose.xlu0.b32.cont [6/16] 0.0, 128
    %3084 = vxpose.xlu0.b32.cont [7/16] 0.0, 128
    %3085 = vxpose.xlu0.b32.cont [8/16] 0.0, 128
    %3086 = vxpose.xlu0.b32.cont [9/16] 0.0, 128
    %3087 = vxpose.xlu0.b32.cont [10/16] 0.0, 128
    %3088 = vxpose.xlu0.b32.cont [11/16] 0.0, 128
    %3089 = vxpose.xlu0.b32.cont [12/16] 0.0, 128
    %3090 = vxpose.xlu0.b32.cont [13/16] 0.0, 128
    %3091 = vxpose.xlu0.b32.cont [14/16] 0.0, 128
    %3092 = vxpose.xlu0.b32.cont [15/16] 0.0, 128
    %3093 = vxpose.xlu0.b32.end [16/16] 0.0, 128
    %v3094 = vpop.trf.xlu0
    %v3095 = vpop.trf.xlu0
    %v3096 = vpop.trf.xlu0
    %v3097 = vpop.trf.xlu0
    %v3098 = vpop.trf.xlu0
    %v3099 = vpop.trf.xlu0
    %v3100 = vpop.trf.xlu0
    %v3101 = vpop.trf.xlu0
    %v3102 = vpop.trf.xlu0
    %v3103 = vpop.trf.xlu0
    %v3104 = vpop.trf.xlu0
    %v3105 = vpop.trf.xlu0
    %v3106 = vpop.trf.xlu0
    %v3107 = vpop.trf.xlu0
    %v3108 = vpop.trf.xlu0
    %v3109 = vpop.trf.xlu0
    %vm3110 = vcmask 261120
    %v3112 = vsel %vm3110, %v3094, 0
    %v3115 = vsel %vm3110, %v3095, 0
    %3117 = vmatprep.subr.mxu0 0.0
    %3118 = vmatpush1.msra.mxu0 %v3069
    %3119 = vmatprep.subr.mxu0 0.0
    %3120 = vmatpush1.msra.mxu0 %v3070
    %3121 = vmatprep.subr.mxu0 0.0
    %3122 = vmatpush1.msra.mxu0 %v3071
    %3123 = vmatprep.subr.mxu0 0.0
    %3124 = vmatpush1.msra.mxu0 %v3072
    %3125 = vmatprep.subr.mxu0 0.0
    %3126 = vmatpush1.msra.mxu0 0.0
    %3127 = vmatprep.subr.mxu0 0.0
    %3128 = vmatpush1.msra.mxu0 0.0
    %3129 = vmatprep.subr.mxu0 0.0
    %3130 = vmatpush1.msra.mxu0 0.0
    %3131 = vmatprep.subr.mxu0 0.0
    %3132 = vmatpush1.msra.mxu0 0.0
    %3133 = vmatprep.subr.mxu0 0.0
    %3134 = vmatpush1.msra.mxu0 0.0
    %3135 = vmatprep.subr.mxu0 0.0
    %3136 = vmatpush1.msra.mxu0 0.0
    %3137 = vmatprep.subr.mxu0 0.0
    %3138 = vmatpush1.msra.mxu0 0.0
    %3139 = vmatprep.subr.mxu0 0.0
    %3140 = vmatpush1.msra.mxu0 0.0
    %3141 = vmatprep.subr.mxu0 0.0
    %3142 = vmatpush1.msra.mxu0 0.0
    %3143 = vmatprep.subr.mxu0 0.0
    %3144 = vmatpush1.msra.mxu0 0.0
    %3145 = vmatprep.subr.mxu0 0.0
    %3146 = vmatpush1.msra.mxu0 0.0
    %3147 = vmatprep.subr.mxu0 0.0
    %3148 = vmatpush1.msra.mxu0 0.0
    %3149 = vmatprep.subr.mxu0 0.0
    %3150 = vmatpush1.msra.mxu0 0.0
    %3151 = vmatprep.subr.mxu0 0.0
    %3152 = vmatpush1.msra.mxu0 0.0
    %3153 = vmatprep.subr.mxu0 0.0
    %3154 = vmatpush1.msra.mxu0 0.0
    %3155 = vmatprep.subr.mxu0 0.0
    %3156 = vmatpush1.msra.mxu0 0.0
    %3157 = vmatprep.subr.mxu0 0.0
    %3158 = vmatpush1.msra.mxu0 0.0
    %3159 = vmatprep.subr.mxu0 0.0
    %3160 = vmatpush1.msra.mxu0 0.0
    %3161 = vmatprep.subr.mxu0 0.0
    %3162 = vmatpush1.msra.mxu0 0.0
    %3163 = vmatprep.subr.mxu0 0.0
    %3164 = vmatpush1.msra.mxu0 0.0
    %3165 = vmatprep.subr.mxu0 0.0
    %3166 = vmatpush1.msra.mxu0 0.0
    %3167 = vmatprep.subr.mxu0 0.0
    %3168 = vmatpush1.msra.mxu0 0.0
    %3169 = vmatprep.subr.mxu0 0.0
    %3170 = vmatpush1.msra.mxu0 0.0
    %3171 = vmatprep.subr.mxu0 0.0
    %3172 = vmatpush1.msra.mxu0 0.0
    %3173 = vmatprep.subr.mxu0 0.0
    %3174 = vmatpush1.msra.mxu0 0.0
    %3175 = vmatprep.subr.mxu0 0.0
    %3176 = vmatpush1.msra.mxu0 0.0
    %3177 = vmatprep.subr.mxu0 0.0
    %3178 = vmatpush1.msra.mxu0 0.0
    %3179 = vmatprep.subr.mxu0 0.0
    %3180 = vmatpush1.msra.mxu0 0.0
    %3181 = vmatprep.mubr.f32.mxu0 0.0
    %3182 = vmatmul.mubr.f32.gmra.mrb[0].mxu0 %v3112
    %v3183 = vpop.f32.mrb[0].mxu0
    %v3184 = vadd.f32 %v3077, %v3183
    %v3185 = vpop.f32.mrb[0].mxu0
    %3186 = vmatprep.mubr.f32.mxu0 0.0
    %3187 = vmatmul.mubr.f32.gmra.mrb[0].mxu0 %v3115
    %v3188 = vpop.f32.mrb[0].mxu0
    %v3189 = vadd.f32 %v3077, %v3188
    %v3190 = vpop.f32.mrb[0].mxu0
    %3191 = vdwg.mxu0
    %v3192 = vmax.f32 %v3184, 0.0
    %v3193 = vmax.f32 %v3189, 0.0
    %v3194 = vld [vmem:[%s2 + $0x30] sm:$0xff]
    %v3195 = vld [vmem:[%s2 + $0x38] sm:$0xff]
    %v3196 = vld [vmem:[%s2 + $0x40] sm:$0xff]
    %v3197 = vld [vmem:[%s2 + $0x48] sm:$0xff]
    %v3198 = vld [vmem:[%s2 + $0x50] sm:$0x1]
    %v3199 = vld [vmem:[%s2 + $0x58] sm:$0xff]
    %v3200 = vlaneseq
    %v3201 = vshrl.u32 %v3200, 7
    %v3202 = vsub.s32 0, %v3201
    %v3203 = vrot.slane %v3198, %v3202
    %v3205 = vsel %vm3110, %v3192, 0
    %3207 = vmatprep.subr.mxu0 0.0
    %3208 = vmatpush1.msra.mxu0 %v3194
    %3209 = vmatprep.subr.mxu0 0.0
    %3210 = vmatpush1.msra.mxu0 %v3195
    %3211 = vmatprep.subr.mxu0 0.0
    %3212 = vmatpush1.msra.mxu0 %v3196
    %3213 = vmatprep.subr.mxu0 0.0
    %3214 = vmatpush1.msra.mxu0 %v3197
    %3215 = vmatprep.subr.mxu0 0.0
    %3216 = vmatpush1.msra.mxu0 0.0
    %3217 = vmatprep.subr.mxu0 0.0
    %3218 = vmatpush1.msra.mxu0 0.0
    %3219 = vmatprep.subr.mxu0 0.0
    %3220 = vmatpush1.msra.mxu0 0.0
    %3221 = vmatprep.subr.mxu0 0.0
    %3222 = vmatpush1.msra.mxu0 0.0
    %3223 = vmatprep.subr.mxu0 0.0
    %3224 = vmatpush1.msra.mxu0 0.0
    %3225 = vmatprep.subr.mxu0 0.0
    %3226 = vmatpush1.msra.mxu0 0.0
    %3227 = vmatprep.subr.mxu0 0.0
    %3228 = vmatpush1.msra.mxu0 0.0
    %3229 = vmatprep.subr.mxu0 0.0
    %3230 = vmatpush1.msra.mxu0 0.0
    %3231 = vmatprep.subr.mxu0 0.0
    %3232 = vmatpush1.msra.mxu0 0.0
    %3233 = vmatprep.subr.mxu0 0.0
    %3234 = vmatpush1.msra.mxu0 0.0
    %3235 = vmatprep.subr.mxu0 0.0
    %3236 = vmatpush1.msra.mxu0 0.0
    %3237 = vmatprep.subr.mxu0 0.0
    %3238 = vmatpush1.msra.mxu0 0.0
    %3239 = vmatprep.subr.mxu0 0.0
    %3240 = vmatpush1.msra.mxu0 0.0
    %3241 = vmatprep.subr.mxu0 0.0
    %3242 = vmatpush1.msra.mxu0 0.0
    %3243 = vmatprep.subr.mxu0 0.0
    %3244 = vmatpush1.msra.mxu0 0.0
    %3245 = vmatprep.subr.mxu0 0.0
    %3246 = vmatpush1.msra.mxu0 0.0
    %3247 = vmatprep.subr.mxu0 0.0
    %3248 = vmatpush1.msra.mxu0 0.0
    %3249 = vmatprep.subr.mxu0 0.0
    %3250 = vmatpush1.msra.mxu0 0.0
    %3251 = vmatprep.subr.mxu0 0.0
    %3252 = vmatpush1.msra.mxu0 0.0
    %3253 = vmatprep.subr.mxu0 0.0
    %3254 = vmatpush1.msra.mxu0 0.0
    %3255 = vmatprep.subr.mxu0 0.0
    %3256 = vmatpush1.msra.mxu0 0.0
    %3257 = vmatprep.subr.mxu0 0.0
    %3258 = vmatpush1.msra.mxu0 0.0
    %3259 = vmatprep.subr.mxu0 0.0
    %3260 = vmatpush1.msra.mxu0 0.0
    %3261 = vmatprep.subr.mxu0 0.0
    %3262 = vmatpush1.msra.mxu0 0.0
    %3263 = vmatprep.subr.mxu0 0.0
    %3264 = vmatpush1.msra.mxu0 0.0
    %3265 = vmatprep.subr.mxu0 0.0
    %3266 = vmatpush1.msra.mxu0 0.0
    %3267 = vmatprep.subr.mxu0 0.0
    %3268 = vmatpush1.msra.mxu0 0.0
    %3269 = vmatprep.subr.mxu0 0.0
    %3270 = vmatpush1.msra.mxu0 0.0
    %3271 = vmatprep.mubr.f32.mxu0 0.0
    %3272 = vmatmul.mubr.f32.gmra.mrb[0].mxu0 %v3205
    %v3273 = vpop.f32.mrb[0].mxu0
    %v3274 = vadd.f32 %v3203, %v3273
    %v3275 = vpop.f32.mrb[0].mxu0
    %3276 = vdwg.mxu0
    %v3277 = vsel %vm3110, %v3274, -inf
    %3278 = vmax.xlane.f32.xlu0 %v3277
    %v3279 = vpop.xlane.xlu0 %3278
    %v3280 = vsub.f32 %v3274, %v3279
    %v3281 = vmul.f32 %v3280, 1.442695
    %v3282 = vpow.pop %v3281
    %v3283 = vsel %vm3110, %v3282, 0.0
    %3284 = vadd.xlane.f32.xlu0 %v3283
    %v3285 = vpop.xlane.xlu0 %3284
    %v3286 = vlog2.pop %v3285
    %v3287 = vmul.f32 %v3286, 0.6931472
    %v3288 = vsub.f32 %v3280, %v3287
    %v3289 = vmul.f32 %v3199, %v3288
    %v3290 = vsel %vm3110, %v3289, 0.0
    %3291 = vadd.xlane.f32.xlu0 %v3290
    %v3292 = vpop.xlane.xlu0 %3291
    %v3293 = vrot.slane %v3292, 4
    %v3294 = vadd.f32 %v3292, %v3293
    %v3295 = vrot.slane %v3294, 2
    %v3296 = vadd.f32 %v3294, %v3295
    %v3297 = vrot.slane %v3296, 1
    %v3298 = vadd.f32 %v3296, %v3297
    %s3299 = vtos %v3298
    %s3300 = ssub.f32 0.0, %s3299
    %s3301 = smul.f32 %s3300, 0.125
    %v3302 = vmul.f32 %v3192, %v3192
    %v3303 = vmul.f32 %v3193, %v3193
    %v3304 = vsel %vm3110, %v3302, 0.0
    %3305 = vadd.xlane.f32.xlu0 %v3304
    %v3306 = vpop.xlane.xlu0 %3305
    %v3307 = vsel %vm3110, %v3303, 0.0
    %3308 = vadd.xlane.f32.xlu0 %v3307
    %v3309 = vpop.xlane.xlu0 %3308
    %v3311 = vsel %vm3110, %v3193, 0
    %3313 = vmatprep.subr.mxu0 0.0
    %3314 = vmatpush1.xpose.msra.mxu0 %v3205
    %3315 = vmatprep.subr.mxu0 0.0
    %3316 = vmatpush1.xpose.msra.mxu0 %v3311
    %3317 = vmatprep.subr.mxu0 0.0
    %3318 = vmatpush1.xpose.msra.mxu0 0.0
    %3319 = vmatprep.subr.mxu0 0.0
    %3320 = vmatpush1.xpose.msra.mxu0 0.0
    %3321 = vmatprep.subr.mxu0 0.0
    %3322 = vmatpush1.xpose.msra.mxu0 0.0
    %3323 = vmatprep.subr.mxu0 0.0
    %3324 = vmatpush1.xpose.msra.mxu0 0.0
    %3325 = vmatprep.subr.mxu0 0.0
    %3326 = vmatpush1.xpose.msra.mxu0 0.0
    %3327 = vmatprep.subr.mxu0 0.0
    %3328 = vmatpush1.xpose.msra.mxu0 0.0
    %3329 = vmatprep.subr.mxu0 0.0
    %3330 = vmatpush1.xpose.msra.mxu0 0.0
    %3331 = vmatprep.subr.mxu0 0.0
    %3332 = vmatpush1.xpose.msra.mxu0 0.0
    %3333 = vmatprep.subr.mxu0 0.0
    %3334 = vmatpush1.xpose.msra.mxu0 0.0
    %3335 = vmatprep.subr.mxu0 0.0
    %3336 = vmatpush1.xpose.msra.mxu0 0.0
    %3337 = vmatprep.subr.mxu0 0.0
    %3338 = vmatpush1.xpose.msra.mxu0 0.0
    %3339 = vmatprep.subr.mxu0 0.0
    %3340 = vmatpush1.xpose.msra.mxu0 0.0
    %3341 = vmatprep.subr.mxu0 0.0
    %3342 = vmatpush1.xpose.msra.mxu0 0.0
    %3343 = vmatprep.subr.mxu0 0.0
    %3344 = vmatpush1.xpose.msra.mxu0 0.0
    %3345 = vmatprep.subr.mxu0 0.0
    %3346 = vmatpush1.xpose.msra.mxu0 0.0
    %3347 = vmatprep.subr.mxu0 0.0
    %3348 = vmatpush1.xpose.msra.mxu0 0.0
    %3349 = vmatprep.subr.mxu0 0.0
    %3350 = vmatpush1.xpose.msra.mxu0 0.0
    %3351 = vmatprep.subr.mxu0 0.0
    %3352 = vmatpush1.xpose.msra.mxu0 0.0
    %3353 = vmatprep.subr.mxu0 0.0
    %3354 = vmatpush1.xpose.msra.mxu0 0.0
    %3355 = vmatprep.subr.mxu0 0.0
    %3356 = vmatpush1.xpose.msra.mxu0 0.0
    %3357 = vmatprep.subr.mxu0 0.0
    %3358 = vmatpush1.xpose.msra.mxu0 0.0
    %3359 = vmatprep.subr.mxu0 0.0
    %3360 = vmatpush1.xpose.msra.mxu0 0.0
    %3361 = vmatprep.subr.mxu0 0.0
    %3362 = vmatpush1.xpose.msra.mxu0 0.0
    %3363 = vmatprep.subr.mxu0 0.0
    %3364 = vmatpush1.xpose.msra.mxu0 0.0
    %3365 = vmatprep.subr.mxu0 0.0
    %3366 = vmatpush1.xpose.msra.mxu0 0.0
    %3367 = vmatprep.subr.mxu0 0.0
    %3368 = vmatpush1.xpose.msra.mxu0 0.0
    %3369 = vmatprep.subr.mxu0 0.0
    %3370 = vmatpush1.xpose.msra.mxu0 0.0
    %3371 = vmatprep.subr.mxu0 0.0
    %3372 = vmatpush1.xpose.msra.mxu0 0.0
    %3373 = vmatprep.subr.mxu0 0.0
    %3374 = vmatpush1.xpose.msra.mxu0 0.0
    %3375 = vmatprep.subr.mxu0 0.0
    %3376 = vmatpush1.xpose.msra.mxu0 0.0
    %3377 = vmatprep.mubr.f32.mxu0 0.0
    %3378 = vmatmul.mubr.f32.gmra.mrb[0].mxu0 %v3205
    %v3379 = vpop.f32.mrb[0].mxu0
    %v3380 = vadd.f32 0.0, %v3379
    %v3381 = vpop.f32.mrb[0].mxu0
    %3382 = vmatprep.mubr.f32.mxu0 0.0
    %3383 = vmatmul.mubr.f32.gmra.mrb[0].mxu0 %v3311
    %v3384 = vpop.f32.mrb[0].mxu0
    %v3385 = vadd.f32 0.0, %v3384
    %v3386 = vpop.f32.mrb[0].mxu0
    %3387 = vdwg.mxu0
    %3388 = vxpose.xlu0.b32.start [1/16] %v3306, 128
    %3389 = vxpose.xlu0.b32.cont [2/16] %v3309, 128
    %3390 = vxpose.xlu0.b32.cont [3/16] 0.0, 128
    %3391 = vxpose.xlu0.b32.cont [4/16] 0.0, 128
    %3392 = vxpose.xlu0.b32.cont [5/16] 0.0, 128
    %3393 = vxpose.xlu0.b32.cont [6/16] 0.0, 128
    %3394 = vxpose.xlu0.b32.cont [7/16] 0.0, 128
    %3395 = vxpose.xlu0.b32.cont [8/16] 0.0, 128
    %3396 = vxpose.xlu0.b32.cont [9/16] 0.0, 128
    %3397 = vxpose.xlu0.b32.cont [10/16] 0.0, 128
    %3398 = vxpose.xlu0.b32.cont [11/16] 0.0, 128
    %3399 = vxpose.xlu0.b32.cont [12/16] 0.0, 128
    %3400 = vxpose.xlu0.b32.cont [13/16] 0.0, 128
    %3401 = vxpose.xlu0.b32.cont [14/16] 0.0, 128
    %3402 = vxpose.xlu0.b32.cont [15/16] 0.0, 128
    %3403 = vxpose.xlu0.b32.end [16/16] 0.0, 128
    %v3404 = vpop.trf.xlu0
    %v3405 = vpop.trf.xlu0
    %v3406 = vpop.trf.xlu0
    %v3407 = vpop.trf.xlu0
    %v3408 = vpop.trf.xlu0
    %v3409 = vpop.trf.xlu0
    %v3410 = vpop.trf.xlu0
    %v3411 = vpop.trf.xlu0
    %v3412 = vpop.trf.xlu0
    %v3413 = vpop.trf.xlu0
    %v3414 = vpop.trf.xlu0
    %v3415 = vpop.trf.xlu0
    %v3416 = vpop.trf.xlu0
    %v3417 = vpop.trf.xlu0
    %v3418 = vpop.trf.xlu0
    %v3419 = vpop.trf.xlu0
    %v3420 = vlaneseq
    %v3421 = vshrl.u32 %v3420, 7
    %v3422 = vsub.s32 0, %v3421
    %v3423 = vrot.slane %v3404, %v3422
    %v3424 = vadd.f32 %v3306, %v3423
    %v3425 = vadd.f32 %v3309, %v3423
    %v3426 = vmul.f32 %v3380, 2.0
    %v3427 = vmul.f32 %v3385, 2.0
    %v3428 = vsub.f32 %v3424, %v3426
    %v3429 = vsub.f32 %v3425, %v3427
    %v3430 = vmax.f32 %v3428, 0.0
    %v3431 = vmax.f32 %v3429, 0.0
    %vm3432 = vcmask 130048
    %v3433 = vsel %vm3432, %v3430, 0.0
    %v3434 = vsel %vm3432, %v3431, 0.0
    %v3435 = vadd.f32 %v3433, %v3434
    %3436 = vadd.xlane.f32.xlu0 %v3435
    %v3437 = vpop.xlane.xlu0 %3436
    %v3438 = vrot.slane %v3437, 4
    %v3439 = vadd.f32 %v3437, %v3438
    %v3440 = vrot.slane %v3439, 2
    %v3441 = vadd.f32 %v3439, %v3440
    %v3442 = vrot.slane %v3441, 1
    %v3443 = vadd.f32 %v3441, %v3442
    %s3444 = vtos %v3443
    %s3445 = smul.f32 %s3444, 0.004166667
    %v3446 = vrcp.pop 4.0
    %s3447 = vtos %v3446
    %s3448 = smul.f32 %s3445, %s3447
    %s3449 = smax.f32 %s3448, 1e-12
    %s3450 = smul.f32 %s3449, 16.0
    %v3451 = vstv %s3450
    %v3452 = vrcp.pop %v3451
    %s3453 = vtos %v3452
    %s3454 = smul.f32 -1.0, %s3453
    %v3455 = vstv %s3454
    %v3456 = vmul.f32 %v3430, %v3455
    %v3457 = vmul.f32 %v3431, %v3455
    %v3458 = vmul.f32 %v3456, 1.442695
    %v3459 = vpow.pop %v3458
    %v3460 = vmul.f32 %v3457, 1.442695
    %v3461 = vpow.pop %v3460
    %v3462 = vmul.f32 %v3459, %v3459
    %v3463 = vmul.f32 %v3461, %v3461
    %v3464 = vmul.f32 %v3462, %v3462
    %v3465 = vmul.f32 %v3463, %v3463
    %v3466 = vmul.f32 %v3464, %v3464
    %v3467 = vmul.f32 %v3465, %v3465
    %v3468 = vmul.f32 %v3466, %v3466
    %v3469 = vmul.f32 %v3467, %v3467
    %v3470 = vadd.f32 %v3459, %v3462
    %v3471 = vadd.f32 %v3461, %v3463
    %v3472 = vadd.f32 %v3470, %v3464
    %v3473 = vadd.f32 %v3471, %v3465
    %v3474 = vadd.f32 %v3472, %v3466
    %v3475 = vadd.f32 %v3473, %v3467
    %v3476 = vadd.f32 %v3474, %v3468
    %v3477 = vadd.f32 %v3475, %v3469
    %v3478 = vsel %vm80, %v3476, 0.0
    %3479 = vadd.xlane.f32.xlu0 %v3478
    %v3480 = vpop.xlane.xlu0 %3479
    %v3481 = vrot.slane %v3480, 4
    %v3482 = vadd.f32 %v3480, %v3481
    %v3483 = vrot.slane %v3482, 2
    %v3484 = vadd.f32 %v3482, %v3483
    %v3485 = vrot.slane %v3484, 1
    %v3486 = vadd.f32 %v3484, %v3485
    %s3487 = vtos %v3486
    %v3488 = vrcp.pop 64.0
    %s3489 = vtos %v3488
    %s3490 = smul.f32 %s3487, %s3489
    %3492 = vrot.lane.b32.xlu0 %v3477, 120
    %v3493 = vpop.permute.xlu0 %3492
    %v3495 = vsel %vm80, %v3493, 0.0
    %3496 = vadd.xlane.f32.xlu0 %v3495
    %v3497 = vpop.xlane.xlu0 %3496
    %v3498 = vrot.slane %v3497, 4
    %v3499 = vadd.f32 %v3497, %v3498
    %v3500 = vrot.slane %v3499, 2
    %v3501 = vadd.f32 %v3499, %v3500
    %v3502 = vrot.slane %v3501, 1
    %v3503 = vadd.f32 %v3501, %v3502
    %s3504 = vtos %v3503
    %v3505 = vrcp.pop 64.0
    %s3506 = vtos %v3505
    %s3507 = smul.f32 %s3504, %s3506
    %s3508 = sadd.f32 %s3490, %s3507
    %3510 = vrot.lane.b32.xlu0 %v3476, 120
    %v3511 = vpop.permute.xlu0 %3510
    %v3513 = vsel %vm80, %v3511, 0.0
    %3514 = vadd.xlane.f32.xlu0 %v3513
    %v3515 = vpop.xlane.xlu0 %3514
    %v3516 = vrot.slane %v3515, 4
    %v3517 = vadd.f32 %v3515, %v3516
    %v3518 = vrot.slane %v3517, 2
    %v3519 = vadd.f32 %v3517, %v3518
    %v3520 = vrot.slane %v3519, 1
    %v3521 = vadd.f32 %v3519, %v3520
    %s3522 = vtos %v3521
    %v3523 = vrcp.pop 64.0
    %s3524 = vtos %v3523
    %s3525 = smul.f32 %s3522, %s3524
    %s3526 = smul.f32 %s3525, 2.0
    %s3527 = ssub.f32 %s3508, %s3526
    %s3528 = scalar_lea.smem [#allocation2], 0
    %3529 = sst [smem:[%s3528]] %s3301
    %s3530 = scalar_lea.smem [#allocation2], 1
    %3531 = sst [smem:[%s3530]] %s3527
    // Predicated region
    $region14: #{transfernet_forward.1} parent=1 // pred_check
      _
    $region15: #{transfernet_forward.1} parent=1 // pred_check_branch
      %3533 = sbr.rel (0) target = $region17
    $region16: #{transfernet_forward.1} parent=1 // pred_region
      %s3535 = ssub.s32 16, 16
      %3536 = vsyncadd [#allocation3], %s3535
      %s3538 = sshll.u32 %s3, 4
      %s3539 = int_to_ptr.vmem [resolvable:$true] %s3538
      %3541 = dma.smem_to_vmem [#allocation2], 16, %s3539, [#allocation3]
    $region17: #{transfernet_forward.1} parent=1 // pred_fallthru
      _
    // Predicated region
    $region18: #{transfernet_forward.1} parent=1 // pred_check
      _
    $region19: #{transfernet_forward.1} parent=1 // pred_check_branch
      %3543 = sbr.rel (0) target = $region21
    $region20: #{transfernet_forward.1} parent=1 // pred_region
      %3544 = dma.done [#allocation3], 16
    $region21: #{transfernet_forward.1} parent=1 // pred_fallthru
      _
    %3545 = sfence
    %3546 = vsyncpa [#allocation3], 1

</llo_original>
